<compile_context>
chip_gen: v6e
topology: v6e:2x2x1
jax: 0.10.0
libtpu: 0.0.40
codegen_flags: <defaults>
</compile_context>

<pallas_src>
import functools
import numpy as np
import jax
import jax.numpy as jnp
from jax.experimental import pallas as pl
from jax.experimental.pallas import tpu as pltpu

# ---------------- model hyper-parameters (small, consistent with the module) ---------
B = 2        # batch
T = 8        # target sequence length
S = 8        # source (memory) sequence length
D_MODEL = 32 # d_model
N_HEADS = 4  # heads in multi-head attention
D_FF = 64    # feed-forward hidden size
N_LAYERS = 2 # n=2 decoder layers
EPS = 1e-6

# Order in which stacked per-layer parameters are passed to the kernel.
_PARAM_KEYS = ("w_self_qkv", "b_self_qkv", "w_self_o", "b_self_o",
               "w_cross_q", "b_cross_q", "w_cross_kv", "b_cross_kv",
               "w_cross_o", "b_cross_o",
               "ff_w1", "ff_b1", "ff_w2", "ff_b2",
               "ln_g", "ln_b")


# ---------------------------------- Pallas kernel ------------------------------------
def _decoder_stack_kernel(x_ref, mem_ref, tmb_ref, smb_ref,
                          wqkv_ref, bqkv_ref, wso_ref, bso_ref,
                          wcq_ref, bcq_ref, wckv_ref, bckv_ref,
                          wco_ref, bco_ref,
                          w1_ref, b1_ref, w2_ref, b2_ref,
                          lng_ref, lnb_ref,
                          out_ref,
                          *, n_layers, n_heads, d_model):
    """Whole decoder stack: activations stay in registers/VMEM, layers unrolled."""
    d = d_model
    dk = d // n_heads

    x = x_ref[...]              # (B*T, D)
    mem = mem_ref[...]          # (B*S, D)
    tmb = tmb_ref[...]          # (B*T, B*T) additive mask bias (block-diag over batch)
    smb = smb_ref[...]          # (B*T, B*S)

    def layer_norm(v, g_row, b_row):
        mu = jnp.mean(v, axis=-1, keepdims=True)
        var = jnp.mean((v - mu) * (v - mu), axis=-1, keepdims=True)
        std = jnp.sqrt(var * (d / (d - 1.0)))      # unbiased (torch .std default)
        # EUP approx reciprocal instead of a VALU divide (co-issues with MXU work).
        return g_row * (v - mu) * pl.reciprocal(std + EPS, approx=True) + b_row

    def mha(slab_q, slab_kv, q0, k0, v0, bias2d, wo, bo):
        # slab_q (Q, >=q0+D), slab_kv (K, >=v0+D): lane-dense projection slabs.
        # Per-head scores come from static lane slices; contexts are concatenated
        # back into a lane-dense (Q, D) slab so the output projection is a single
        # (Q, D) @ (D, D) matmul against the unsplit Wo.  1/sqrt(dk) is already
        # folded into the Q projection weights.
        ctx_heads = []
        for i in range(n_heads):
            qh = slab_q[:, q0 + i * dk: q0 + (i + 1) * dk]       # (Q, dk)
            kh = slab_kv[:, k0 + i * dk: k0 + (i + 1) * dk]      # (K, dk)
            vh = slab_kv[:, v0 + i * dk: v0 + (i + 1) * dk]      # (K, dk)
            s = jnp.einsum("qd,kd->qk", qh, kh,
                           preferred_element_type=jnp.float32) + bias2d
            m = jnp.max(s, axis=-1, keepdims=True)
            e = jnp.exp(s - m)
            p = e * pl.reciprocal(jnp.sum(e, axis=-1, keepdims=True), approx=True)
            ctx_heads.append(jnp.dot(p, vh, preferred_element_type=jnp.float32))
        ctx = jnp.concatenate(ctx_heads, axis=-1)                # (Q, D) lane-dense
        return jnp.dot(ctx, wo, preferred_element_type=jnp.float32) + bo

    for l in range(n_layers):   # static unrolled loop — all weights resident in VMEM
        lng = lng_ref[l]        # (3, D)
        lnb = lnb_ref[l]

        # ---- sublayer 1: masked multi-head self-attention (pre-norm residual) ----
        nx = layer_norm(x, lng[0:1, :], lnb[0:1, :])
        qkv = jnp.dot(nx, wqkv_ref[l],
                      preferred_element_type=jnp.float32) + bqkv_ref[l]   # (B*T, 3D)
        x = x + mha(qkv, qkv, 0, d, 2 * d, tmb, wso_ref[l], bso_ref[l])

        # ---- sublayer 2: multi-head cross-attention over encoder memory ----
        nx = layer_norm(x, lng[1:2, :], lnb[1:2, :])
        q2 = jnp.dot(nx, wcq_ref[l],
                     preferred_element_type=jnp.float32) + bcq_ref[l]     # (B*T, D)
        kv = jnp.dot(mem, wckv_ref[l],
                     preferred_element_type=jnp.float32) + bckv_ref[l]    # (B*S, 2D)
        x = x + mha(q2, kv, 0, 0, d, smb, wco_ref[l], bco_ref[l])

        # ---- sublayer 3: position-wise feed-forward (Linear -> ReLU -> Linear) ----
        nx = layer_norm(x, lng[2:3, :], lnb[2:3, :])
        h1 = jnp.maximum(
            jnp.dot(nx, w1_ref[l], preferred_element_type=jnp.float32) + b1_ref[l],
            0.0)
        x = x + jnp.dot(h1, w2_ref[l],
                        preferred_element_type=jnp.float32) + b2_ref[l]

    out_ref[...] = x            # single store at the end of the stack


# ------------------------------ wrapper-side parameter prep --------------------------
def prepare_stacked_params(layer_params, n_heads):
    """Torch-style per-layer params -> lane-dense fused (QKV / KV) layer-stacked arrays."""
    d = layer_params[0]["w_self"].shape[-1]
    dk = d // n_heads
    scale = 1.0 / float(np.sqrt(dk))   # folded into Wq / bq (saves a per-score mul)

    per_layer = []
    for p in layer_params:
        ws, bs = p["w_self"], p["b_self"]
        wc, bc = p["w_cross"], p["b_cross"]
        per_layer.append({
            "w_self_qkv": jnp.concatenate([ws[0] * scale, ws[1], ws[2]], axis=1),  # (D, 3D)
            "b_self_qkv": jnp.concatenate([bs[0] * scale, bs[1], bs[2]],
                                          axis=0).reshape(1, 3 * d),
            "w_self_o": ws[3],                               # (D, D) unsplit Wo
            "b_self_o": bs[3].reshape(1, d),
            "w_cross_q": wc[0] * scale,                      # (D, D)
            "b_cross_q": (bc[0] * scale).reshape(1, d),
            "w_cross_kv": jnp.concatenate([wc[1], wc[2]], axis=1),                 # (D, 2D)
            "b_cross_kv": jnp.concatenate([bc[1], bc[2]], axis=0).reshape(1, 2 * d),
            "w_cross_o": wc[3],
            "b_cross_o": bc[3].reshape(1, d),
            "ff_w1": p["ff_w1"], "ff_b1": p["ff_b1"],
            "ff_w2": p["ff_w2"], "ff_b2": p["ff_b2"],
            "ln_g": p["ln_g"], "ln_b": p["ln_b"],
        })
    return {k: jnp.stack([e[k] for e in per_layer], axis=0) for k in _PARAM_KEYS}


def block_diag_bias(mask):
    """(B, Tq, Tk) 1/0 float mask -> (B*Tq, B*Tk) additive bias.

    In-batch attend -> 0.0, in-batch masked -> -1e9, cross-batch -> -1e9, so a single
    whole-batch softmax is exactly equivalent to B independent masked softmaxes."""
    b, tq, tk = mask.shape
    eye = jnp.eye(b, dtype=mask.dtype)
    full = eye[:, None, :, None] * mask[:, :, None, :]        # (B, Tq, B, Tk)
    return (full.reshape(b * tq, b * tk) - 1.0) * 1e9


def decoder_forward(x, memory, src_mask, tgt_mask, layer_params, n_heads=N_HEADS):
    """Full Decoder stack (all n DecoderLayers) in a single fused pallas_call."""
    b, t, d = x.shape
    s = memory.shape[1]
    n_layers = len(layer_params)
    stacked = prepare_stacked_params(layer_params, n_heads)

    x2 = x.reshape(b * t, d)
    m2 = memory.reshape(b * s, d)
    tmb = block_diag_bias(tgt_mask)     # (B*T, B*T)
    smb = block_diag_bias(src_mask)     # (B*T, B*S)

    # Everything (activations, masks, all stacked layer weights ~64 KiB) fits VMEM
    # comfortably on v5e/v6e/v7x, so there is no grid: whole arrays are resident.
    vmem_spec = pl.BlockSpec(memory_space=pltpu.MemorySpace.VMEM)
    n_inputs = 4 + len(_PARAM_KEYS)

    kernel = functools.partial(_decoder_stack_kernel, n_layers=n_layers,
                               n_heads=n_heads, d_model=d)
    out2 = pl.pallas_call(
        kernel,
        out_shape=jax.ShapeDtypeStruct((b * t, d), jnp.float32),
        in_specs=[vmem_spec] * n_inputs,
        out_specs=vmem_spec,
    )(x2, m2, tmb, smb, *[stacked[k] for k in _PARAM_KEYS])
    return out2.reshape(b, t, d)


# ------------------------------- pure-JAX reference ----------------------------------
def _ref_layer(x, memory, tgt_mask, src_mask, p):
    d = x.shape[-1]
    dk = d // N_HEADS

    def ln(v, g, b):
        mu = v.mean(-1, keepdims=True)
        var = ((v - mu) ** 2).mean(-1, keepdims=True) * (d / (d - 1))
        return g * (v - mu) / (jnp.sqrt(var) + EPS) + b

    def mha(q_in, kv_in, mask, w, bias):
        q = q_in @ w[0] + bias[0]
        k = kv_in @ w[1] + bias[1]
        v = kv_in @ w[2] + bias[2]
        outs = []
        for h in range(N_HEADS):
            sl = slice(h * dk, (h + 1) * dk)
            s = (q[..., sl] @ jnp.swapaxes(k[..., sl], -1, -2)) / jnp.sqrt(dk)
            s = jnp.where(mask > 0.5, s, -1e9)
            p_ = jax.nn.softmax(s, axis=-1)
            outs.append(p_ @ v[..., sl])
        return jnp.concatenate(outs, -1) @ w[3] + bias[3]

    x = x + mha(ln(x, p["ln_g"][0], p["ln_b"][0]),
                ln(x, p["ln_g"][0], p["ln_b"][0]), tgt_mask, p["w_self"], p["b_self"])
    x = x + mha(ln(x, p["ln_g"][1], p["ln_b"][1]), memory, src_mask,
                p["w_cross"], p["b_cross"])
    nx = ln(x, p["ln_g"][2], p["ln_b"][2])
    return x + jnp.maximum(nx @ p["ff_w1"] + p["ff_b1"], 0.0) @ p["ff_w2"] + p["ff_b2"]


def _ref_decoder(x, memory, src_mask, tgt_mask, layer_params):
    for p in layer_params:
        x = _ref_layer(x, memory, tgt_mask, src_mask, p)
    return x


# ----------------------------------- parameter init ----------------------------------
def init_layer_params(key):
    ks = jax.random.split(key, 8)
    scale = 0.02
    return {
        "w_self": jax.random.normal(ks[0], (4, D_MODEL, D_MODEL), jnp.float32) * scale,
        "b_self": jax.random.normal(ks[1], (4, D_MODEL), jnp.float32) * scale,
        "w_cross": jax.random.normal(ks[2], (4, D_MODEL, D_MODEL), jnp.float32) * scale,
        "b_cross": jax.random.normal(ks[3], (4, D_MODEL), jnp.float32) * scale,
        "ff_w1": jax.random.normal(ks[4], (D_MODEL, D_FF), jnp.float32) * scale,
        "ff_b1": jax.random.normal(ks[5], (1, D_FF), jnp.float32) * scale,
        "ff_w2": jax.random.normal(ks[6], (D_FF, D_MODEL), jnp.float32) * scale,
        "ff_b2": jax.random.normal(ks[7], (1, D_MODEL), jnp.float32) * scale,
        "ln_g": jnp.ones((3, D_MODEL), jnp.float32),
        "ln_b": jnp.zeros((3, D_MODEL), jnp.float32),
    }


if __name__ == "__main__":
    root = jax.random.PRNGKey(0)
    k_x, k_m, k_p = jax.random.split(root, 3)

    x = jax.random.normal(k_x, (B, T, D_MODEL), jnp.float32)
    memory = jax.random.normal(k_m, (B, S, D_MODEL), jnp.float32)

    # causal target mask (B, T, T); source mask (B, T, S) with last source pos masked for b=1
    tgt_mask = jnp.broadcast_to(jnp.tril(jnp.ones((T, T), jnp.float32)), (B, T, T))
    src_mask = jnp.ones((B, T, S), jnp.float32)
    src_mask = src_mask.at[1, :, -1].set(0.0)

    layer_keys = jax.random.split(k_p, N_LAYERS)
    layer_params = [init_layer_params(k) for k in layer_keys]

    out = decoder_forward(x, memory, src_mask, tgt_mask, layer_params)
    out = jax.block_until_ready(out)

    ref = _ref_decoder(x, memory, src_mask, tgt_mask, layer_params)
    # Tolerance accounts for the EUP approx reciprocals (softmax denom + LayerNorm)
    # and the folded 1/sqrt(dk) scaling.
    np.testing.assert_allclose(np.asarray(out), np.asarray(ref), rtol=2e-3, atol=2e-3)

    print("KERNEL_OK")
</pallas_src>

<mosaic_0001>
module attributes {stable_mosaic.version = 11 : i64} {
  func.func @_decoder_stack_kernel(%arg0: memref<16x32xf32, #tpu.memory_space<vmem>>, %arg1: memref<16x32xf32, #tpu.memory_space<vmem>>, %arg2: memref<16x16xf32, #tpu.memory_space<vmem>>, %arg3: memref<16x16xf32, #tpu.memory_space<vmem>>, %arg4: memref<2x32x96xf32, #tpu.memory_space<vmem>>, %arg5: memref<2x1x96xf32, #tpu.memory_space<vmem>>, %arg6: memref<2x32x32xf32, #tpu.memory_space<vmem>>, %arg7: memref<2x1x32xf32, #tpu.memory_space<vmem>>, %arg8: memref<2x32x32xf32, #tpu.memory_space<vmem>>, %arg9: memref<2x1x32xf32, #tpu.memory_space<vmem>>, %arg10: memref<2x32x64xf32, #tpu.memory_space<vmem>>, %arg11: memref<2x1x64xf32, #tpu.memory_space<vmem>>, %arg12: memref<2x32x32xf32, #tpu.memory_space<vmem>>, %arg13: memref<2x1x32xf32, #tpu.memory_space<vmem>>, %arg14: memref<2x32x64xf32, #tpu.memory_space<vmem>>, %arg15: memref<2x1x64xf32, #tpu.memory_space<vmem>>, %arg16: memref<2x64x32xf32, #tpu.memory_space<vmem>>, %arg17: memref<2x1x32xf32, #tpu.memory_space<vmem>>, %arg18: memref<2x3x32xf32, #tpu.memory_space<vmem>>, %arg19: memref<2x3x32xf32, #tpu.memory_space<vmem>>, %arg20: memref<16x32xf32, #tpu.memory_space<vmem>>) attributes {dimension_semantics = [], scalar_prefetch = 0 : i64, scratch_operands = 0 : i64, tpu.core_type = #tpu.core_type<tc>} {
    %c0 = arith.constant 0 : index
    %c0_0 = arith.constant 0 : index
    %0 = vector.load %arg0[%c0, %c0_0] : memref<16x32xf32, #tpu.memory_space<vmem>>, vector<16x32xf32>
    %c0_1 = arith.constant 0 : index
    %c0_2 = arith.constant 0 : index
    %1 = vector.load %arg1[%c0_1, %c0_2] : memref<16x32xf32, #tpu.memory_space<vmem>>, vector<16x32xf32>
    %c0_3 = arith.constant 0 : index
    %c0_4 = arith.constant 0 : index
    %2 = vector.load %arg2[%c0_3, %c0_4] : memref<16x16xf32, #tpu.memory_space<vmem>>, vector<16x16xf32>
    %c0_5 = arith.constant 0 : index
    %c0_6 = arith.constant 0 : index
    %3 = vector.load %arg3[%c0_5, %c0_6] : memref<16x16xf32, #tpu.memory_space<vmem>>, vector<16x16xf32>
    %c0_7 = arith.constant 0 : index
    %c0_8 = arith.constant 0 : index
    %c0_9 = arith.constant 0 : index
    %4 = vector.load %arg18[%c0_7, %c0_8, %c0_9] : memref<2x3x32xf32, #tpu.memory_space<vmem>>, vector<1x3x32xf32>
    %5 = vector.shape_cast %4 : vector<1x3x32xf32> to vector<3x32xf32>
    %c0_10 = arith.constant 0 : index
    %c0_11 = arith.constant 0 : index
    %c0_12 = arith.constant 0 : index
    %6 = vector.load %arg19[%c0_10, %c0_11, %c0_12] : memref<2x3x32xf32, #tpu.memory_space<vmem>>, vector<1x3x32xf32>
    %7 = vector.shape_cast %6 : vector<1x3x32xf32> to vector<3x32xf32>
    %8 = vector.extract_strided_slice %5 {offsets = [0, 0], sizes = [1, 32], strides = [1, 1]} : vector<3x32xf32> to vector<1x32xf32>
    %9 = vector.extract_strided_slice %7 {offsets = [0, 0], sizes = [1, 32], strides = [1, 1]} : vector<3x32xf32> to vector<1x32xf32>
    %cst = arith.constant dense<0.000000e+00> : vector<16xf32>
    %10 = vector.multi_reduction <add>, %0, %cst [1] : vector<16x32xf32> to vector<16xf32>
    %11 = vector.shape_cast %10 : vector<16xf32> to vector<16x1xf32>
    %cst_13 = arith.constant 3.200000e+01 : f32
    %12 = vector.broadcast %cst_13 : f32 to vector<16x1xf32>
    %13 = arith.divf %11, %12 : vector<16x1xf32>
    %14 = vector.broadcast %13 : vector<16x1xf32> to vector<16x32xf32>
    %15 = arith.subf %0, %14 : vector<16x32xf32>
    %16 = vector.broadcast %13 : vector<16x1xf32> to vector<16x32xf32>
    %17 = arith.subf %0, %16 : vector<16x32xf32>
    %18 = arith.mulf %15, %17 : vector<16x32xf32>
    %cst_14 = arith.constant dense<0.000000e+00> : vector<16xf32>
    %19 = vector.multi_reduction <add>, %18, %cst_14 [1] : vector<16x32xf32> to vector<16xf32>
    %20 = vector.shape_cast %19 : vector<16xf32> to vector<16x1xf32>
    %cst_15 = arith.constant 3.200000e+01 : f32
    %21 = vector.broadcast %cst_15 : f32 to vector<16x1xf32>
    %22 = arith.divf %20, %21 : vector<16x1xf32>
    %cst_16 = arith.constant 1.03225803 : f32
    %23 = vector.broadcast %cst_16 : f32 to vector<16x1xf32>
    %24 = arith.mulf %22, %23 : vector<16x1xf32>
    %25 = math.sqrt %24 : vector<16x1xf32>
    %26 = vector.broadcast %13 : vector<16x1xf32> to vector<16x32xf32>
    %27 = arith.subf %0, %26 : vector<16x32xf32>
    %28 = vector.broadcast %8 : vector<1x32xf32> to vector<16x32xf32>
    %29 = arith.mulf %28, %27 : vector<16x32xf32>
    %cst_17 = arith.constant 9.99999997E-7 : f32
    %30 = vector.broadcast %cst_17 : f32 to vector<16x1xf32>
    %31 = arith.addf %25, %30 : vector<16x1xf32>
    %32 = tpu.reciprocal %31 {approx = true} : vector<16x1xf32> -> vector<16x1xf32>
    %33 = vector.broadcast %32 : vector<16x1xf32> to vector<16x32xf32>
    %34 = arith.mulf %29, %33 : vector<16x32xf32>
    %35 = vector.broadcast %9 : vector<1x32xf32> to vector<16x32xf32>
    %36 = arith.addf %34, %35 : vector<16x32xf32>
    %c0_18 = arith.constant 0 : index
    %c0_19 = arith.constant 0 : index
    %c0_20 = arith.constant 0 : index
    %37 = vector.load %arg4[%c0_18, %c0_19, %c0_20] : memref<2x32x96xf32, #tpu.memory_space<vmem>>, vector<1x32x96xf32>
    %38 = vector.shape_cast %37 : vector<1x32x96xf32> to vector<32x96xf32>
    %cst_21 = arith.constant dense<0.000000e+00> : vector<16x96xf32>
    %39 = tpu.matmul %36, %38, %cst_21 {dimension_numbers = #tpu.dot_dimension_numbers<[1], [0], [0], [1], [0, 0, 1, 1], [], []>} : vector<16x32xf32>, vector<32x96xf32>, vector<16x96xf32> -> vector<16x96xf32>
    %c0_22 = arith.constant 0 : index
    %c0_23 = arith.constant 0 : index
    %c0_24 = arith.constant 0 : index
    %40 = vector.load %arg5[%c0_22, %c0_23, %c0_24] : memref<2x1x96xf32, #tpu.memory_space<vmem>>, vector<1x1x96xf32>
    %41 = vector.shape_cast %40 : vector<1x1x96xf32> to vector<1x96xf32>
    %42 = vector.broadcast %41 : vector<1x96xf32> to vector<16x96xf32>
    %43 = arith.addf %39, %42 : vector<16x96xf32>
    %c0_25 = arith.constant 0 : index
    %c0_26 = arith.constant 0 : index
    %c0_27 = arith.constant 0 : index
    %44 = vector.load %arg6[%c0_25, %c0_26, %c0_27] : memref<2x32x32xf32, #tpu.memory_space<vmem>>, vector<1x32x32xf32>
    %45 = vector.shape_cast %44 : vector<1x32x32xf32> to vector<32x32xf32>
    %c0_28 = arith.constant 0 : index
    %c0_29 = arith.constant 0 : index
    %c0_30 = arith.constant 0 : index
    %46 = vector.load %arg7[%c0_28, %c0_29, %c0_30] : memref<2x1x32xf32, #tpu.memory_space<vmem>>, vector<1x1x32xf32>
    %47 = vector.shape_cast %46 : vector<1x1x32xf32> to vector<1x32xf32>
    %48 = vector.extract_strided_slice %43 {offsets = [0, 0], sizes = [16, 8], strides = [1, 1]} : vector<16x96xf32> to vector<16x8xf32>
    %49 = vector.extract_strided_slice %43 {offsets = [0, 32], sizes = [16, 8], strides = [1, 1]} : vector<16x96xf32> to vector<16x8xf32>
    %50 = vector.extract_strided_slice %43 {offsets = [0, 64], sizes = [16, 8], strides = [1, 1]} : vector<16x96xf32> to vector<16x8xf32>
    "tpu.trace_start"() <{level = 10 : i32, message = "qd,kd->qk"}> : () -> ()
    %cst_31 = arith.constant dense<0.000000e+00> : vector<16x16xf32>
    %51 = tpu.matmul %48, %49, %cst_31 {dimension_numbers = #tpu.dot_dimension_numbers<[1], [1], [0], [0], [0, 0, 1, 0], [], []>} : vector<16x8xf32>, vector<16x8xf32>, vector<16x16xf32> -> vector<16x16xf32>
    "tpu.trace_stop"() : () -> ()
    %52 = arith.addf %51, %2 : vector<16x16xf32>
    %cst_32 = arith.constant dense<0xFF800000> : vector<16xf32>
    %53 = vector.multi_reduction <maximumf>, %52, %cst_32 [1] : vector<16x16xf32> to vector<16xf32>
    %54 = vector.shape_cast %53 : vector<16xf32> to vector<16x1xf32>
    %55 = vector.broadcast %54 : vector<16x1xf32> to vector<16x16xf32>
    %56 = arith.subf %52, %55 : vector<16x16xf32>
    %57 = math.exp %56 : vector<16x16xf32>
    %cst_33 = arith.constant dense<0.000000e+00> : vector<16xf32>
    %58 = vector.multi_reduction <add>, %57, %cst_33 [1] : vector<16x16xf32> to vector<16xf32>
    %59 = vector.shape_cast %58 : vector<16xf32> to vector<16x1xf32>
    %60 = tpu.reciprocal %59 {approx = true} : vector<16x1xf32> -> vector<16x1xf32>
    %61 = vector.broadcast %60 : vector<16x1xf32> to vector<16x16xf32>
    %62 = arith.mulf %57, %61 : vector<16x16xf32>
    %cst_34 = arith.constant dense<0.000000e+00> : vector<16x8xf32>
    %63 = tpu.matmul %62, %50, %cst_34 {dimension_numbers = #tpu.dot_dimension_numbers<[1], [0], [0], [1], [0, 0, 1, 1], [], []>} : vector<16x16xf32>, vector<16x8xf32>, vector<16x8xf32> -> vector<16x8xf32>
    %64 = vector.extract_strided_slice %43 {offsets = [0, 8], sizes = [16, 8], strides = [1, 1]} : vector<16x96xf32> to vector<16x8xf32>
    %65 = vector.extract_strided_slice %43 {offsets = [0, 40], sizes = [16, 8], strides = [1, 1]} : vector<16x96xf32> to vector<16x8xf32>
    %66 = vector.extract_strided_slice %43 {offsets = [0, 72], sizes = [16, 8], strides = [1, 1]} : vector<16x96xf32> to vector<16x8xf32>
    "tpu.trace_start"() <{level = 10 : i32, message = "qd,kd->qk"}> : () -> ()
    %cst_35 = arith.constant dense<0.000000e+00> : vector<16x16xf32>
    %67 = tpu.matmul %64, %65, %cst_35 {dimension_numbers = #tpu.dot_dimension_numbers<[1], [1], [0], [0], [0, 0, 1, 0], [], []>} : vector<16x8xf32>, vector<16x8xf32>, vector<16x16xf32> -> vector<16x16xf32>
    "tpu.trace_stop"() : () -> ()
    %68 = arith.addf %67, %2 : vector<16x16xf32>
    %cst_36 = arith.constant dense<0xFF800000> : vector<16xf32>
    %69 = vector.multi_reduction <maximumf>, %68, %cst_36 [1] : vector<16x16xf32> to vector<16xf32>
    %70 = vector.shape_cast %69 : vector<16xf32> to vector<16x1xf32>
    %71 = vector.broadcast %70 : vector<16x1xf32> to vector<16x16xf32>
    %72 = arith.subf %68, %71 : vector<16x16xf32>
    %73 = math.exp %72 : vector<16x16xf32>
    %cst_37 = arith.constant dense<0.000000e+00> : vector<16xf32>
    %74 = vector.multi_reduction <add>, %73, %cst_37 [1] : vector<16x16xf32> to vector<16xf32>
    %75 = vector.shape_cast %74 : vector<16xf32> to vector<16x1xf32>
    %76 = tpu.reciprocal %75 {approx = true} : vector<16x1xf32> -> vector<16x1xf32>
    %77 = vector.broadcast %76 : vector<16x1xf32> to vector<16x16xf32>
    %78 = arith.mulf %73, %77 : vector<16x16xf32>
    %cst_38 = arith.constant dense<0.000000e+00> : vector<16x8xf32>
    %79 = tpu.matmul %78, %66, %cst_38 {dimension_numbers = #tpu.dot_dimension_numbers<[1], [0], [0], [1], [0, 0, 1, 1], [], []>} : vector<16x16xf32>, vector<16x8xf32>, vector<16x8xf32> -> vector<16x8xf32>
    %80 = vector.extract_strided_slice %43 {offsets = [0, 16], sizes = [16, 8], strides = [1, 1]} : vector<16x96xf32> to vector<16x8xf32>
    %81 = vector.extract_strided_slice %43 {offsets = [0, 48], sizes = [16, 8], strides = [1, 1]} : vector<16x96xf32> to vector<16x8xf32>
    %82 = vector.extract_strided_slice %43 {offsets = [0, 80], sizes = [16, 8], strides = [1, 1]} : vector<16x96xf32> to vector<16x8xf32>
    "tpu.trace_start"() <{level = 10 : i32, message = "qd,kd->qk"}> : () -> ()
    %cst_39 = arith.constant dense<0.000000e+00> : vector<16x16xf32>
    %83 = tpu.matmul %80, %81, %cst_39 {dimension_numbers = #tpu.dot_dimension_numbers<[1], [1], [0], [0], [0, 0, 1, 0], [], []>} : vector<16x8xf32>, vector<16x8xf32>, vector<16x16xf32> -> vector<16x16xf32>
    "tpu.trace_stop"() : () -> ()
    %84 = arith.addf %83, %2 : vector<16x16xf32>
    %cst_40 = arith.constant dense<0xFF800000> : vector<16xf32>
    %85 = vector.multi_reduction <maximumf>, %84, %cst_40 [1] : vector<16x16xf32> to vector<16xf32>
    %86 = vector.shape_cast %85 : vector<16xf32> to vector<16x1xf32>
    %87 = vector.broadcast %86 : vector<16x1xf32> to vector<16x16xf32>
    %88 = arith.subf %84, %87 : vector<16x16xf32>
    %89 = math.exp %88 : vector<16x16xf32>
    %cst_41 = arith.constant dense<0.000000e+00> : vector<16xf32>
    %90 = vector.multi_reduction <add>, %89, %cst_41 [1] : vector<16x16xf32> to vector<16xf32>
    %91 = vector.shape_cast %90 : vector<16xf32> to vector<16x1xf32>
    %92 = tpu.reciprocal %91 {approx = true} : vector<16x1xf32> -> vector<16x1xf32>
    %93 = vector.broadcast %92 : vector<16x1xf32> to vector<16x16xf32>
    %94 = arith.mulf %89, %93 : vector<16x16xf32>
    %cst_42 = arith.constant dense<0.000000e+00> : vector<16x8xf32>
    %95 = tpu.matmul %94, %82, %cst_42 {dimension_numbers = #tpu.dot_dimension_numbers<[1], [0], [0], [1], [0, 0, 1, 1], [], []>} : vector<16x16xf32>, vector<16x8xf32>, vector<16x8xf32> -> vector<16x8xf32>
    %96 = vector.extract_strided_slice %43 {offsets = [0, 24], sizes = [16, 8], strides = [1, 1]} : vector<16x96xf32> to vector<16x8xf32>
    %97 = vector.extract_strided_slice %43 {offsets = [0, 56], sizes = [16, 8], strides = [1, 1]} : vector<16x96xf32> to vector<16x8xf32>
    %98 = vector.extract_strided_slice %43 {offsets = [0, 88], sizes = [16, 8], strides = [1, 1]} : vector<16x96xf32> to vector<16x8xf32>
    "tpu.trace_start"() <{level = 10 : i32, message = "qd,kd->qk"}> : () -> ()
    %cst_43 = arith.constant dense<0.000000e+00> : vector<16x16xf32>
    %99 = tpu.matmul %96, %97, %cst_43 {dimension_numbers = #tpu.dot_dimension_numbers<[1], [1], [0], [0], [0, 0, 1, 0], [], []>} : vector<16x8xf32>, vector<16x8xf32>, vector<16x16xf32> -> vector<16x16xf32>
    "tpu.trace_stop"() : () -> ()
    %100 = arith.addf %99, %2 : vector<16x16xf32>
    %cst_44 = arith.constant dense<0xFF800000> : vector<16xf32>
    %101 = vector.multi_reduction <maximumf>, %100, %cst_44 [1] : vector<16x16xf32> to vector<16xf32>
    %102 = vector.shape_cast %101 : vector<16xf32> to vector<16x1xf32>
    %103 = vector.broadcast %102 : vector<16x1xf32> to vector<16x16xf32>
    %104 = arith.subf %100, %103 : vector<16x16xf32>
    %105 = math.exp %104 : vector<16x16xf32>
    %cst_45 = arith.constant dense<0.000000e+00> : vector<16xf32>
    %106 = vector.multi_reduction <add>, %105, %cst_45 [1] : vector<16x16xf32> to vector<16xf32>
    %107 = vector.shape_cast %106 : vector<16xf32> to vector<16x1xf32>
    %108 = tpu.reciprocal %107 {approx = true} : vector<16x1xf32> -> vector<16x1xf32>
    %109 = vector.broadcast %108 : vector<16x1xf32> to vector<16x16xf32>
    %110 = arith.mulf %105, %109 : vector<16x16xf32>
    %cst_46 = arith.constant dense<0.000000e+00> : vector<16x8xf32>
    %111 = tpu.matmul %110, %98, %cst_46 {dimension_numbers = #tpu.dot_dimension_numbers<[1], [0], [0], [1], [0, 0, 1, 1], [], []>} : vector<16x16xf32>, vector<16x8xf32>, vector<16x8xf32> -> vector<16x8xf32>
    %112 = tpu.concatenate %63, %79, %95, %111 in 1 : vector<16x8xf32>, vector<16x8xf32>, vector<16x8xf32>, vector<16x8xf32> -> vector<16x32xf32>
    %cst_47 = arith.constant dense<0.000000e+00> : vector<16x32xf32>
    %113 = tpu.matmul %112, %45, %cst_47 {dimension_numbers = #tpu.dot_dimension_numbers<[1], [0], [0], [1], [0, 0, 1, 1], [], []>} : vector<16x32xf32>, vector<32x32xf32>, vector<16x32xf32> -> vector<16x32xf32>
    %114 = vector.broadcast %47 : vector<1x32xf32> to vector<16x32xf32>
    %115 = arith.addf %113, %114 : vector<16x32xf32>
    %116 = arith.addf %0, %115 : vector<16x32xf32>
    %117 = vector.extract_strided_slice %5 {offsets = [1, 0], sizes = [1, 32], strides = [1, 1]} : vector<3x32xf32> to vector<1x32xf32>
    %118 = vector.extract_strided_slice %7 {offsets = [1, 0], sizes = [1, 32], strides = [1, 1]} : vector<3x32xf32> to vector<1x32xf32>
    %cst_48 = arith.constant dense<0.000000e+00> : vector<16xf32>
    %119 = vector.multi_reduction <add>, %116, %cst_48 [1] : vector<16x32xf32> to vector<16xf32>
    %120 = vector.shape_cast %119 : vector<16xf32> to vector<16x1xf32>
    %cst_49 = arith.constant 3.200000e+01 : f32
    %121 = vector.broadcast %cst_49 : f32 to vector<16x1xf32>
    %122 = arith.divf %120, %121 : vector<16x1xf32>
    %123 = vector.broadcast %122 : vector<16x1xf32> to vector<16x32xf32>
    %124 = arith.subf %116, %123 : vector<16x32xf32>
    %125 = vector.broadcast %122 : vector<16x1xf32> to vector<16x32xf32>
    %126 = arith.subf %116, %125 : vector<16x32xf32>
    %127 = arith.mulf %124, %126 : vector<16x32xf32>
    %cst_50 = arith.constant dense<0.000000e+00> : vector<16xf32>
    %128 = vector.multi_reduction <add>, %127, %cst_50 [1] : vector<16x32xf32> to vector<16xf32>
    %129 = vector.shape_cast %128 : vector<16xf32> to vector<16x1xf32>
    %cst_51 = arith.constant 3.200000e+01 : f32
    %130 = vector.broadcast %cst_51 : f32 to vector<16x1xf32>
    %131 = arith.divf %129, %130 : vector<16x1xf32>
    %cst_52 = arith.constant 1.03225803 : f32
    %132 = vector.broadcast %cst_52 : f32 to vector<16x1xf32>
    %133 = arith.mulf %131, %132 : vector<16x1xf32>
    %134 = math.sqrt %133 : vector<16x1xf32>
    %135 = vector.broadcast %122 : vector<16x1xf32> to vector<16x32xf32>
    %136 = arith.subf %116, %135 : vector<16x32xf32>
    %137 = vector.broadcast %117 : vector<1x32xf32> to vector<16x32xf32>
    %138 = arith.mulf %137, %136 : vector<16x32xf32>
    %cst_53 = arith.constant 9.99999997E-7 : f32
    %139 = vector.broadcast %cst_53 : f32 to vector<16x1xf32>
    %140 = arith.addf %134, %139 : vector<16x1xf32>
    %141 = tpu.reciprocal %140 {approx = true} : vector<16x1xf32> -> vector<16x1xf32>
    %142 = vector.broadcast %141 : vector<16x1xf32> to vector<16x32xf32>
    %143 = arith.mulf %138, %142 : vector<16x32xf32>
    %144 = vector.broadcast %118 : vector<1x32xf32> to vector<16x32xf32>
    %145 = arith.addf %143, %144 : vector<16x32xf32>
    %c0_54 = arith.constant 0 : index
    %c0_55 = arith.constant 0 : index
    %c0_56 = arith.constant 0 : index
    %146 = vector.load %arg8[%c0_54, %c0_55, %c0_56] : memref<2x32x32xf32, #tpu.memory_space<vmem>>, vector<1x32x32xf32>
    %147 = vector.shape_cast %146 : vector<1x32x32xf32> to vector<32x32xf32>
    %cst_57 = arith.constant dense<0.000000e+00> : vector<16x32xf32>
    %148 = tpu.matmul %145, %147, %cst_57 {dimension_numbers = #tpu.dot_dimension_numbers<[1], [0], [0], [1], [0, 0, 1, 1], [], []>} : vector<16x32xf32>, vector<32x32xf32>, vector<16x32xf32> -> vector<16x32xf32>
    %c0_58 = arith.constant 0 : index
    %c0_59 = arith.constant 0 : index
    %c0_60 = arith.constant 0 : index
    %149 = vector.load %arg9[%c0_58, %c0_59, %c0_60] : memref<2x1x32xf32, #tpu.memory_space<vmem>>, vector<1x1x32xf32>
    %150 = vector.shape_cast %149 : vector<1x1x32xf32> to vector<1x32xf32>
    %151 = vector.broadcast %150 : vector<1x32xf32> to vector<16x32xf32>
    %152 = arith.addf %148, %151 : vector<16x32xf32>
    %c0_61 = arith.constant 0 : index
    %c0_62 = arith.constant 0 : index
    %c0_63 = arith.constant 0 : index
    %153 = vector.load %arg10[%c0_61, %c0_62, %c0_63] : memref<2x32x64xf32, #tpu.memory_space<vmem>>, vector<1x32x64xf32>
    %154 = vector.shape_cast %153 : vector<1x32x64xf32> to vector<32x64xf32>
    %cst_64 = arith.constant dense<0.000000e+00> : vector<16x64xf32>
    %155 = tpu.matmul %1, %154, %cst_64 {dimension_numbers = #tpu.dot_dimension_numbers<[1], [0], [0], [1], [0, 0, 1, 1], [], []>} : vector<16x32xf32>, vector<32x64xf32>, vector<16x64xf32> -> vector<16x64xf32>
    %c0_65 = arith.constant 0 : index
    %c0_66 = arith.constant 0 : index
    %c0_67 = arith.constant 0 : index
    %156 = vector.load %arg11[%c0_65, %c0_66, %c0_67] : memref<2x1x64xf32, #tpu.memory_space<vmem>>, vector<1x1x64xf32>
    %157 = vector.shape_cast %156 : vector<1x1x64xf32> to vector<1x64xf32>
    %158 = vector.broadcast %157 : vector<1x64xf32> to vector<16x64xf32>
    %159 = arith.addf %155, %158 : vector<16x64xf32>
    %c0_68 = arith.constant 0 : index
    %c0_69 = arith.constant 0 : index
    %c0_70 = arith.constant 0 : index
    %160 = vector.load %arg12[%c0_68, %c0_69, %c0_70] : memref<2x32x32xf32, #tpu.memory_space<vmem>>, vector<1x32x32xf32>
    %161 = vector.shape_cast %160 : vector<1x32x32xf32> to vector<32x32xf32>
    %c0_71 = arith.constant 0 : index
    %c0_72 = arith.constant 0 : index
    %c0_73 = arith.constant 0 : index
    %162 = vector.load %arg13[%c0_71, %c0_72, %c0_73] : memref<2x1x32xf32, #tpu.memory_space<vmem>>, vector<1x1x32xf32>
    %163 = vector.shape_cast %162 : vector<1x1x32xf32> to vector<1x32xf32>
    %164 = vector.extract_strided_slice %152 {offsets = [0, 0], sizes = [16, 8], strides = [1, 1]} : vector<16x32xf32> to vector<16x8xf32>
    %165 = vector.extract_strided_slice %159 {offsets = [0, 0], sizes = [16, 8], strides = [1, 1]} : vector<16x64xf32> to vector<16x8xf32>
    %166 = vector.extract_strided_slice %159 {offsets = [0, 32], sizes = [16, 8], strides = [1, 1]} : vector<16x64xf32> to vector<16x8xf32>
    "tpu.trace_start"() <{level = 10 : i32, message = "qd,kd->qk"}> : () -> ()
    %cst_74 = arith.constant dense<0.000000e+00> : vector<16x16xf32>
    %167 = tpu.matmul %164, %165, %cst_74 {dimension_numbers = #tpu.dot_dimension_numbers<[1], [1], [0], [0], [0, 0, 1, 0], [], []>} : vector<16x8xf32>, vector<16x8xf32>, vector<16x16xf32> -> vector<16x16xf32>
    "tpu.trace_stop"() : () -> ()
    %168 = arith.addf %167, %3 : vector<16x16xf32>
    %cst_75 = arith.constant dense<0xFF800000> : vector<16xf32>
    %169 = vector.multi_reduction <maximumf>, %168, %cst_75 [1] : vector<16x16xf32> to vector<16xf32>
    %170 = vector.shape_cast %169 : vector<16xf32> to vector<16x1xf32>
    %171 = vector.broadcast %170 : vector<16x1xf32> to vector<16x16xf32>
    %172 = arith.subf %168, %171 : vector<16x16xf32>
    %173 = math.exp %172 : vector<16x16xf32>
    %cst_76 = arith.constant dense<0.000000e+00> : vector<16xf32>
    %174 = vector.multi_reduction <add>, %173, %cst_76 [1] : vector<16x16xf32> to vector<16xf32>
    %175 = vector.shape_cast %174 : vector<16xf32> to vector<16x1xf32>
    %176 = tpu.reciprocal %175 {approx = true} : vector<16x1xf32> -> vector<16x1xf32>
    %177 = vector.broadcast %176 : vector<16x1xf32> to vector<16x16xf32>
    %178 = arith.mulf %173, %177 : vector<16x16xf32>
    %cst_77 = arith.constant dense<0.000000e+00> : vector<16x8xf32>
    %179 = tpu.matmul %178, %166, %cst_77 {dimension_numbers = #tpu.dot_dimension_numbers<[1], [0], [0], [1], [0, 0, 1, 1], [], []>} : vector<16x16xf32>, vector<16x8xf32>, vector<16x8xf32> -> vector<16x8xf32>
    %180 = vector.extract_strided_slice %152 {offsets = [0, 8], sizes = [16, 8], strides = [1, 1]} : vector<16x32xf32> to vector<16x8xf32>
    %181 = vector.extract_strided_slice %159 {offsets = [0, 8], sizes = [16, 8], strides = [1, 1]} : vector<16x64xf32> to vector<16x8xf32>
    %182 = vector.extract_strided_slice %159 {offsets = [0, 40], sizes = [16, 8], strides = [1, 1]} : vector<16x64xf32> to vector<16x8xf32>
    "tpu.trace_start"() <{level = 10 : i32, message = "qd,kd->qk"}> : () -> ()
    %cst_78 = arith.constant dense<0.000000e+00> : vector<16x16xf32>
    %183 = tpu.matmul %180, %181, %cst_78 {dimension_numbers = #tpu.dot_dimension_numbers<[1], [1], [0], [0], [0, 0, 1, 0], [], []>} : vector<16x8xf32>, vector<16x8xf32>, vector<16x16xf32> -> vector<16x16xf32>
    "tpu.trace_stop"() : () -> ()
    %184 = arith.addf %183, %3 : vector<16x16xf32>
    %cst_79 = arith.constant dense<0xFF800000> : vector<16xf32>
    %185 = vector.multi_reduction <maximumf>, %184, %cst_79 [1] : vector<16x16xf32> to vector<16xf32>
    %186 = vector.shape_cast %185 : vector<16xf32> to vector<16x1xf32>
    %187 = vector.broadcast %186 : vector<16x1xf32> to vector<16x16xf32>
    %188 = arith.subf %184, %187 : vector<16x16xf32>
    %189 = math.exp %188 : vector<16x16xf32>
    %cst_80 = arith.constant dense<0.000000e+00> : vector<16xf32>
    %190 = vector.multi_reduction <add>, %189, %cst_80 [1] : vector<16x16xf32> to vector<16xf32>
    %191 = vector.shape_cast %190 : vector<16xf32> to vector<16x1xf32>
    %192 = tpu.reciprocal %191 {approx = true} : vector<16x1xf32> -> vector<16x1xf32>
    %193 = vector.broadcast %192 : vector<16x1xf32> to vector<16x16xf32>
    %194 = arith.mulf %189, %193 : vector<16x16xf32>
    %cst_81 = arith.constant dense<0.000000e+00> : vector<16x8xf32>
    %195 = tpu.matmul %194, %182, %cst_81 {dimension_numbers = #tpu.dot_dimension_numbers<[1], [0], [0], [1], [0, 0, 1, 1], [], []>} : vector<16x16xf32>, vector<16x8xf32>, vector<16x8xf32> -> vector<16x8xf32>
    %196 = vector.extract_strided_slice %152 {offsets = [0, 16], sizes = [16, 8], strides = [1, 1]} : vector<16x32xf32> to vector<16x8xf32>
    %197 = vector.extract_strided_slice %159 {offsets = [0, 16], sizes = [16, 8], strides = [1, 1]} : vector<16x64xf32> to vector<16x8xf32>
    %198 = vector.extract_strided_slice %159 {offsets = [0, 48], sizes = [16, 8], strides = [1, 1]} : vector<16x64xf32> to vector<16x8xf32>
    "tpu.trace_start"() <{level = 10 : i32, message = "qd,kd->qk"}> : () -> ()
    %cst_82 = arith.constant dense<0.000000e+00> : vector<16x16xf32>
    %199 = tpu.matmul %196, %197, %cst_82 {dimension_numbers = #tpu.dot_dimension_numbers<[1], [1], [0], [0], [0, 0, 1, 0], [], []>} : vector<16x8xf32>, vector<16x8xf32>, vector<16x16xf32> -> vector<16x16xf32>
    "tpu.trace_stop"() : () -> ()
    %200 = arith.addf %199, %3 : vector<16x16xf32>
    %cst_83 = arith.constant dense<0xFF800000> : vector<16xf32>
    %201 = vector.multi_reduction <maximumf>, %200, %cst_83 [1] : vector<16x16xf32> to vector<16xf32>
    %202 = vector.shape_cast %201 : vector<16xf32> to vector<16x1xf32>
    %203 = vector.broadcast %202 : vector<16x1xf32> to vector<16x16xf32>
    %204 = arith.subf %200, %203 : vector<16x16xf32>
    %205 = math.exp %204 : vector<16x16xf32>
    %cst_84 = arith.constant dense<0.000000e+00> : vector<16xf32>
    %206 = vector.multi_reduction <add>, %205, %cst_84 [1] : vector<16x16xf32> to vector<16xf32>
    %207 = vector.shape_cast %206 : vector<16xf32> to vector<16x1xf32>
    %208 = tpu.reciprocal %207 {approx = true} : vector<16x1xf32> -> vector<16x1xf32>
    %209 = vector.broadcast %208 : vector<16x1xf32> to vector<16x16xf32>
    %210 = arith.mulf %205, %209 : vector<16x16xf32>
    %cst_85 = arith.constant dense<0.000000e+00> : vector<16x8xf32>
    %211 = tpu.matmul %210, %198, %cst_85 {dimension_numbers = #tpu.dot_dimension_numbers<[1], [0], [0], [1], [0, 0, 1, 1], [], []>} : vector<16x16xf32>, vector<16x8xf32>, vector<16x8xf32> -> vector<16x8xf32>
    %212 = vector.extract_strided_slice %152 {offsets = [0, 24], sizes = [16, 8], strides = [1, 1]} : vector<16x32xf32> to vector<16x8xf32>
    %213 = vector.extract_strided_slice %159 {offsets = [0, 24], sizes = [16, 8], strides = [1, 1]} : vector<16x64xf32> to vector<16x8xf32>
    %214 = vector.extract_strided_slice %159 {offsets = [0, 56], sizes = [16, 8], strides = [1, 1]} : vector<16x64xf32> to vector<16x8xf32>
    "tpu.trace_start"() <{level = 10 : i32, message = "qd,kd->qk"}> : () -> ()
    %cst_86 = arith.constant dense<0.000000e+00> : vector<16x16xf32>
    %215 = tpu.matmul %212, %213, %cst_86 {dimension_numbers = #tpu.dot_dimension_numbers<[1], [1], [0], [0], [0, 0, 1, 0], [], []>} : vector<16x8xf32>, vector<16x8xf32>, vector<16x16xf32> -> vector<16x16xf32>
    "tpu.trace_stop"() : () -> ()
    %216 = arith.addf %215, %3 : vector<16x16xf32>
    %cst_87 = arith.constant dense<0xFF800000> : vector<16xf32>
    %217 = vector.multi_reduction <maximumf>, %216, %cst_87 [1] : vector<16x16xf32> to vector<16xf32>
    %218 = vector.shape_cast %217 : vector<16xf32> to vector<16x1xf32>
    %219 = vector.broadcast %218 : vector<16x1xf32> to vector<16x16xf32>
    %220 = arith.subf %216, %219 : vector<16x16xf32>
    %221 = math.exp %220 : vector<16x16xf32>
    %cst_88 = arith.constant dense<0.000000e+00> : vector<16xf32>
    %222 = vector.multi_reduction <add>, %221, %cst_88 [1] : vector<16x16xf32> to vector<16xf32>
    %223 = vector.shape_cast %222 : vector<16xf32> to vector<16x1xf32>
    %224 = tpu.reciprocal %223 {approx = true} : vector<16x1xf32> -> vector<16x1xf32>
    %225 = vector.broadcast %224 : vector<16x1xf32> to vector<16x16xf32>
    %226 = arith.mulf %221, %225 : vector<16x16xf32>
    %cst_89 = arith.constant dense<0.000000e+00> : vector<16x8xf32>
    %227 = tpu.matmul %226, %214, %cst_89 {dimension_numbers = #tpu.dot_dimension_numbers<[1], [0], [0], [1], [0, 0, 1, 1], [], []>} : vector<16x16xf32>, vector<16x8xf32>, vector<16x8xf32> -> vector<16x8xf32>
    %228 = tpu.concatenate %179, %195, %211, %227 in 1 : vector<16x8xf32>, vector<16x8xf32>, vector<16x8xf32>, vector<16x8xf32> -> vector<16x32xf32>
    %cst_90 = arith.constant dense<0.000000e+00> : vector<16x32xf32>
    %229 = tpu.matmul %228, %161, %cst_90 {dimension_numbers = #tpu.dot_dimension_numbers<[1], [0], [0], [1], [0, 0, 1, 1], [], []>} : vector<16x32xf32>, vector<32x32xf32>, vector<16x32xf32> -> vector<16x32xf32>
    %230 = vector.broadcast %163 : vector<1x32xf32> to vector<16x32xf32>
    %231 = arith.addf %229, %230 : vector<16x32xf32>
    %232 = arith.addf %116, %231 : vector<16x32xf32>
    %233 = vector.extract_strided_slice %5 {offsets = [2, 0], sizes = [1, 32], strides = [1, 1]} : vector<3x32xf32> to vector<1x32xf32>
    %234 = vector.extract_strided_slice %7 {offsets = [2, 0], sizes = [1, 32], strides = [1, 1]} : vector<3x32xf32> to vector<1x32xf32>
    %cst_91 = arith.constant dense<0.000000e+00> : vector<16xf32>
    %235 = vector.multi_reduction <add>, %232, %cst_91 [1] : vector<16x32xf32> to vector<16xf32>
    %236 = vector.shape_cast %235 : vector<16xf32> to vector<16x1xf32>
    %cst_92 = arith.constant 3.200000e+01 : f32
    %237 = vector.broadcast %cst_92 : f32 to vector<16x1xf32>
    %238 = arith.divf %236, %237 : vector<16x1xf32>
    %239 = vector.broadcast %238 : vector<16x1xf32> to vector<16x32xf32>
    %240 = arith.subf %232, %239 : vector<16x32xf32>
    %241 = vector.broadcast %238 : vector<16x1xf32> to vector<16x32xf32>
    %242 = arith.subf %232, %241 : vector<16x32xf32>
    %243 = arith.mulf %240, %242 : vector<16x32xf32>
    %cst_93 = arith.constant dense<0.000000e+00> : vector<16xf32>
    %244 = vector.multi_reduction <add>, %243, %cst_93 [1] : vector<16x32xf32> to vector<16xf32>
    %245 = vector.shape_cast %244 : vector<16xf32> to vector<16x1xf32>
    %cst_94 = arith.constant 3.200000e+01 : f32
    %246 = vector.broadcast %cst_94 : f32 to vector<16x1xf32>
    %247 = arith.divf %245, %246 : vector<16x1xf32>
    %cst_95 = arith.constant 1.03225803 : f32
    %248 = vector.broadcast %cst_95 : f32 to vector<16x1xf32>
    %249 = arith.mulf %247, %248 : vector<16x1xf32>
    %250 = math.sqrt %249 : vector<16x1xf32>
    %251 = vector.broadcast %238 : vector<16x1xf32> to vector<16x32xf32>
    %252 = arith.subf %232, %251 : vector<16x32xf32>
    %253 = vector.broadcast %233 : vector<1x32xf32> to vector<16x32xf32>
    %254 = arith.mulf %253, %252 : vector<16x32xf32>
    %cst_96 = arith.constant 9.99999997E-7 : f32
    %255 = vector.broadcast %cst_96 : f32 to vector<16x1xf32>
    %256 = arith.addf %250, %255 : vector<16x1xf32>
    %257 = tpu.reciprocal %256 {approx = true} : vector<16x1xf32> -> vector<16x1xf32>
    %258 = vector.broadcast %257 : vector<16x1xf32> to vector<16x32xf32>
    %259 = arith.mulf %254, %258 : vector<16x32xf32>
    %260 = vector.broadcast %234 : vector<1x32xf32> to vector<16x32xf32>
    %261 = arith.addf %259, %260 : vector<16x32xf32>
    %c0_97 = arith.constant 0 : index
    %c0_98 = arith.constant 0 : index
    %c0_99 = arith.constant 0 : index
    %262 = vector.load %arg14[%c0_97, %c0_98, %c0_99] : memref<2x32x64xf32, #tpu.memory_space<vmem>>, vector<1x32x64xf32>
    %263 = vector.shape_cast %262 : vector<1x32x64xf32> to vector<32x64xf32>
    %cst_100 = arith.constant dense<0.000000e+00> : vector<16x64xf32>
    %264 = tpu.matmul %261, %263, %cst_100 {dimension_numbers = #tpu.dot_dimension_numbers<[1], [0], [0], [1], [0, 0, 1, 1], [], []>} : vector<16x32xf32>, vector<32x64xf32>, vector<16x64xf32> -> vector<16x64xf32>
    %c0_101 = arith.constant 0 : index
    %c0_102 = arith.constant 0 : index
    %c0_103 = arith.constant 0 : index
    %265 = vector.load %arg15[%c0_101, %c0_102, %c0_103] : memref<2x1x64xf32, #tpu.memory_space<vmem>>, vector<1x1x64xf32>
    %266 = vector.shape_cast %265 : vector<1x1x64xf32> to vector<1x64xf32>
    %267 = vector.broadcast %266 : vector<1x64xf32> to vector<16x64xf32>
    %268 = arith.addf %264, %267 : vector<16x64xf32>
    %cst_104 = arith.constant 0.000000e+00 : f32
    %269 = vector.broadcast %cst_104 : f32 to vector<16x64xf32>
    %270 = arith.maximumf %268, %269 : vector<16x64xf32>
    %c0_105 = arith.constant 0 : index
    %c0_106 = arith.constant 0 : index
    %c0_107 = arith.constant 0 : index
    %271 = vector.load %arg16[%c0_105, %c0_106, %c0_107] : memref<2x64x32xf32, #tpu.memory_space<vmem>>, vector<1x64x32xf32>
    %272 = vector.shape_cast %271 : vector<1x64x32xf32> to vector<64x32xf32>
    %cst_108 = arith.constant dense<0.000000e+00> : vector<16x32xf32>
    %273 = tpu.matmul %270, %272, %cst_108 {dimension_numbers = #tpu.dot_dimension_numbers<[1], [0], [0], [1], [0, 0, 1, 1], [], []>} : vector<16x64xf32>, vector<64x32xf32>, vector<16x32xf32> -> vector<16x32xf32>
    %274 = arith.addf %232, %273 : vector<16x32xf32>
    %c0_109 = arith.constant 0 : index
    %c0_110 = arith.constant 0 : index
    %c0_111 = arith.constant 0 : index
    %275 = vector.load %arg17[%c0_109, %c0_110, %c0_111] : memref<2x1x32xf32, #tpu.memory_space<vmem>>, vector<1x1x32xf32>
    %276 = vector.shape_cast %275 : vector<1x1x32xf32> to vector<1x32xf32>
    %277 = vector.broadcast %276 : vector<1x32xf32> to vector<16x32xf32>
    %278 = arith.addf %274, %277 : vector<16x32xf32>
    %c1 = arith.constant 1 : index
    %c0_112 = arith.constant 0 : index
    %c0_113 = arith.constant 0 : index
    %279 = vector.load %arg18[%c1, %c0_112, %c0_113] : memref<2x3x32xf32, #tpu.memory_space<vmem>>, vector<1x3x32xf32>
    %280 = vector.shape_cast %279 : vector<1x3x32xf32> to vector<3x32xf32>
    %c1_114 = arith.constant 1 : index
    %c0_115 = arith.constant 0 : index
    %c0_116 = arith.constant 0 : index
    %281 = vector.load %arg19[%c1_114, %c0_115, %c0_116] : memref<2x3x32xf32, #tpu.memory_space<vmem>>, vector<1x3x32xf32>
    %282 = vector.shape_cast %281 : vector<1x3x32xf32> to vector<3x32xf32>
    %283 = vector.extract_strided_slice %280 {offsets = [0, 0], sizes = [1, 32], strides = [1, 1]} : vector<3x32xf32> to vector<1x32xf32>
    %284 = vector.extract_strided_slice %282 {offsets = [0, 0], sizes = [1, 32], strides = [1, 1]} : vector<3x32xf32> to vector<1x32xf32>
    %cst_117 = arith.constant dense<0.000000e+00> : vector<16xf32>
    %285 = vector.multi_reduction <add>, %278, %cst_117 [1] : vector<16x32xf32> to vector<16xf32>
    %286 = vector.shape_cast %285 : vector<16xf32> to vector<16x1xf32>
    %cst_118 = arith.constant 3.200000e+01 : f32
    %287 = vector.broadcast %cst_118 : f32 to vector<16x1xf32>
    %288 = arith.divf %286, %287 : vector<16x1xf32>
    %289 = vector.broadcast %288 : vector<16x1xf32> to vector<16x32xf32>
    %290 = arith.subf %278, %289 : vector<16x32xf32>
    %291 = vector.broadcast %288 : vector<16x1xf32> to vector<16x32xf32>
    %292 = arith.subf %278, %291 : vector<16x32xf32>
    %293 = arith.mulf %290, %292 : vector<16x32xf32>
    %cst_119 = arith.constant dense<0.000000e+00> : vector<16xf32>
    %294 = vector.multi_reduction <add>, %293, %cst_119 [1] : vector<16x32xf32> to vector<16xf32>
    %295 = vector.shape_cast %294 : vector<16xf32> to vector<16x1xf32>
    %cst_120 = arith.constant 3.200000e+01 : f32
    %296 = vector.broadcast %cst_120 : f32 to vector<16x1xf32>
    %297 = arith.divf %295, %296 : vector<16x1xf32>
    %cst_121 = arith.constant 1.03225803 : f32
    %298 = vector.broadcast %cst_121 : f32 to vector<16x1xf32>
    %299 = arith.mulf %297, %298 : vector<16x1xf32>
    %300 = math.sqrt %299 : vector<16x1xf32>
    %301 = vector.broadcast %288 : vector<16x1xf32> to vector<16x32xf32>
    %302 = arith.subf %278, %301 : vector<16x32xf32>
    %303 = vector.broadcast %283 : vector<1x32xf32> to vector<16x32xf32>
    %304 = arith.mulf %303, %302 : vector<16x32xf32>
    %cst_122 = arith.constant 9.99999997E-7 : f32
    %305 = vector.broadcast %cst_122 : f32 to vector<16x1xf32>
    %306 = arith.addf %300, %305 : vector<16x1xf32>
    %307 = tpu.reciprocal %306 {approx = true} : vector<16x1xf32> -> vector<16x1xf32>
    %308 = vector.broadcast %307 : vector<16x1xf32> to vector<16x32xf32>
    %309 = arith.mulf %304, %308 : vector<16x32xf32>
    %310 = vector.broadcast %284 : vector<1x32xf32> to vector<16x32xf32>
    %311 = arith.addf %309, %310 : vector<16x32xf32>
    %c1_123 = arith.constant 1 : index
    %c0_124 = arith.constant 0 : index
    %c0_125 = arith.constant 0 : index
    %312 = vector.load %arg4[%c1_123, %c0_124, %c0_125] : memref<2x32x96xf32, #tpu.memory_space<vmem>>, vector<1x32x96xf32>
    %313 = vector.shape_cast %312 : vector<1x32x96xf32> to vector<32x96xf32>
    %cst_126 = arith.constant dense<0.000000e+00> : vector<16x96xf32>
    %314 = tpu.matmul %311, %313, %cst_126 {dimension_numbers = #tpu.dot_dimension_numbers<[1], [0], [0], [1], [0, 0, 1, 1], [], []>} : vector<16x32xf32>, vector<32x96xf32>, vector<16x96xf32> -> vector<16x96xf32>
    %c1_127 = arith.constant 1 : index
    %c0_128 = arith.constant 0 : index
    %c0_129 = arith.constant 0 : index
    %315 = vector.load %arg5[%c1_127, %c0_128, %c0_129] : memref<2x1x96xf32, #tpu.memory_space<vmem>>, vector<1x1x96xf32>
    %316 = vector.shape_cast %315 : vector<1x1x96xf32> to vector<1x96xf32>
    %317 = vector.broadcast %316 : vector<1x96xf32> to vector<16x96xf32>
    %318 = arith.addf %314, %317 : vector<16x96xf32>
    %c1_130 = arith.constant 1 : index
    %c0_131 = arith.constant 0 : index
    %c0_132 = arith.constant 0 : index
    %319 = vector.load %arg6[%c1_130, %c0_131, %c0_132] : memref<2x32x32xf32, #tpu.memory_space<vmem>>, vector<1x32x32xf32>
    %320 = vector.shape_cast %319 : vector<1x32x32xf32> to vector<32x32xf32>
    %c1_133 = arith.constant 1 : index
    %c0_134 = arith.constant 0 : index
    %c0_135 = arith.constant 0 : index
    %321 = vector.load %arg7[%c1_133, %c0_134, %c0_135] : memref<2x1x32xf32, #tpu.memory_space<vmem>>, vector<1x1x32xf32>
    %322 = vector.shape_cast %321 : vector<1x1x32xf32> to vector<1x32xf32>
    %323 = vector.extract_strided_slice %318 {offsets = [0, 0], sizes = [16, 8], strides = [1, 1]} : vector<16x96xf32> to vector<16x8xf32>
    %324 = vector.extract_strided_slice %318 {offsets = [0, 32], sizes = [16, 8], strides = [1, 1]} : vector<16x96xf32> to vector<16x8xf32>
    %325 = vector.extract_strided_slice %318 {offsets = [0, 64], sizes = [16, 8], strides = [1, 1]} : vector<16x96xf32> to vector<16x8xf32>
    "tpu.trace_start"() <{level = 10 : i32, message = "qd,kd->qk"}> : () -> ()
    %cst_136 = arith.constant dense<0.000000e+00> : vector<16x16xf32>
    %326 = tpu.matmul %323, %324, %cst_136 {dimension_numbers = #tpu.dot_dimension_numbers<[1], [1], [0], [0], [0, 0, 1, 0], [], []>} : vector<16x8xf32>, vector<16x8xf32>, vector<16x16xf32> -> vector<16x16xf32>
    "tpu.trace_stop"() : () -> ()
    %327 = arith.addf %326, %2 : vector<16x16xf32>
    %cst_137 = arith.constant dense<0xFF800000> : vector<16xf32>
    %328 = vector.multi_reduction <maximumf>, %327, %cst_137 [1] : vector<16x16xf32> to vector<16xf32>
    %329 = vector.shape_cast %328 : vector<16xf32> to vector<16x1xf32>
    %330 = vector.broadcast %329 : vector<16x1xf32> to vector<16x16xf32>
    %331 = arith.subf %327, %330 : vector<16x16xf32>
    %332 = math.exp %331 : vector<16x16xf32>
    %cst_138 = arith.constant dense<0.000000e+00> : vector<16xf32>
    %333 = vector.multi_reduction <add>, %332, %cst_138 [1] : vector<16x16xf32> to vector<16xf32>
    %334 = vector.shape_cast %333 : vector<16xf32> to vector<16x1xf32>
    %335 = tpu.reciprocal %334 {approx = true} : vector<16x1xf32> -> vector<16x1xf32>
    %336 = vector.broadcast %335 : vector<16x1xf32> to vector<16x16xf32>
    %337 = arith.mulf %332, %336 : vector<16x16xf32>
    %cst_139 = arith.constant dense<0.000000e+00> : vector<16x8xf32>
    %338 = tpu.matmul %337, %325, %cst_139 {dimension_numbers = #tpu.dot_dimension_numbers<[1], [0], [0], [1], [0, 0, 1, 1], [], []>} : vector<16x16xf32>, vector<16x8xf32>, vector<16x8xf32> -> vector<16x8xf32>
    %339 = vector.extract_strided_slice %318 {offsets = [0, 8], sizes = [16, 8], strides = [1, 1]} : vector<16x96xf32> to vector<16x8xf32>
    %340 = vector.extract_strided_slice %318 {offsets = [0, 40], sizes = [16, 8], strides = [1, 1]} : vector<16x96xf32> to vector<16x8xf32>
    %341 = vector.extract_strided_slice %318 {offsets = [0, 72], sizes = [16, 8], strides = [1, 1]} : vector<16x96xf32> to vector<16x8xf32>
    "tpu.trace_start"() <{level = 10 : i32, message = "qd,kd->qk"}> : () -> ()
    %cst_140 = arith.constant dense<0.000000e+00> : vector<16x16xf32>
    %342 = tpu.matmul %339, %340, %cst_140 {dimension_numbers = #tpu.dot_dimension_numbers<[1], [1], [0], [0], [0, 0, 1, 0], [], []>} : vector<16x8xf32>, vector<16x8xf32>, vector<16x16xf32> -> vector<16x16xf32>
    "tpu.trace_stop"() : () -> ()
    %343 = arith.addf %342, %2 : vector<16x16xf32>
    %cst_141 = arith.constant dense<0xFF800000> : vector<16xf32>
    %344 = vector.multi_reduction <maximumf>, %343, %cst_141 [1] : vector<16x16xf32> to vector<16xf32>
    %345 = vector.shape_cast %344 : vector<16xf32> to vector<16x1xf32>
    %346 = vector.broadcast %345 : vector<16x1xf32> to vector<16x16xf32>
    %347 = arith.subf %343, %346 : vector<16x16xf32>
    %348 = math.exp %347 : vector<16x16xf32>
    %cst_142 = arith.constant dense<0.000000e+00> : vector<16xf32>
    %349 = vector.multi_reduction <add>, %348, %cst_142 [1] : vector<16x16xf32> to vector<16xf32>
    %350 = vector.shape_cast %349 : vector<16xf32> to vector<16x1xf32>
    %351 = tpu.reciprocal %350 {approx = true} : vector<16x1xf32> -> vector<16x1xf32>
    %352 = vector.broadcast %351 : vector<16x1xf32> to vector<16x16xf32>
    %353 = arith.mulf %348, %352 : vector<16x16xf32>
    %cst_143 = arith.constant dense<0.000000e+00> : vector<16x8xf32>
    %354 = tpu.matmul %353, %341, %cst_143 {dimension_numbers = #tpu.dot_dimension_numbers<[1], [0], [0], [1], [0, 0, 1, 1], [], []>} : vector<16x16xf32>, vector<16x8xf32>, vector<16x8xf32> -> vector<16x8xf32>
    %355 = vector.extract_strided_slice %318 {offsets = [0, 16], sizes = [16, 8], strides = [1, 1]} : vector<16x96xf32> to vector<16x8xf32>
    %356 = vector.extract_strided_slice %318 {offsets = [0, 48], sizes = [16, 8], strides = [1, 1]} : vector<16x96xf32> to vector<16x8xf32>
    %357 = vector.extract_strided_slice %318 {offsets = [0, 80], sizes = [16, 8], strides = [1, 1]} : vector<16x96xf32> to vector<16x8xf32>
    "tpu.trace_start"() <{level = 10 : i32, message = "qd,kd->qk"}> : () -> ()
    %cst_144 = arith.constant dense<0.000000e+00> : vector<16x16xf32>
    %358 = tpu.matmul %355, %356, %cst_144 {dimension_numbers = #tpu.dot_dimension_numbers<[1], [1], [0], [0], [0, 0, 1, 0], [], []>} : vector<16x8xf32>, vector<16x8xf32>, vector<16x16xf32> -> vector<16x16xf32>
    "tpu.trace_stop"() : () -> ()
    %359 = arith.addf %358, %2 : vector<16x16xf32>
    %cst_145 = arith.constant dense<0xFF800000> : vector<16xf32>
    %360 = vector.multi_reduction <maximumf>, %359, %cst_145 [1] : vector<16x16xf32> to vector<16xf32>
    %361 = vector.shape_cast %360 : vector<16xf32> to vector<16x1xf32>
    %362 = vector.broadcast %361 : vector<16x1xf32> to vector<16x16xf32>
    %363 = arith.subf %359, %362 : vector<16x16xf32>
    %364 = math.exp %363 : vector<16x16xf32>
    %cst_146 = arith.constant dense<0.000000e+00> : vector<16xf32>
    %365 = vector.multi_reduction <add>, %364, %cst_146 [1] : vector<16x16xf32> to vector<16xf32>
    %366 = vector.shape_cast %365 : vector<16xf32> to vector<16x1xf32>
    %367 = tpu.reciprocal %366 {approx = true} : vector<16x1xf32> -> vector<16x1xf32>
    %368 = vector.broadcast %367 : vector<16x1xf32> to vector<16x16xf32>
    %369 = arith.mulf %364, %368 : vector<16x16xf32>
    %cst_147 = arith.constant dense<0.000000e+00> : vector<16x8xf32>
    %370 = tpu.matmul %369, %357, %cst_147 {dimension_numbers = #tpu.dot_dimension_numbers<[1], [0], [0], [1], [0, 0, 1, 1], [], []>} : vector<16x16xf32>, vector<16x8xf32>, vector<16x8xf32> -> vector<16x8xf32>
    %371 = vector.extract_strided_slice %318 {offsets = [0, 24], sizes = [16, 8], strides = [1, 1]} : vector<16x96xf32> to vector<16x8xf32>
    %372 = vector.extract_strided_slice %318 {offsets = [0, 56], sizes = [16, 8], strides = [1, 1]} : vector<16x96xf32> to vector<16x8xf32>
    %373 = vector.extract_strided_slice %318 {offsets = [0, 88], sizes = [16, 8], strides = [1, 1]} : vector<16x96xf32> to vector<16x8xf32>
    "tpu.trace_start"() <{level = 10 : i32, message = "qd,kd->qk"}> : () -> ()
    %cst_148 = arith.constant dense<0.000000e+00> : vector<16x16xf32>
    %374 = tpu.matmul %371, %372, %cst_148 {dimension_numbers = #tpu.dot_dimension_numbers<[1], [1], [0], [0], [0, 0, 1, 0], [], []>} : vector<16x8xf32>, vector<16x8xf32>, vector<16x16xf32> -> vector<16x16xf32>
    "tpu.trace_stop"() : () -> ()
    %375 = arith.addf %374, %2 : vector<16x16xf32>
    %cst_149 = arith.constant dense<0xFF800000> : vector<16xf32>
    %376 = vector.multi_reduction <maximumf>, %375, %cst_149 [1] : vector<16x16xf32> to vector<16xf32>
    %377 = vector.shape_cast %376 : vector<16xf32> to vector<16x1xf32>
    %378 = vector.broadcast %377 : vector<16x1xf32> to vector<16x16xf32>
    %379 = arith.subf %375, %378 : vector<16x16xf32>
    %380 = math.exp %379 : vector<16x16xf32>
    %cst_150 = arith.constant dense<0.000000e+00> : vector<16xf32>
    %381 = vector.multi_reduction <add>, %380, %cst_150 [1] : vector<16x16xf32> to vector<16xf32>
    %382 = vector.shape_cast %381 : vector<16xf32> to vector<16x1xf32>
    %383 = tpu.reciprocal %382 {approx = true} : vector<16x1xf32> -> vector<16x1xf32>
    %384 = vector.broadcast %383 : vector<16x1xf32> to vector<16x16xf32>
    %385 = arith.mulf %380, %384 : vector<16x16xf32>
    %cst_151 = arith.constant dense<0.000000e+00> : vector<16x8xf32>
    %386 = tpu.matmul %385, %373, %cst_151 {dimension_numbers = #tpu.dot_dimension_numbers<[1], [0], [0], [1], [0, 0, 1, 1], [], []>} : vector<16x16xf32>, vector<16x8xf32>, vector<16x8xf32> -> vector<16x8xf32>
    %387 = tpu.concatenate %338, %354, %370, %386 in 1 : vector<16x8xf32>, vector<16x8xf32>, vector<16x8xf32>, vector<16x8xf32> -> vector<16x32xf32>
    %cst_152 = arith.constant dense<0.000000e+00> : vector<16x32xf32>
    %388 = tpu.matmul %387, %320, %cst_152 {dimension_numbers = #tpu.dot_dimension_numbers<[1], [0], [0], [1], [0, 0, 1, 1], [], []>} : vector<16x32xf32>, vector<32x32xf32>, vector<16x32xf32> -> vector<16x32xf32>
    %389 = vector.broadcast %322 : vector<1x32xf32> to vector<16x32xf32>
    %390 = arith.addf %388, %389 : vector<16x32xf32>
    %391 = arith.addf %278, %390 : vector<16x32xf32>
    %392 = vector.extract_strided_slice %280 {offsets = [1, 0], sizes = [1, 32], strides = [1, 1]} : vector<3x32xf32> to vector<1x32xf32>
    %393 = vector.extract_strided_slice %282 {offsets = [1, 0], sizes = [1, 32], strides = [1, 1]} : vector<3x32xf32> to vector<1x32xf32>
    %cst_153 = arith.constant dense<0.000000e+00> : vector<16xf32>
    %394 = vector.multi_reduction <add>, %391, %cst_153 [1] : vector<16x32xf32> to vector<16xf32>
    %395 = vector.shape_cast %394 : vector<16xf32> to vector<16x1xf32>
    %cst_154 = arith.constant 3.200000e+01 : f32
    %396 = vector.broadcast %cst_154 : f32 to vector<16x1xf32>
    %397 = arith.divf %395, %396 : vector<16x1xf32>
    %398 = vector.broadcast %397 : vector<16x1xf32> to vector<16x32xf32>
    %399 = arith.subf %391, %398 : vector<16x32xf32>
    %400 = vector.broadcast %397 : vector<16x1xf32> to vector<16x32xf32>
    %401 = arith.subf %391, %400 : vector<16x32xf32>
    %402 = arith.mulf %399, %401 : vector<16x32xf32>
    %cst_155 = arith.constant dense<0.000000e+00> : vector<16xf32>
    %403 = vector.multi_reduction <add>, %402, %cst_155 [1] : vector<16x32xf32> to vector<16xf32>
    %404 = vector.shape_cast %403 : vector<16xf32> to vector<16x1xf32>
    %cst_156 = arith.constant 3.200000e+01 : f32
    %405 = vector.broadcast %cst_156 : f32 to vector<16x1xf32>
    %406 = arith.divf %404, %405 : vector<16x1xf32>
    %cst_157 = arith.constant 1.03225803 : f32
    %407 = vector.broadcast %cst_157 : f32 to vector<16x1xf32>
    %408 = arith.mulf %406, %407 : vector<16x1xf32>
    %409 = math.sqrt %408 : vector<16x1xf32>
    %410 = vector.broadcast %397 : vector<16x1xf32> to vector<16x32xf32>
    %411 = arith.subf %391, %410 : vector<16x32xf32>
    %412 = vector.broadcast %392 : vector<1x32xf32> to vector<16x32xf32>
    %413 = arith.mulf %412, %411 : vector<16x32xf32>
    %cst_158 = arith.constant 9.99999997E-7 : f32
    %414 = vector.broadcast %cst_158 : f32 to vector<16x1xf32>
    %415 = arith.addf %409, %414 : vector<16x1xf32>
    %416 = tpu.reciprocal %415 {approx = true} : vector<16x1xf32> -> vector<16x1xf32>
    %417 = vector.broadcast %416 : vector<16x1xf32> to vector<16x32xf32>
    %418 = arith.mulf %413, %417 : vector<16x32xf32>
    %419 = vector.broadcast %393 : vector<1x32xf32> to vector<16x32xf32>
    %420 = arith.addf %418, %419 : vector<16x32xf32>
    %c1_159 = arith.constant 1 : index
    %c0_160 = arith.constant 0 : index
    %c0_161 = arith.constant 0 : index
    %421 = vector.load %arg8[%c1_159, %c0_160, %c0_161] : memref<2x32x32xf32, #tpu.memory_space<vmem>>, vector<1x32x32xf32>
    %422 = vector.shape_cast %421 : vector<1x32x32xf32> to vector<32x32xf32>
    %cst_162 = arith.constant dense<0.000000e+00> : vector<16x32xf32>
    %423 = tpu.matmul %420, %422, %cst_162 {dimension_numbers = #tpu.dot_dimension_numbers<[1], [0], [0], [1], [0, 0, 1, 1], [], []>} : vector<16x32xf32>, vector<32x32xf32>, vector<16x32xf32> -> vector<16x32xf32>
    %c1_163 = arith.constant 1 : index
    %c0_164 = arith.constant 0 : index
    %c0_165 = arith.constant 0 : index
    %424 = vector.load %arg9[%c1_163, %c0_164, %c0_165] : memref<2x1x32xf32, #tpu.memory_space<vmem>>, vector<1x1x32xf32>
    %425 = vector.shape_cast %424 : vector<1x1x32xf32> to vector<1x32xf32>
    %426 = vector.broadcast %425 : vector<1x32xf32> to vector<16x32xf32>
    %427 = arith.addf %423, %426 : vector<16x32xf32>
    %c1_166 = arith.constant 1 : index
    %c0_167 = arith.constant 0 : index
    %c0_168 = arith.constant 0 : index
    %428 = vector.load %arg10[%c1_166, %c0_167, %c0_168] : memref<2x32x64xf32, #tpu.memory_space<vmem>>, vector<1x32x64xf32>
    %429 = vector.shape_cast %428 : vector<1x32x64xf32> to vector<32x64xf32>
    %cst_169 = arith.constant dense<0.000000e+00> : vector<16x64xf32>
    %430 = tpu.matmul %1, %429, %cst_169 {dimension_numbers = #tpu.dot_dimension_numbers<[1], [0], [0], [1], [0, 0, 1, 1], [], []>} : vector<16x32xf32>, vector<32x64xf32>, vector<16x64xf32> -> vector<16x64xf32>
    %c1_170 = arith.constant 1 : index
    %c0_171 = arith.constant 0 : index
    %c0_172 = arith.constant 0 : index
    %431 = vector.load %arg11[%c1_170, %c0_171, %c0_172] : memref<2x1x64xf32, #tpu.memory_space<vmem>>, vector<1x1x64xf32>
    %432 = vector.shape_cast %431 : vector<1x1x64xf32> to vector<1x64xf32>
    %433 = vector.broadcast %432 : vector<1x64xf32> to vector<16x64xf32>
    %434 = arith.addf %430, %433 : vector<16x64xf32>
    %c1_173 = arith.constant 1 : index
    %c0_174 = arith.constant 0 : index
    %c0_175 = arith.constant 0 : index
    %435 = vector.load %arg12[%c1_173, %c0_174, %c0_175] : memref<2x32x32xf32, #tpu.memory_space<vmem>>, vector<1x32x32xf32>
    %436 = vector.shape_cast %435 : vector<1x32x32xf32> to vector<32x32xf32>
    %c1_176 = arith.constant 1 : index
    %c0_177 = arith.constant 0 : index
    %c0_178 = arith.constant 0 : index
    %437 = vector.load %arg13[%c1_176, %c0_177, %c0_178] : memref<2x1x32xf32, #tpu.memory_space<vmem>>, vector<1x1x32xf32>
    %438 = vector.shape_cast %437 : vector<1x1x32xf32> to vector<1x32xf32>
    %439 = vector.extract_strided_slice %427 {offsets = [0, 0], sizes = [16, 8], strides = [1, 1]} : vector<16x32xf32> to vector<16x8xf32>
    %440 = vector.extract_strided_slice %434 {offsets = [0, 0], sizes = [16, 8], strides = [1, 1]} : vector<16x64xf32> to vector<16x8xf32>
    %441 = vector.extract_strided_slice %434 {offsets = [0, 32], sizes = [16, 8], strides = [1, 1]} : vector<16x64xf32> to vector<16x8xf32>
    "tpu.trace_start"() <{level = 10 : i32, message = "qd,kd->qk"}> : () -> ()
    %cst_179 = arith.constant dense<0.000000e+00> : vector<16x16xf32>
    %442 = tpu.matmul %439, %440, %cst_179 {dimension_numbers = #tpu.dot_dimension_numbers<[1], [1], [0], [0], [0, 0, 1, 0], [], []>} : vector<16x8xf32>, vector<16x8xf32>, vector<16x16xf32> -> vector<16x16xf32>
    "tpu.trace_stop"() : () -> ()
    %443 = arith.addf %442, %3 : vector<16x16xf32>
    %cst_180 = arith.constant dense<0xFF800000> : vector<16xf32>
    %444 = vector.multi_reduction <maximumf>, %443, %cst_180 [1] : vector<16x16xf32> to vector<16xf32>
    %445 = vector.shape_cast %444 : vector<16xf32> to vector<16x1xf32>
    %446 = vector.broadcast %445 : vector<16x1xf32> to vector<16x16xf32>
    %447 = arith.subf %443, %446 : vector<16x16xf32>
    %448 = math.exp %447 : vector<16x16xf32>
    %cst_181 = arith.constant dense<0.000000e+00> : vector<16xf32>
    %449 = vector.multi_reduction <add>, %448, %cst_181 [1] : vector<16x16xf32> to vector<16xf32>
    %450 = vector.shape_cast %449 : vector<16xf32> to vector<16x1xf32>
    %451 = tpu.reciprocal %450 {approx = true} : vector<16x1xf32> -> vector<16x1xf32>
    %452 = vector.broadcast %451 : vector<16x1xf32> to vector<16x16xf32>
    %453 = arith.mulf %448, %452 : vector<16x16xf32>
    %cst_182 = arith.constant dense<0.000000e+00> : vector<16x8xf32>
    %454 = tpu.matmul %453, %441, %cst_182 {dimension_numbers = #tpu.dot_dimension_numbers<[1], [0], [0], [1], [0, 0, 1, 1], [], []>} : vector<16x16xf32>, vector<16x8xf32>, vector<16x8xf32> -> vector<16x8xf32>
    %455 = vector.extract_strided_slice %427 {offsets = [0, 8], sizes = [16, 8], strides = [1, 1]} : vector<16x32xf32> to vector<16x8xf32>
    %456 = vector.extract_strided_slice %434 {offsets = [0, 8], sizes = [16, 8], strides = [1, 1]} : vector<16x64xf32> to vector<16x8xf32>
    %457 = vector.extract_strided_slice %434 {offsets = [0, 40], sizes = [16, 8], strides = [1, 1]} : vector<16x64xf32> to vector<16x8xf32>
    "tpu.trace_start"() <{level = 10 : i32, message = "qd,kd->qk"}> : () -> ()
    %cst_183 = arith.constant dense<0.000000e+00> : vector<16x16xf32>
    %458 = tpu.matmul %455, %456, %cst_183 {dimension_numbers = #tpu.dot_dimension_numbers<[1], [1], [0], [0], [0, 0, 1, 0], [], []>} : vector<16x8xf32>, vector<16x8xf32>, vector<16x16xf32> -> vector<16x16xf32>
    "tpu.trace_stop"() : () -> ()
    %459 = arith.addf %458, %3 : vector<16x16xf32>
    %cst_184 = arith.constant dense<0xFF800000> : vector<16xf32>
    %460 = vector.multi_reduction <maximumf>, %459, %cst_184 [1] : vector<16x16xf32> to vector<16xf32>
    %461 = vector.shape_cast %460 : vector<16xf32> to vector<16x1xf32>
    %462 = vector.broadcast %461 : vector<16x1xf32> to vector<16x16xf32>
    %463 = arith.subf %459, %462 : vector<16x16xf32>
    %464 = math.exp %463 : vector<16x16xf32>
    %cst_185 = arith.constant dense<0.000000e+00> : vector<16xf32>
    %465 = vector.multi_reduction <add>, %464, %cst_185 [1] : vector<16x16xf32> to vector<16xf32>
    %466 = vector.shape_cast %465 : vector<16xf32> to vector<16x1xf32>
    %467 = tpu.reciprocal %466 {approx = true} : vector<16x1xf32> -> vector<16x1xf32>
    %468 = vector.broadcast %467 : vector<16x1xf32> to vector<16x16xf32>
    %469 = arith.mulf %464, %468 : vector<16x16xf32>
    %cst_186 = arith.constant dense<0.000000e+00> : vector<16x8xf32>
    %470 = tpu.matmul %469, %457, %cst_186 {dimension_numbers = #tpu.dot_dimension_numbers<[1], [0], [0], [1], [0, 0, 1, 1], [], []>} : vector<16x16xf32>, vector<16x8xf32>, vector<16x8xf32> -> vector<16x8xf32>
    %471 = vector.extract_strided_slice %427 {offsets = [0, 16], sizes = [16, 8], strides = [1, 1]} : vector<16x32xf32> to vector<16x8xf32>
    %472 = vector.extract_strided_slice %434 {offsets = [0, 16], sizes = [16, 8], strides = [1, 1]} : vector<16x64xf32> to vector<16x8xf32>
    %473 = vector.extract_strided_slice %434 {offsets = [0, 48], sizes = [16, 8], strides = [1, 1]} : vector<16x64xf32> to vector<16x8xf32>
    "tpu.trace_start"() <{level = 10 : i32, message = "qd,kd->qk"}> : () -> ()
    %cst_187 = arith.constant dense<0.000000e+00> : vector<16x16xf32>
    %474 = tpu.matmul %471, %472, %cst_187 {dimension_numbers = #tpu.dot_dimension_numbers<[1], [1], [0], [0], [0, 0, 1, 0], [], []>} : vector<16x8xf32>, vector<16x8xf32>, vector<16x16xf32> -> vector<16x16xf32>
    "tpu.trace_stop"() : () -> ()
    %475 = arith.addf %474, %3 : vector<16x16xf32>
    %cst_188 = arith.constant dense<0xFF800000> : vector<16xf32>
    %476 = vector.multi_reduction <maximumf>, %475, %cst_188 [1] : vector<16x16xf32> to vector<16xf32>
    %477 = vector.shape_cast %476 : vector<16xf32> to vector<16x1xf32>
    %478 = vector.broadcast %477 : vector<16x1xf32> to vector<16x16xf32>
    %479 = arith.subf %475, %478 : vector<16x16xf32>
    %480 = math.exp %479 : vector<16x16xf32>
    %cst_189 = arith.constant dense<0.000000e+00> : vector<16xf32>
    %481 = vector.multi_reduction <add>, %480, %cst_189 [1] : vector<16x16xf32> to vector<16xf32>
    %482 = vector.shape_cast %481 : vector<16xf32> to vector<16x1xf32>
    %483 = tpu.reciprocal %482 {approx = true} : vector<16x1xf32> -> vector<16x1xf32>
    %484 = vector.broadcast %483 : vector<16x1xf32> to vector<16x16xf32>
    %485 = arith.mulf %480, %484 : vector<16x16xf32>
    %cst_190 = arith.constant dense<0.000000e+00> : vector<16x8xf32>
    %486 = tpu.matmul %485, %473, %cst_190 {dimension_numbers = #tpu.dot_dimension_numbers<[1], [0], [0], [1], [0, 0, 1, 1], [], []>} : vector<16x16xf32>, vector<16x8xf32>, vector<16x8xf32> -> vector<16x8xf32>
    %487 = vector.extract_strided_slice %427 {offsets = [0, 24], sizes = [16, 8], strides = [1, 1]} : vector<16x32xf32> to vector<16x8xf32>
    %488 = vector.extract_strided_slice %434 {offsets = [0, 24], sizes = [16, 8], strides = [1, 1]} : vector<16x64xf32> to vector<16x8xf32>
    %489 = vector.extract_strided_slice %434 {offsets = [0, 56], sizes = [16, 8], strides = [1, 1]} : vector<16x64xf32> to vector<16x8xf32>
    "tpu.trace_start"() <{level = 10 : i32, message = "qd,kd->qk"}> : () -> ()
    %cst_191 = arith.constant dense<0.000000e+00> : vector<16x16xf32>
    %490 = tpu.matmul %487, %488, %cst_191 {dimension_numbers = #tpu.dot_dimension_numbers<[1], [1], [0], [0], [0, 0, 1, 0], [], []>} : vector<16x8xf32>, vector<16x8xf32>, vector<16x16xf32> -> vector<16x16xf32>
    "tpu.trace_stop"() : () -> ()
    %491 = arith.addf %490, %3 : vector<16x16xf32>
    %cst_192 = arith.constant dense<0xFF800000> : vector<16xf32>
    %492 = vector.multi_reduction <maximumf>, %491, %cst_192 [1] : vector<16x16xf32> to vector<16xf32>
    %493 = vector.shape_cast %492 : vector<16xf32> to vector<16x1xf32>
    %494 = vector.broadcast %493 : vector<16x1xf32> to vector<16x16xf32>
    %495 = arith.subf %491, %494 : vector<16x16xf32>
    %496 = math.exp %495 : vector<16x16xf32>
    %cst_193 = arith.constant dense<0.000000e+00> : vector<16xf32>
    %497 = vector.multi_reduction <add>, %496, %cst_193 [1] : vector<16x16xf32> to vector<16xf32>
    %498 = vector.shape_cast %497 : vector<16xf32> to vector<16x1xf32>
    %499 = tpu.reciprocal %498 {approx = true} : vector<16x1xf32> -> vector<16x1xf32>
    %500 = vector.broadcast %499 : vector<16x1xf32> to vector<16x16xf32>
    %501 = arith.mulf %496, %500 : vector<16x16xf32>
    %cst_194 = arith.constant dense<0.000000e+00> : vector<16x8xf32>
    %502 = tpu.matmul %501, %489, %cst_194 {dimension_numbers = #tpu.dot_dimension_numbers<[1], [0], [0], [1], [0, 0, 1, 1], [], []>} : vector<16x16xf32>, vector<16x8xf32>, vector<16x8xf32> -> vector<16x8xf32>
    %503 = tpu.concatenate %454, %470, %486, %502 in 1 : vector<16x8xf32>, vector<16x8xf32>, vector<16x8xf32>, vector<16x8xf32> -> vector<16x32xf32>
    %cst_195 = arith.constant dense<0.000000e+00> : vector<16x32xf32>
    %504 = tpu.matmul %503, %436, %cst_195 {dimension_numbers = #tpu.dot_dimension_numbers<[1], [0], [0], [1], [0, 0, 1, 1], [], []>} : vector<16x32xf32>, vector<32x32xf32>, vector<16x32xf32> -> vector<16x32xf32>
    %505 = vector.broadcast %438 : vector<1x32xf32> to vector<16x32xf32>
    %506 = arith.addf %504, %505 : vector<16x32xf32>
    %507 = arith.addf %391, %506 : vector<16x32xf32>
    %508 = vector.extract_strided_slice %280 {offsets = [2, 0], sizes = [1, 32], strides = [1, 1]} : vector<3x32xf32> to vector<1x32xf32>
    %509 = vector.extract_strided_slice %282 {offsets = [2, 0], sizes = [1, 32], strides = [1, 1]} : vector<3x32xf32> to vector<1x32xf32>
    %cst_196 = arith.constant dense<0.000000e+00> : vector<16xf32>
    %510 = vector.multi_reduction <add>, %507, %cst_196 [1] : vector<16x32xf32> to vector<16xf32>
    %511 = vector.shape_cast %510 : vector<16xf32> to vector<16x1xf32>
    %cst_197 = arith.constant 3.200000e+01 : f32
    %512 = vector.broadcast %cst_197 : f32 to vector<16x1xf32>
    %513 = arith.divf %511, %512 : vector<16x1xf32>
    %514 = vector.broadcast %513 : vector<16x1xf32> to vector<16x32xf32>
    %515 = arith.subf %507, %514 : vector<16x32xf32>
    %516 = vector.broadcast %513 : vector<16x1xf32> to vector<16x32xf32>
    %517 = arith.subf %507, %516 : vector<16x32xf32>
    %518 = arith.mulf %515, %517 : vector<16x32xf32>
    %cst_198 = arith.constant dense<0.000000e+00> : vector<16xf32>
    %519 = vector.multi_reduction <add>, %518, %cst_198 [1] : vector<16x32xf32> to vector<16xf32>
    %520 = vector.shape_cast %519 : vector<16xf32> to vector<16x1xf32>
    %cst_199 = arith.constant 3.200000e+01 : f32
    %521 = vector.broadcast %cst_199 : f32 to vector<16x1xf32>
    %522 = arith.divf %520, %521 : vector<16x1xf32>
    %cst_200 = arith.constant 1.03225803 : f32
    %523 = vector.broadcast %cst_200 : f32 to vector<16x1xf32>
    %524 = arith.mulf %522, %523 : vector<16x1xf32>
    %525 = math.sqrt %524 : vector<16x1xf32>
    %526 = vector.broadcast %513 : vector<16x1xf32> to vector<16x32xf32>
    %527 = arith.subf %507, %526 : vector<16x32xf32>
    %528 = vector.broadcast %508 : vector<1x32xf32> to vector<16x32xf32>
    %529 = arith.mulf %528, %527 : vector<16x32xf32>
    %cst_201 = arith.constant 9.99999997E-7 : f32
    %530 = vector.broadcast %cst_201 : f32 to vector<16x1xf32>
    %531 = arith.addf %525, %530 : vector<16x1xf32>
    %532 = tpu.reciprocal %531 {approx = true} : vector<16x1xf32> -> vector<16x1xf32>
    %533 = vector.broadcast %532 : vector<16x1xf32> to vector<16x32xf32>
    %534 = arith.mulf %529, %533 : vector<16x32xf32>
    %535 = vector.broadcast %509 : vector<1x32xf32> to vector<16x32xf32>
    %536 = arith.addf %534, %535 : vector<16x32xf32>
    %c1_202 = arith.constant 1 : index
    %c0_203 = arith.constant 0 : index
    %c0_204 = arith.constant 0 : index
    %537 = vector.load %arg14[%c1_202, %c0_203, %c0_204] : memref<2x32x64xf32, #tpu.memory_space<vmem>>, vector<1x32x64xf32>
    %538 = vector.shape_cast %537 : vector<1x32x64xf32> to vector<32x64xf32>
    %cst_205 = arith.constant dense<0.000000e+00> : vector<16x64xf32>
    %539 = tpu.matmul %536, %538, %cst_205 {dimension_numbers = #tpu.dot_dimension_numbers<[1], [0], [0], [1], [0, 0, 1, 1], [], []>} : vector<16x32xf32>, vector<32x64xf32>, vector<16x64xf32> -> vector<16x64xf32>
    %c1_206 = arith.constant 1 : index
    %c0_207 = arith.constant 0 : index
    %c0_208 = arith.constant 0 : index
    %540 = vector.load %arg15[%c1_206, %c0_207, %c0_208] : memref<2x1x64xf32, #tpu.memory_space<vmem>>, vector<1x1x64xf32>
    %541 = vector.shape_cast %540 : vector<1x1x64xf32> to vector<1x64xf32>
    %542 = vector.broadcast %541 : vector<1x64xf32> to vector<16x64xf32>
    %543 = arith.addf %539, %542 : vector<16x64xf32>
    %cst_209 = arith.constant 0.000000e+00 : f32
    %544 = vector.broadcast %cst_209 : f32 to vector<16x64xf32>
    %545 = arith.maximumf %543, %544 : vector<16x64xf32>
    %c1_210 = arith.constant 1 : index
    %c0_211 = arith.constant 0 : index
    %c0_212 = arith.constant 0 : index
    %546 = vector.load %arg16[%c1_210, %c0_211, %c0_212] : memref<2x64x32xf32, #tpu.memory_space<vmem>>, vector<1x64x32xf32>
    %547 = vector.shape_cast %546 : vector<1x64x32xf32> to vector<64x32xf32>
    %cst_213 = arith.constant dense<0.000000e+00> : vector<16x32xf32>
    %548 = tpu.matmul %545, %547, %cst_213 {dimension_numbers = #tpu.dot_dimension_numbers<[1], [0], [0], [1], [0, 0, 1, 1], [], []>} : vector<16x64xf32>, vector<64x32xf32>, vector<16x32xf32> -> vector<16x32xf32>
    %549 = arith.addf %507, %548 : vector<16x32xf32>
    %c1_214 = arith.constant 1 : index
    %c0_215 = arith.constant 0 : index
    %c0_216 = arith.constant 0 : index
    %550 = vector.load %arg17[%c1_214, %c0_215, %c0_216] : memref<2x1x32xf32, #tpu.memory_space<vmem>>, vector<1x1x32xf32>
    %551 = vector.shape_cast %550 : vector<1x1x32xf32> to vector<1x32xf32>
    %552 = vector.broadcast %551 : vector<1x32xf32> to vector<16x32xf32>
    %553 = arith.addf %549, %552 : vector<16x32xf32>
    %c0_217 = arith.constant 0 : index
    %c0_218 = arith.constant 0 : index
    %554 = vector.load %arg20[%c0_217, %c0_218] : memref<16x32xf32, #tpu.memory_space<vmem>>, vector<16x32xf32>
    tpu.vector_store %arg20[%c0_217, %c0_218], %553 {strides = array<i32>} : memref<16x32xf32, #tpu.memory_space<vmem>>, vector<16x32xf32>,
    return
  }
}

</mosaic_0001>

<llo_original>
// kernel: tpu_custom_call.1
$region0: #{tpu_custom_call.1}
  #allocation0 [shape = 'u32[]', space=smem, size = 0x4, offset = 0x4, fixed_abs, tag = 'smem constant byte address 0x4 - core index']
  #allocation1 [shape = 'u32[144,128]{1,0:T(1,128)}', space=vmem, size = 0x12000, scoped, tag = 'internal scratch']
  %s0 = inlined_call_operand.vmem [shape: f32[16,32], index: 0, kind: input, shape index: {}]
  %s1 = inlined_call_operand.hbm [shape: f32[16,32], index: 1, kind: input, shape index: {}]
  %s2 = inlined_call_operand.hbm [shape: f32[16,16], index: 2, kind: input, shape index: {}]
  %s3 = inlined_call_operand.hbm [shape: f32[16,16], index: 3, kind: input, shape index: {}]
  %s4 = inlined_call_operand.vmem [shape: f32[2,32,96], index: 4, kind: input, shape index: {}]
  %s5 = inlined_call_operand.vmem [shape: f32[2,1,96], index: 5, kind: input, shape index: {}]
  %s6 = inlined_call_operand.vmem [shape: f32[2,32,32], index: 6, kind: input, shape index: {}]
  %s7 = inlined_call_operand.vmem [shape: f32[2,1,32], index: 7, kind: input, shape index: {}]
  %s8 = inlined_call_operand.vmem [shape: f32[2,32,32], index: 8, kind: input, shape index: {}]
  %s9 = inlined_call_operand.vmem [shape: f32[2,1,32], index: 9, kind: input, shape index: {}]
  %s10 = inlined_call_operand.hbm [shape: f32[2,32,64], index: 10, kind: input, shape index: {}]
  %s11 = inlined_call_operand.vmem [shape: f32[2,1,64], index: 11, kind: input, shape index: {}]
  %s12 = inlined_call_operand.hbm [shape: f32[2,32,32], index: 12, kind: input, shape index: {}]
  %s13 = inlined_call_operand.vmem [shape: f32[2,1,32], index: 13, kind: input, shape index: {}]
  %s14 = inlined_call_operand.hbm [shape: f32[2,32,64], index: 14, kind: input, shape index: {}]
  %s15 = inlined_call_operand.vmem [shape: f32[2,1,64], index: 15, kind: input, shape index: {}]
  %s16 = inlined_call_operand.vmem [shape: f32[2,64,32], index: 16, kind: input, shape index: {}]
  %s17 = inlined_call_operand.vmem [shape: f32[2,1,32], index: 17, kind: input, shape index: {}]
  %s18 = inlined_call_operand.vmem [shape: f32[2,3,32], index: 18, kind: input, shape index: {}]
  %s19 = inlined_call_operand.vmem [shape: f32[2,3,32], index: 19, kind: input, shape index: {}]
  %s20 = inlined_call_operand.hbm [shape: f32[16,32], index: 20, kind: output, shape index: {}]
  %s21 = sld [smem:[#allocation0]]
  $region114: #{tpu_custom_call.1} parent=0
    _
  %s23 = ssub.s32 1, %s21
  %s24 = scalar_select 0, %s23, %s21
  $region1: #{tpu_custom_call.1} parent=0
    #allocation2 [shape = 'u8[8192]{0}', space=vmem, size = 0x2000, scoped, tag = 'input window, operand 1, single buffered']
    #allocation3 [shape = 's32[1]{0}', space=sflag, size = 0x4, scoped, tag = 'scoped memory for tpu_custom_call.1']
    #allocation4 [shape = 's32[1]{0}', space=sflag, size = 0x4, scoped, tag = 'scoped memory for tpu_custom_call.1']
    #allocation5 [shape = 'u8[8192]{0}', space=vmem, size = 0x2000, scoped, tag = 'input window, operand 2, single buffered']
    #allocation6 [shape = 's32[1]{0}', space=sflag, size = 0x4, scoped, tag = 'scoped memory for tpu_custom_call.1']
    #allocation7 [shape = 'u8[8192]{0}', space=vmem, size = 0x2000, scoped, tag = 'input window, operand 3, single buffered']
    #allocation8 [shape = 'u8[32768]{0}', space=vmem, size = 0x8000, scoped, tag = 'input window, operand 10, single buffered']
    #allocation9 [shape = 's32[1]{0}', space=sflag, size = 0x4, scoped, tag = 'scoped memory for tpu_custom_call.1']
    #allocation10 [shape = 'u8[32768]{0}', space=vmem, size = 0x8000, scoped, tag = 'input window, operand 12, single buffered']
    #allocation11 [shape = 'u8[32768]{0}', space=vmem, size = 0x8000, scoped, tag = 'input window, operand 14, single buffered']
    #allocation12 [shape = 's32[1]{0}', space=sflag, size = 0x4, scoped, tag = 'scoped memory for tpu_custom_call.1']
    #allocation13 [shape = 'u8[8192]{0}', space=vmem, size = 0x2000, scoped, tag = 'output window, operand 0, single buffered']
    %25 = vsyncpa [#allocation3], 0
    %26 = vsyncpa [#allocation6], 0
    %27 = vsyncpa [#allocation9], 0
    %28 = vsyncpa [#allocation12], 0
    %29 = vsyncpa [#allocation4], 0
    // Predicated region
    $region2: #{tpu_custom_call.1} parent=1 // pred_check
      _
    $region3: #{tpu_custom_call.1} parent=1 // pred_check_branch
      %31 = sbr.rel (0) target = $region5
    $region4: #{tpu_custom_call.1} parent=1 // pred_region
      _
    $region5: #{tpu_custom_call.1} parent=1 // pred_fallthru
      _
    // Predicated region
    $region6: #{tpu_custom_call.1} parent=1 // pred_check
      _
    $region7: #{tpu_custom_call.1} parent=1 // pred_check_branch
      %33 = sbr.rel (0) target = $region9
    $region8: #{tpu_custom_call.1} parent=1 // pred_region
      %s35 = ssub.s32 256, 256
      %36 = vsyncadd [#allocation3], %s35
      %s37 = sshll.u32 [#allocation2], 4
      %s38 = int_to_ptr.vmem [resolvable:$true] %s37
      %43 = dma.hbm_to_vmem [thread:$0]  %s1, 256, %s38, [#allocation3], 128, 128, 8
    $region9: #{tpu_custom_call.1} parent=1 // pred_fallthru
      _
    // Predicated region
    $region10: #{tpu_custom_call.1} parent=1 // pred_check
      _
    $region11: #{tpu_custom_call.1} parent=1 // pred_check_branch
      %45 = sbr.rel (0) target = $region13
    $region12: #{tpu_custom_call.1} parent=1 // pred_region
      %s47 = ssub.s32 256, 256
      %48 = vsyncadd [#allocation6], %s47
      %s49 = sshll.u32 [#allocation5], 4
      %s50 = int_to_ptr.vmem [resolvable:$true] %s49
      %55 = dma.hbm_to_vmem [thread:$0]  %s2, 256, %s50, [#allocation6], 128, 128, 8
    $region13: #{tpu_custom_call.1} parent=1 // pred_fallthru
      _
    // Predicated region
    $region14: #{tpu_custom_call.1} parent=1 // pred_check
      _
    $region15: #{tpu_custom_call.1} parent=1 // pred_check_branch
      %57 = sbr.rel (0) target = $region17
    $region16: #{tpu_custom_call.1} parent=1 // pred_region
      %s59 = ssub.s32 256, 256
      %60 = vsyncadd [#allocation6], %s59
      %s61 = sshll.u32 [#allocation7], 4
      %s62 = int_to_ptr.vmem [resolvable:$true] %s61
      %67 = dma.hbm_to_vmem [thread:$0]  %s3, 256, %s62, [#allocation6], 128, 128, 8
    $region17: #{tpu_custom_call.1} parent=1 // pred_fallthru
      _
    // Predicated region
    $region18: #{tpu_custom_call.1} parent=1 // pred_check
      _
    $region19: #{tpu_custom_call.1} parent=1 // pred_check_branch
      %69 = sbr.rel (0) target = $region21
    $region20: #{tpu_custom_call.1} parent=1 // pred_region
      _
    $region21: #{tpu_custom_call.1} parent=1 // pred_fallthru
      _
    // Predicated region
    $region22: #{tpu_custom_call.1} parent=1 // pred_check
      _
    $region23: #{tpu_custom_call.1} parent=1 // pred_check_branch
      %71 = sbr.rel (0) target = $region25
    $region24: #{tpu_custom_call.1} parent=1 // pred_region
      _
    $region25: #{tpu_custom_call.1} parent=1 // pred_fallthru
      _
    // Predicated region
    $region26: #{tpu_custom_call.1} parent=1 // pred_check
      _
    $region27: #{tpu_custom_call.1} parent=1 // pred_check_branch
      %73 = sbr.rel (0) target = $region29
    $region28: #{tpu_custom_call.1} parent=1 // pred_region
      _
    $region29: #{tpu_custom_call.1} parent=1 // pred_fallthru
      _
    // Predicated region
    $region30: #{tpu_custom_call.1} parent=1 // pred_check
      _
    $region31: #{tpu_custom_call.1} parent=1 // pred_check_branch
      %75 = sbr.rel (0) target = $region33
    $region32: #{tpu_custom_call.1} parent=1 // pred_region
      _
    $region33: #{tpu_custom_call.1} parent=1 // pred_fallthru
      _
    // Predicated region
    $region34: #{tpu_custom_call.1} parent=1 // pred_check
      _
    $region35: #{tpu_custom_call.1} parent=1 // pred_check_branch
      %77 = sbr.rel (0) target = $region37
    $region36: #{tpu_custom_call.1} parent=1 // pred_region
      _
    $region37: #{tpu_custom_call.1} parent=1 // pred_fallthru
      _
    // Predicated region
    $region38: #{tpu_custom_call.1} parent=1 // pred_check
      _
    $region39: #{tpu_custom_call.1} parent=1 // pred_check_branch
      %79 = sbr.rel (0) target = $region41
    $region40: #{tpu_custom_call.1} parent=1 // pred_region
      _
    $region41: #{tpu_custom_call.1} parent=1 // pred_fallthru
      _
    // Predicated region
    $region42: #{tpu_custom_call.1} parent=1 // pred_check
      _
    $region43: #{tpu_custom_call.1} parent=1 // pred_check_branch
      %81 = sbr.rel (0) target = $region45
    $region44: #{tpu_custom_call.1} parent=1 // pred_region
      %s83 = ssub.s32 1024, 1024
      %84 = vsyncadd [#allocation9], %s83
      %s85 = sshll.u32 [#allocation8], 4
      %s86 = int_to_ptr.vmem [resolvable:$true] %s85
      %91 = dma.hbm_to_vmem [thread:$0]  %s10, 1024, %s86, [#allocation9], 128, 128, 8
    $region45: #{tpu_custom_call.1} parent=1 // pred_fallthru
      _
    // Predicated region
    $region46: #{tpu_custom_call.1} parent=1 // pred_check
      _
    $region47: #{tpu_custom_call.1} parent=1 // pred_check_branch
      %93 = sbr.rel (0) target = $region49
    $region48: #{tpu_custom_call.1} parent=1 // pred_region
      _
    $region49: #{tpu_custom_call.1} parent=1 // pred_fallthru
      _
    // Predicated region
    $region50: #{tpu_custom_call.1} parent=1 // pred_check
      _
    $region51: #{tpu_custom_call.1} parent=1 // pred_check_branch
      %95 = sbr.rel (0) target = $region53
    $region52: #{tpu_custom_call.1} parent=1 // pred_region
      %s97 = ssub.s32 1024, 1024
      %98 = vsyncadd [#allocation9], %s97
      %s99 = sshll.u32 [#allocation10], 4
      %s100 = int_to_ptr.vmem [resolvable:$true] %s99
      %105 = dma.hbm_to_vmem [thread:$0]  %s12, 1024, %s100, [#allocation9], 128, 128, 8
    $region53: #{tpu_custom_call.1} parent=1 // pred_fallthru
      _
    // Predicated region
    $region54: #{tpu_custom_call.1} parent=1 // pred_check
      _
    $region55: #{tpu_custom_call.1} parent=1 // pred_check_branch
      %107 = sbr.rel (0) target = $region57
    $region56: #{tpu_custom_call.1} parent=1 // pred_region
      _
    $region57: #{tpu_custom_call.1} parent=1 // pred_fallthru
      _
    // Predicated region
    $region58: #{tpu_custom_call.1} parent=1 // pred_check
      _
    $region59: #{tpu_custom_call.1} parent=1 // pred_check_branch
      %109 = sbr.rel (0) target = $region61
    $region60: #{tpu_custom_call.1} parent=1 // pred_region
      %s111 = ssub.s32 1024, 1024
      %112 = vsyncadd [#allocation12], %s111
      %s113 = sshll.u32 [#allocation11], 4
      %s114 = int_to_ptr.vmem [resolvable:$true] %s113
      %119 = dma.hbm_to_vmem [thread:$0]  %s14, 1024, %s114, [#allocation12], 128, 128, 8
    $region61: #{tpu_custom_call.1} parent=1 // pred_fallthru
      _
    // Predicated region
    $region62: #{tpu_custom_call.1} parent=1 // pred_check
      _
    $region63: #{tpu_custom_call.1} parent=1 // pred_check_branch
      %121 = sbr.rel (0) target = $region65
    $region64: #{tpu_custom_call.1} parent=1 // pred_region
      _
    $region65: #{tpu_custom_call.1} parent=1 // pred_fallthru
      _
    // Predicated region
    $region66: #{tpu_custom_call.1} parent=1 // pred_check
      _
    $region67: #{tpu_custom_call.1} parent=1 // pred_check_branch
      %123 = sbr.rel (0) target = $region69
    $region68: #{tpu_custom_call.1} parent=1 // pred_region
      _
    $region69: #{tpu_custom_call.1} parent=1 // pred_fallthru
      _
    // Predicated region
    $region70: #{tpu_custom_call.1} parent=1 // pred_check
      _
    $region71: #{tpu_custom_call.1} parent=1 // pred_check_branch
      %125 = sbr.rel (0) target = $region73
    $region72: #{tpu_custom_call.1} parent=1 // pred_region
      _
    $region73: #{tpu_custom_call.1} parent=1 // pred_fallthru
      _
    // Predicated region
    $region74: #{tpu_custom_call.1} parent=1 // pred_check
      _
    $region75: #{tpu_custom_call.1} parent=1 // pred_check_branch
      %127 = sbr.rel (0) target = $region77
    $region76: #{tpu_custom_call.1} parent=1 // pred_region
      _
    $region77: #{tpu_custom_call.1} parent=1 // pred_fallthru
      _
    // Predicated region
    $region78: #{tpu_custom_call.1} parent=1 // pred_check
      _
    $region79: #{tpu_custom_call.1} parent=1 // pred_check_branch
      %129 = sbr.rel (0) target = $region81
    $region80: #{tpu_custom_call.1} parent=1 // pred_region
      _
    $region81: #{tpu_custom_call.1} parent=1 // pred_fallthru
      _
    // Predicated region
    $region82: #{tpu_custom_call.1} parent=1 // pred_check
      _
    $region83: #{tpu_custom_call.1} parent=1 // pred_check_branch
      %131 = sbr.rel (0) target = $region85
    $region84: #{tpu_custom_call.1} parent=1 // pred_region
      %132 = dma.done [#allocation3], 256
    $region85: #{tpu_custom_call.1} parent=1 // pred_fallthru
      _
    // Predicated region
    $region86: #{tpu_custom_call.1} parent=1 // pred_check
      _
    $region87: #{tpu_custom_call.1} parent=1 // pred_check_branch
      %134 = sbr.rel (0) target = $region89
    $region88: #{tpu_custom_call.1} parent=1 // pred_region
      %135 = dma.done [#allocation6], 256
    $region89: #{tpu_custom_call.1} parent=1 // pred_fallthru
      _
    // Predicated region
    $region90: #{tpu_custom_call.1} parent=1 // pred_check
      _
    $region91: #{tpu_custom_call.1} parent=1 // pred_check_branch
      %137 = sbr.rel (0) target = $region93
    $region92: #{tpu_custom_call.1} parent=1 // pred_region
      %138 = dma.done [#allocation6], 256
    $region93: #{tpu_custom_call.1} parent=1 // pred_fallthru
      _
    // Predicated region
    $region94: #{tpu_custom_call.1} parent=1 // pred_check
      _
    $region95: #{tpu_custom_call.1} parent=1 // pred_check_branch
      %140 = sbr.rel (0) target = $region97
    $region96: #{tpu_custom_call.1} parent=1 // pred_region
      %141 = dma.done [#allocation9], 1024
    $region97: #{tpu_custom_call.1} parent=1 // pred_fallthru
      _
    // Predicated region
    $region98: #{tpu_custom_call.1} parent=1 // pred_check
      _
    $region99: #{tpu_custom_call.1} parent=1 // pred_check_branch
      %143 = sbr.rel (0) target = $region101
    $region100: #{tpu_custom_call.1} parent=1 // pred_region
      %144 = dma.done [#allocation9], 1024
    $region101: #{tpu_custom_call.1} parent=1 // pred_fallthru
      _
    // Predicated region
    $region102: #{tpu_custom_call.1} parent=1 // pred_check
      _
    $region103: #{tpu_custom_call.1} parent=1 // pred_check_branch
      %146 = sbr.rel (0) target = $region105
    $region104: #{tpu_custom_call.1} parent=1 // pred_region
      %147 = dma.done [#allocation12], 1024
    $region105: #{tpu_custom_call.1} parent=1 // pred_fallthru
      _
    %v148 = vld [vmem:[%s0] sm:$0xff]
    %v149 = vld [vmem:[%s0 + $0x8] sm:$0xff]
    %v150 = vld [vmem:[#allocation2] sm:$0xff]
    %v151 = vld [vmem:[#allocation2 + $0x8] sm:$0xff]
    %v152 = vld [vmem:[#allocation5] sm:$0xff]
    %v153 = vld [vmem:[#allocation5 + $0x8] sm:$0xff]
    %v154 = vld [vmem:[#allocation7] sm:$0xff]
    %v155 = vld [vmem:[#allocation7 + $0x8] sm:$0xff]
    %v156 = vld [vmem:[%s18] sm:$0x7]
    %v157 = vld [vmem:[%s19] sm:$0x7]
    %vm158 = vcmask 261120
    %v159 = vsel %vm158, %v148, 0.0
    %160 = vadd.xlane.f32.xlu0 %v159
    %v161 = vpop.xlane.xlu0 %160
    %v162 = vsel %vm158, %v149, 0.0
    %163 = vadd.xlane.f32.xlu0 %v162
    %v164 = vpop.xlane.xlu0 %163
    %v165 = vrcp.pop 32.0
    %v166 = vmul.f32 %v161, %v165
    %v167 = vmul.f32 %v164, %v165
    %v168 = vsub.f32 %v148, %v166
    %v169 = vsub.f32 %v149, %v167
    %v170 = vmul.f32 %v168, %v168
    %v171 = vmul.f32 %v169, %v169
    %v172 = vsel %vm158, %v170, 0.0
    %173 = vadd.xlane.f32.xlu0 %v172
    %v174 = vpop.xlane.xlu0 %173
    %v175 = vsel %vm158, %v171, 0.0
    %176 = vadd.xlane.f32.xlu0 %v175
    %v177 = vpop.xlane.xlu0 %176
    %v178 = vmul.f32 %v174, %v165
    %v179 = vmul.f32 %v177, %v165
    %v180 = vmul.f32 %v178, 1.032258
    %v181 = vmul.f32 %v179, 1.032258
    %v182 = vrsqrt.pop %v180
    %v183 = vmul.f32 %v180, %v182
    %vm184 = vcmp.eq.f32.partialorder %v180, inf
    %v185 = vsel %vm184, %v180, %v183
    %vm186 = vcmp.eq.f32.partialorder %v180, 0.0
    %v187 = vand.u32 %v180, 2147483648
    %v188 = vsel %vm186, %v187, %v185
    %v189 = vrsqrt.pop %v181
    %v190 = vmul.f32 %v181, %v189
    %vm191 = vcmp.eq.f32.partialorder %v181, inf
    %v192 = vsel %vm191, %v181, %v190
    %vm193 = vcmp.eq.f32.partialorder %v181, 0.0
    %v194 = vand.u32 %v181, 2147483648
    %v195 = vsel %vm193, %v194, %v192
    %v196 = vlaneseq
    %v197 = vshrl.u32 %v196, 7
    %v198 = vsub.s32 0, %v197
    %v199 = vrot.slane %v156, %v198
    %v200 = vmul.f32 %v199, %v168
    %v201 = vmul.f32 %v199, %v169
    %v202 = vadd.f32 %v188, 1e-06
    %v203 = vadd.f32 %v195, 1e-06
    %v204 = vrcp.pop %v202
    %v205 = vrcp.pop %v203
    %v206 = vmul.f32 %v200, %v204
    %v207 = vmul.f32 %v201, %v205
    %v208 = vlaneseq
    %v209 = vshrl.u32 %v208, 7
    %v210 = vsub.s32 0, %v209
    %v211 = vrot.slane %v157, %v210
    %v212 = vadd.f32 %v206, %v211
    %v213 = vadd.f32 %v207, %v211
    %v214 = vld [vmem:[%s4] sm:$0xff]
    %v215 = vld [vmem:[%s4 + $0x8] sm:$0xff]
    %v216 = vld [vmem:[%s4 + $0x10] sm:$0xff]
    %v217 = vld [vmem:[%s4 + $0x18] sm:$0xff]
    %v218 = vld [vmem:[%s5] sm:$0x1]
    %v220 = vlaneseq
    %v221 = vshrl.u32 %v220, 7
    %v222 = vsub.s32 0, %v221
    %v223 = vrot.slane %v218, %v222
    %v226 = vsel %vm158, %v212, 0
    %v229 = vsel %vm158, %v213, 0
    %231 = vmatprep.subr.mxu0 0.0
    %232 = vmatpush1.msra.mxu0 0.0
    %233 = vmatprep.subr.mxu0 0.0
    %234 = vmatpush1.msra.mxu0 0.0
    %235 = vmatprep.subr.mxu0 0.0
    %236 = vmatpush1.msra.mxu0 0.0
    %237 = vmatprep.subr.mxu0 0.0
    %238 = vmatpush1.msra.mxu0 0.0
    %239 = vmatprep.subr.mxu0 0.0
    %240 = vmatpush1.msra.mxu0 0.0
    %241 = vmatprep.subr.mxu0 0.0
    %242 = vmatpush1.msra.mxu0 0.0
    %243 = vmatprep.subr.mxu0 0.0
    %244 = vmatpush1.msra.mxu0 0.0
    %245 = vmatprep.subr.mxu0 0.0
    %246 = vmatpush1.msra.mxu0 0.0
    %247 = vmatprep.subr.mxu0 0.0
    %248 = vmatpush1.msra.mxu0 0.0
    %249 = vmatprep.subr.mxu0 0.0
    %250 = vmatpush1.msra.mxu0 0.0
    %251 = vmatprep.subr.mxu0 0.0
    %252 = vmatpush1.msra.mxu0 0.0
    %253 = vmatprep.subr.mxu0 0.0
    %254 = vmatpush1.msra.mxu0 0.0
    %255 = vmatprep.subr.mxu0 0.0
    %256 = vmatpush1.msra.mxu0 %v217
    %257 = vmatprep.subr.mxu0 0.0
    %258 = vmatpush1.msra.mxu0 %v216
    %259 = vmatprep.subr.mxu0 0.0
    %260 = vmatpush1.msra.mxu0 %v215
    %261 = vmatprep.subr.mxu0 0.0
    %262 = vmatpush1.msra.mxu0 %v214
    %263 = vmatprep.subr.mxu0 0.0
    %264 = vmatpush2.msra.mxu0 0.0
    %265 = vmatprep.subr.mxu0 0.0
    %266 = vmatpush2.msra.mxu0 0.0
    %267 = vmatprep.subr.mxu0 0.0
    %268 = vmatpush2.msra.mxu0 0.0
    %269 = vmatprep.subr.mxu0 0.0
    %270 = vmatpush2.msra.mxu0 0.0
    %271 = vmatprep.subr.mxu0 0.0
    %272 = vmatpush2.msra.mxu0 0.0
    %273 = vmatprep.subr.mxu0 0.0
    %274 = vmatpush2.msra.mxu0 0.0
    %275 = vmatprep.subr.mxu0 0.0
    %276 = vmatpush2.msra.mxu0 0.0
    %277 = vmatprep.subr.mxu0 0.0
    %278 = vmatpush2.msra.mxu0 0.0
    %279 = vmatprep.subr.mxu0 0.0
    %280 = vmatpush2.msra.mxu0 0.0
    %281 = vmatprep.subr.mxu0 0.0
    %282 = vmatpush2.msra.mxu0 0.0
    %283 = vmatprep.subr.mxu0 0.0
    %284 = vmatpush2.msra.mxu0 0.0
    %285 = vmatprep.subr.mxu0 0.0
    %286 = vmatpush2.msra.mxu0 0.0
    %287 = vmatprep.subr.mxu0 0.0
    %288 = vmatpush2.msra.mxu0 0.0
    %289 = vmatprep.subr.mxu0 0.0
    %290 = vmatpush2.msra.mxu0 0.0
    %291 = vmatprep.subr.mxu0 0.0
    %292 = vmatpush2.msra.mxu0 0.0
    %293 = vmatprep.subr.mxu0 0.0
    %294 = vmatpush2.msra.mxu0 0.0
    %295 = vmatprep.mubr.f32.mxu0 0.0
    %296 = vmatmul.mubr.f32.gmra.mxu0 %v226
    %v297 = vpop.f32.mrf.mxu0
    %v298 = vadd.f32 %v223, %v297
    %v299 = vpop.f32.mrf.mxu0
    %300 = vmatprep.mubr.f32.mxu0 0.0
    %301 = vmatmul.mubr.f32.gmra.mxu0 %v229
    %v302 = vpop.f32.mrf.mxu0
    %v303 = vadd.f32 %v223, %v302
    %v304 = vpop.f32.mrf.mxu0
    %305 = vdwg.mxu0
    %v306 = vld [vmem:[%s6] sm:$0xff]
    %v307 = vld [vmem:[%s6 + $0x8] sm:$0xff]
    %v308 = vld [vmem:[%s6 + $0x10] sm:$0xff]
    %v309 = vld [vmem:[%s6 + $0x18] sm:$0xff]
    %v310 = vld [vmem:[%s7] sm:$0x1]
    %313 = vrot.lane.b32.xlu0 %v298, 96
    %v314 = vpop.permute.xlu0 %313
    %315 = vrot.lane.b32.xlu0 %v303, 96
    %v316 = vpop.permute.xlu0 %315
    %vm317 = vcmask 64512
    %v318 = vsel %vm317, %v298, 0
    %v320 = vsel %vm317, %v303, 0
    %v322 = vsel %vm317, %v314, 0
    %v324 = vsel %vm317, %v316, 0
    %326 = vmatprep.subr.mxu0 0.0
    %327 = vmatpush1.xpose.msra.mxu0 0.0
    %328 = vmatprep.subr.mxu0 0.0
    %329 = vmatpush1.xpose.msra.mxu0 0.0
    %330 = vmatprep.subr.mxu0 0.0
    %331 = vmatpush1.xpose.msra.mxu0 0.0
    %332 = vmatprep.subr.mxu0 0.0
    %333 = vmatpush1.xpose.msra.mxu0 0.0
    %334 = vmatprep.subr.mxu0 0.0
    %335 = vmatpush1.xpose.msra.mxu0 0.0
    %336 = vmatprep.subr.mxu0 0.0
    %337 = vmatpush1.xpose.msra.mxu0 0.0
    %338 = vmatprep.subr.mxu0 0.0
    %339 = vmatpush1.xpose.msra.mxu0 0.0
    %340 = vmatprep.subr.mxu0 0.0
    %341 = vmatpush1.xpose.msra.mxu0 0.0
    %342 = vmatprep.subr.mxu0 0.0
    %343 = vmatpush1.xpose.msra.mxu0 0.0
    %344 = vmatprep.subr.mxu0 0.0
    %345 = vmatpush1.xpose.msra.mxu0 0.0
    %346 = vmatprep.subr.mxu0 0.0
    %347 = vmatpush1.xpose.msra.mxu0 0.0
    %348 = vmatprep.subr.mxu0 0.0
    %349 = vmatpush1.xpose.msra.mxu0 0.0
    %350 = vmatprep.subr.mxu0 0.0
    %351 = vmatpush1.xpose.msra.mxu0 0.0
    %352 = vmatprep.subr.mxu0 0.0
    %353 = vmatpush1.xpose.msra.mxu0 0.0
    %354 = vmatprep.subr.mxu0 0.0
    %355 = vmatpush1.xpose.msra.mxu0 %v324
    %356 = vmatprep.subr.mxu0 0.0
    %357 = vmatpush1.xpose.msra.mxu0 %v322
    %358 = vmatprep.subr.mxu0 0.0
    %359 = vmatpush2.xpose.msra.mxu0 0.0
    %360 = vmatprep.subr.mxu0 0.0
    %361 = vmatpush2.xpose.msra.mxu0 0.0
    %362 = vmatprep.subr.mxu0 0.0
    %363 = vmatpush2.xpose.msra.mxu0 0.0
    %364 = vmatprep.subr.mxu0 0.0
    %365 = vmatpush2.xpose.msra.mxu0 0.0
    %366 = vmatprep.subr.mxu0 0.0
    %367 = vmatpush2.xpose.msra.mxu0 0.0
    %368 = vmatprep.subr.mxu0 0.0
    %369 = vmatpush2.xpose.msra.mxu0 0.0
    %370 = vmatprep.subr.mxu0 0.0
    %371 = vmatpush2.xpose.msra.mxu0 0.0
    %372 = vmatprep.subr.mxu0 0.0
    %373 = vmatpush2.xpose.msra.mxu0 0.0
    %374 = vmatprep.subr.mxu0 0.0
    %375 = vmatpush2.xpose.msra.mxu0 0.0
    %376 = vmatprep.subr.mxu0 0.0
    %377 = vmatpush2.xpose.msra.mxu0 0.0
    %378 = vmatprep.subr.mxu0 0.0
    %379 = vmatpush2.xpose.msra.mxu0 0.0
    %380 = vmatprep.subr.mxu0 0.0
    %381 = vmatpush2.xpose.msra.mxu0 0.0
    %382 = vmatprep.subr.mxu0 0.0
    %383 = vmatpush2.xpose.msra.mxu0 0.0
    %384 = vmatprep.subr.mxu0 0.0
    %385 = vmatpush2.xpose.msra.mxu0 0.0
    %386 = vmatprep.subr.mxu0 0.0
    %387 = vmatpush2.xpose.msra.mxu0 0.0
    %388 = vmatprep.subr.mxu0 0.0
    %389 = vmatpush2.xpose.msra.mxu0 0.0
    %390 = vmatprep.mubr.f32.mxu0 0.0
    %391 = vmatmul.mubr.f32.gmra.mxu0 %v318
    %v392 = vpop.f32.mrf.mxu0
    %v393 = vadd.f32 %v152, %v392
    %v394 = vpop.f32.mrf.mxu0
    %395 = vmatprep.mubr.f32.mxu0 0.0
    %396 = vmatmul.mubr.f32.gmra.mxu0 %v320
    %v397 = vpop.f32.mrf.mxu0
    %v398 = vadd.f32 %v153, %v397
    %v399 = vpop.f32.mrf.mxu0
    %400 = vdwg.mxu0
    %vm401 = vcmask 130048
    %v402 = vsel %vm401, %v393, -inf
    %403 = vmax.xlane.f32.xlu0 %v402
    %v404 = vpop.xlane.xlu0 %403
    %v405 = vsel %vm401, %v398, -inf
    %406 = vmax.xlane.f32.xlu0 %v405
    %v407 = vpop.xlane.xlu0 %406
    %v408 = vsub.f32 %v393, %v404
    %v409 = vsub.f32 %v398, %v407
    %v410 = vmul.f32 %v408, 1.442695
    %v411 = vpow.pop %v410
    %v412 = vmul.f32 %v409, 1.442695
    %v413 = vpow.pop %v412
    %v414 = vsel %vm401, %v411, 0.0
    %415 = vadd.xlane.f32.xlu0 %v414
    %v416 = vpop.xlane.xlu0 %415
    %v417 = vsel %vm401, %v413, 0.0
    %418 = vadd.xlane.f32.xlu0 %v417
    %v419 = vpop.xlane.xlu0 %418
    %v420 = vrcp.pop %v416
    %v421 = vrcp.pop %v419
    %v422 = vmul.f32 %v411, %v420
    %v423 = vmul.f32 %v413, %v421
    %424 = vrot.lane.b32.xlu0 %v298, 64
    %v425 = vpop.permute.xlu0 %424
    %426 = vrot.lane.b32.xlu0 %v303, 64
    %v427 = vpop.permute.xlu0 %426
    %v431 = vsel %vm401, %v422, 0
    %v434 = vsel %vm401, %v423, 0
    %436 = vmatprep.subr.mxu0 0.0
    %437 = vmatpush1.msra.mxu0 0.0
    %438 = vmatprep.subr.mxu0 0.0
    %439 = vmatpush1.msra.mxu0 0.0
    %440 = vmatprep.subr.mxu0 0.0
    %441 = vmatpush1.msra.mxu0 0.0
    %442 = vmatprep.subr.mxu0 0.0
    %443 = vmatpush1.msra.mxu0 0.0
    %444 = vmatprep.subr.mxu0 0.0
    %445 = vmatpush1.msra.mxu0 0.0
    %446 = vmatprep.subr.mxu0 0.0
    %447 = vmatpush1.msra.mxu0 0.0
    %448 = vmatprep.subr.mxu0 0.0
    %449 = vmatpush1.msra.mxu0 0.0
    %450 = vmatprep.subr.mxu0 0.0
    %451 = vmatpush1.msra.mxu0 0.0
    %452 = vmatprep.subr.mxu0 0.0
    %453 = vmatpush1.msra.mxu0 0.0
    %454 = vmatprep.subr.mxu0 0.0
    %455 = vmatpush1.msra.mxu0 0.0
    %456 = vmatprep.subr.mxu0 0.0
    %457 = vmatpush1.msra.mxu0 0.0
    %458 = vmatprep.subr.mxu0 0.0
    %459 = vmatpush1.msra.mxu0 0.0
    %460 = vmatprep.subr.mxu0 0.0
    %461 = vmatpush1.msra.mxu0 0.0
    %462 = vmatprep.subr.mxu0 0.0
    %463 = vmatpush1.msra.mxu0 0.0
    %464 = vmatprep.subr.mxu0 0.0
    %465 = vmatpush1.msra.mxu0 %v427
    %466 = vmatprep.subr.mxu0 0.0
    %467 = vmatpush1.msra.mxu0 %v425
    %468 = vmatprep.subr.mxu0 0.0
    %469 = vmatpush2.msra.mxu0 0.0
    %470 = vmatprep.subr.mxu0 0.0
    %471 = vmatpush2.msra.mxu0 0.0
    %472 = vmatprep.subr.mxu0 0.0
    %473 = vmatpush2.msra.mxu0 0.0
    %474 = vmatprep.subr.mxu0 0.0
    %475 = vmatpush2.msra.mxu0 0.0
    %476 = vmatprep.subr.mxu0 0.0
    %477 = vmatpush2.msra.mxu0 0.0
    %478 = vmatprep.subr.mxu0 0.0
    %479 = vmatpush2.msra.mxu0 0.0
    %480 = vmatprep.subr.mxu0 0.0
    %481 = vmatpush2.msra.mxu0 0.0
    %482 = vmatprep.subr.mxu0 0.0
    %483 = vmatpush2.msra.mxu0 0.0
    %484 = vmatprep.subr.mxu0 0.0
    %485 = vmatpush2.msra.mxu0 0.0
    %486 = vmatprep.subr.mxu0 0.0
    %487 = vmatpush2.msra.mxu0 0.0
    %488 = vmatprep.subr.mxu0 0.0
    %489 = vmatpush2.msra.mxu0 0.0
    %490 = vmatprep.subr.mxu0 0.0
    %491 = vmatpush2.msra.mxu0 0.0
    %492 = vmatprep.subr.mxu0 0.0
    %493 = vmatpush2.msra.mxu0 0.0
    %494 = vmatprep.subr.mxu0 0.0
    %495 = vmatpush2.msra.mxu0 0.0
    %496 = vmatprep.subr.mxu0 0.0
    %497 = vmatpush2.msra.mxu0 0.0
    %498 = vmatprep.subr.mxu0 0.0
    %499 = vmatpush2.msra.mxu0 0.0
    %500 = vmatprep.mubr.f32.mxu0 0.0
    %501 = vmatmul.mubr.f32.gmra.mxu0 %v431
    %v502 = vpop.f32.mrf.mxu0
    %v503 = vadd.f32 0.0, %v502
    %v504 = vpop.f32.mrf.mxu0
    %505 = vmatprep.mubr.f32.mxu0 0.0
    %506 = vmatmul.mubr.f32.gmra.mxu0 %v434
    %v507 = vpop.f32.mrf.mxu0
    %v508 = vadd.f32 0.0, %v507
    %v509 = vpop.f32.mrf.mxu0
    %510 = vdwg.mxu0
    %511 = vrot.lane.b32.xlu0 %v298, 120
    %v512 = vpop.permute.xlu0 %511
    %513 = vrot.lane.b32.xlu0 %v303, 120
    %v514 = vpop.permute.xlu0 %513
    %515 = vrot.lane.b32.xlu0 %v298, 88
    %v516 = vpop.permute.xlu0 %515
    %517 = vrot.lane.b32.xlu0 %v303, 88
    %v518 = vpop.permute.xlu0 %517
    %v519 = vsel %vm317, %v512, 0
    %v521 = vsel %vm317, %v514, 0
    %v523 = vsel %vm317, %v516, 0
    %v525 = vsel %vm317, %v518, 0
    %527 = vmatprep.subr.mxu0 0.0
    %528 = vmatpush1.xpose.msra.mxu0 0.0
    %529 = vmatprep.subr.mxu0 0.0
    %530 = vmatpush1.xpose.msra.mxu0 0.0
    %531 = vmatprep.subr.mxu0 0.0
    %532 = vmatpush1.xpose.msra.mxu0 0.0
    %533 = vmatprep.subr.mxu0 0.0
    %534 = vmatpush1.xpose.msra.mxu0 0.0
    %535 = vmatprep.subr.mxu0 0.0
    %536 = vmatpush1.xpose.msra.mxu0 0.0
    %537 = vmatprep.subr.mxu0 0.0
    %538 = vmatpush1.xpose.msra.mxu0 0.0
    %539 = vmatprep.subr.mxu0 0.0
    %540 = vmatpush1.xpose.msra.mxu0 0.0
    %541 = vmatprep.subr.mxu0 0.0
    %542 = vmatpush1.xpose.msra.mxu0 0.0
    %543 = vmatprep.subr.mxu0 0.0
    %544 = vmatpush1.xpose.msra.mxu0 0.0
    %545 = vmatprep.subr.mxu0 0.0
    %546 = vmatpush1.xpose.msra.mxu0 0.0
    %547 = vmatprep.subr.mxu0 0.0
    %548 = vmatpush1.xpose.msra.mxu0 0.0
    %549 = vmatprep.subr.mxu0 0.0
    %550 = vmatpush1.xpose.msra.mxu0 0.0
    %551 = vmatprep.subr.mxu0 0.0
    %552 = vmatpush1.xpose.msra.mxu0 0.0
    %553 = vmatprep.subr.mxu0 0.0
    %554 = vmatpush1.xpose.msra.mxu0 0.0
    %555 = vmatprep.subr.mxu0 0.0
    %556 = vmatpush1.xpose.msra.mxu0 %v525
    %557 = vmatprep.subr.mxu0 0.0
    %558 = vmatpush1.xpose.msra.mxu0 %v523
    %559 = vmatprep.subr.mxu0 0.0
    %560 = vmatpush2.xpose.msra.mxu0 0.0
    %561 = vmatprep.subr.mxu0 0.0
    %562 = vmatpush2.xpose.msra.mxu0 0.0
    %563 = vmatprep.subr.mxu0 0.0
    %564 = vmatpush2.xpose.msra.mxu0 0.0
    %565 = vmatprep.subr.mxu0 0.0
    %566 = vmatpush2.xpose.msra.mxu0 0.0
    %567 = vmatprep.subr.mxu0 0.0
    %568 = vmatpush2.xpose.msra.mxu0 0.0
    %569 = vmatprep.subr.mxu0 0.0
    %570 = vmatpush2.xpose.msra.mxu0 0.0
    %571 = vmatprep.subr.mxu0 0.0
    %572 = vmatpush2.xpose.msra.mxu0 0.0
    %573 = vmatprep.subr.mxu0 0.0
    %574 = vmatpush2.xpose.msra.mxu0 0.0
    %575 = vmatprep.subr.mxu0 0.0
    %576 = vmatpush2.xpose.msra.mxu0 0.0
    %577 = vmatprep.subr.mxu0 0.0
    %578 = vmatpush2.xpose.msra.mxu0 0.0
    %579 = vmatprep.subr.mxu0 0.0
    %580 = vmatpush2.xpose.msra.mxu0 0.0
    %581 = vmatprep.subr.mxu0 0.0
    %582 = vmatpush2.xpose.msra.mxu0 0.0
    %583 = vmatprep.subr.mxu0 0.0
    %584 = vmatpush2.xpose.msra.mxu0 0.0
    %585 = vmatprep.subr.mxu0 0.0
    %586 = vmatpush2.xpose.msra.mxu0 0.0
    %587 = vmatprep.subr.mxu0 0.0
    %588 = vmatpush2.xpose.msra.mxu0 0.0
    %589 = vmatprep.subr.mxu0 0.0
    %590 = vmatpush2.xpose.msra.mxu0 0.0
    %591 = vmatprep.mubr.f32.mxu0 0.0
    %592 = vmatmul.mubr.f32.gmra.mxu0 %v519
    %v593 = vpop.f32.mrf.mxu0
    %v594 = vadd.f32 %v152, %v593
    %v595 = vpop.f32.mrf.mxu0
    %596 = vmatprep.mubr.f32.mxu0 0.0
    %597 = vmatmul.mubr.f32.gmra.mxu0 %v521
    %v598 = vpop.f32.mrf.mxu0
    %v599 = vadd.f32 %v153, %v598
    %v600 = vpop.f32.mrf.mxu0
    %601 = vdwg.mxu0
    %v602 = vsel %vm401, %v594, -inf
    %603 = vmax.xlane.f32.xlu0 %v602
    %v604 = vpop.xlane.xlu0 %603
    %v605 = vsel %vm401, %v599, -inf
    %606 = vmax.xlane.f32.xlu0 %v605
    %v607 = vpop.xlane.xlu0 %606
    %v608 = vsub.f32 %v594, %v604
    %v609 = vsub.f32 %v599, %v607
    %v610 = vmul.f32 %v608, 1.442695
    %v611 = vpow.pop %v610
    %v612 = vmul.f32 %v609, 1.442695
    %v613 = vpow.pop %v612
    %v614 = vsel %vm401, %v611, 0.0
    %615 = vadd.xlane.f32.xlu0 %v614
    %v616 = vpop.xlane.xlu0 %615
    %v617 = vsel %vm401, %v613, 0.0
    %618 = vadd.xlane.f32.xlu0 %v617
    %v619 = vpop.xlane.xlu0 %618
    %v620 = vrcp.pop %v616
    %v621 = vrcp.pop %v619
    %v622 = vmul.f32 %v611, %v620
    %v623 = vmul.f32 %v613, %v621
    %624 = vrot.lane.b32.xlu0 %v298, 56
    %v625 = vpop.permute.xlu0 %624
    %626 = vrot.lane.b32.xlu0 %v303, 56
    %v627 = vpop.permute.xlu0 %626
    %v631 = vsel %vm401, %v622, 0
    %v634 = vsel %vm401, %v623, 0
    %636 = vmatprep.subr.mxu0 0.0
    %637 = vmatpush1.msra.mxu0 0.0
    %638 = vmatprep.subr.mxu0 0.0
    %639 = vmatpush1.msra.mxu0 0.0
    %640 = vmatprep.subr.mxu0 0.0
    %641 = vmatpush1.msra.mxu0 0.0
    %642 = vmatprep.subr.mxu0 0.0
    %643 = vmatpush1.msra.mxu0 0.0
    %644 = vmatprep.subr.mxu0 0.0
    %645 = vmatpush1.msra.mxu0 0.0
    %646 = vmatprep.subr.mxu0 0.0
    %647 = vmatpush1.msra.mxu0 0.0
    %648 = vmatprep.subr.mxu0 0.0
    %649 = vmatpush1.msra.mxu0 0.0
    %650 = vmatprep.subr.mxu0 0.0
    %651 = vmatpush1.msra.mxu0 0.0
    %652 = vmatprep.subr.mxu0 0.0
    %653 = vmatpush1.msra.mxu0 0.0
    %654 = vmatprep.subr.mxu0 0.0
    %655 = vmatpush1.msra.mxu0 0.0
    %656 = vmatprep.subr.mxu0 0.0
    %657 = vmatpush1.msra.mxu0 0.0
    %658 = vmatprep.subr.mxu0 0.0
    %659 = vmatpush1.msra.mxu0 0.0
    %660 = vmatprep.subr.mxu0 0.0
    %661 = vmatpush1.msra.mxu0 0.0
    %662 = vmatprep.subr.mxu0 0.0
    %663 = vmatpush1.msra.mxu0 0.0
    %664 = vmatprep.subr.mxu0 0.0
    %665 = vmatpush1.msra.mxu0 %v627
    %666 = vmatprep.subr.mxu0 0.0
    %667 = vmatpush1.msra.mxu0 %v625
    %668 = vmatprep.subr.mxu0 0.0
    %669 = vmatpush2.msra.mxu0 0.0
    %670 = vmatprep.subr.mxu0 0.0
    %671 = vmatpush2.msra.mxu0 0.0
    %672 = vmatprep.subr.mxu0 0.0
    %673 = vmatpush2.msra.mxu0 0.0
    %674 = vmatprep.subr.mxu0 0.0
    %675 = vmatpush2.msra.mxu0 0.0
    %676 = vmatprep.subr.mxu0 0.0
    %677 = vmatpush2.msra.mxu0 0.0
    %678 = vmatprep.subr.mxu0 0.0
    %679 = vmatpush2.msra.mxu0 0.0
    %680 = vmatprep.subr.mxu0 0.0
    %681 = vmatpush2.msra.mxu0 0.0
    %682 = vmatprep.subr.mxu0 0.0
    %683 = vmatpush2.msra.mxu0 0.0
    %684 = vmatprep.subr.mxu0 0.0
    %685 = vmatpush2.msra.mxu0 0.0
    %686 = vmatprep.subr.mxu0 0.0
    %687 = vmatpush2.msra.mxu0 0.0
    %688 = vmatprep.subr.mxu0 0.0
    %689 = vmatpush2.msra.mxu0 0.0
    %690 = vmatprep.subr.mxu0 0.0
    %691 = vmatpush2.msra.mxu0 0.0
    %692 = vmatprep.subr.mxu0 0.0
    %693 = vmatpush2.msra.mxu0 0.0
    %694 = vmatprep.subr.mxu0 0.0
    %695 = vmatpush2.msra.mxu0 0.0
    %696 = vmatprep.subr.mxu0 0.0
    %697 = vmatpush2.msra.mxu0 0.0
    %698 = vmatprep.subr.mxu0 0.0
    %699 = vmatpush2.msra.mxu0 0.0
    %700 = vmatprep.mubr.f32.mxu0 0.0
    %701 = vmatmul.mubr.f32.gmra.mxu0 %v631
    %v702 = vpop.f32.mrf.mxu0
    %v703 = vadd.f32 0.0, %v702
    %v704 = vpop.f32.mrf.mxu0
    %705 = vmatprep.mubr.f32.mxu0 0.0
    %706 = vmatmul.mubr.f32.gmra.mxu0 %v634
    %v707 = vpop.f32.mrf.mxu0
    %v708 = vadd.f32 0.0, %v707
    %v709 = vpop.f32.mrf.mxu0
    %710 = vdwg.mxu0
    %711 = vrot.lane.b32.xlu0 %v298, 112
    %v712 = vpop.permute.xlu0 %711
    %713 = vrot.lane.b32.xlu0 %v303, 112
    %v714 = vpop.permute.xlu0 %713
    %715 = vrot.lane.b32.xlu0 %v298, 80
    %v716 = vpop.permute.xlu0 %715
    %717 = vrot.lane.b32.xlu0 %v303, 80
    %v718 = vpop.permute.xlu0 %717
    %v719 = vsel %vm317, %v712, 0
    %v721 = vsel %vm317, %v714, 0
    %v723 = vsel %vm317, %v716, 0
    %v725 = vsel %vm317, %v718, 0
    %727 = vmatprep.subr.mxu0 0.0
    %728 = vmatpush1.xpose.msra.mxu0 0.0
    %729 = vmatprep.subr.mxu0 0.0
    %730 = vmatpush1.xpose.msra.mxu0 0.0
    %731 = vmatprep.subr.mxu0 0.0
    %732 = vmatpush1.xpose.msra.mxu0 0.0
    %733 = vmatprep.subr.mxu0 0.0
    %734 = vmatpush1.xpose.msra.mxu0 0.0
    %735 = vmatprep.subr.mxu0 0.0
    %736 = vmatpush1.xpose.msra.mxu0 0.0
    %737 = vmatprep.subr.mxu0 0.0
    %738 = vmatpush1.xpose.msra.mxu0 0.0
    %739 = vmatprep.subr.mxu0 0.0
    %740 = vmatpush1.xpose.msra.mxu0 0.0
    %741 = vmatprep.subr.mxu0 0.0
    %742 = vmatpush1.xpose.msra.mxu0 0.0
    %743 = vmatprep.subr.mxu0 0.0
    %744 = vmatpush1.xpose.msra.mxu0 0.0
    %745 = vmatprep.subr.mxu0 0.0
    %746 = vmatpush1.xpose.msra.mxu0 0.0
    %747 = vmatprep.subr.mxu0 0.0
    %748 = vmatpush1.xpose.msra.mxu0 0.0
    %749 = vmatprep.subr.mxu0 0.0
    %750 = vmatpush1.xpose.msra.mxu0 0.0
    %751 = vmatprep.subr.mxu0 0.0
    %752 = vmatpush1.xpose.msra.mxu0 0.0
    %753 = vmatprep.subr.mxu0 0.0
    %754 = vmatpush1.xpose.msra.mxu0 0.0
    %755 = vmatprep.subr.mxu0 0.0
    %756 = vmatpush1.xpose.msra.mxu0 %v725
    %757 = vmatprep.subr.mxu0 0.0
    %758 = vmatpush1.xpose.msra.mxu0 %v723
    %759 = vmatprep.subr.mxu0 0.0
    %760 = vmatpush2.xpose.msra.mxu0 0.0
    %761 = vmatprep.subr.mxu0 0.0
    %762 = vmatpush2.xpose.msra.mxu0 0.0
    %763 = vmatprep.subr.mxu0 0.0
    %764 = vmatpush2.xpose.msra.mxu0 0.0
    %765 = vmatprep.subr.mxu0 0.0
    %766 = vmatpush2.xpose.msra.mxu0 0.0
    %767 = vmatprep.subr.mxu0 0.0
    %768 = vmatpush2.xpose.msra.mxu0 0.0
    %769 = vmatprep.subr.mxu0 0.0
    %770 = vmatpush2.xpose.msra.mxu0 0.0
    %771 = vmatprep.subr.mxu0 0.0
    %772 = vmatpush2.xpose.msra.mxu0 0.0
    %773 = vmatprep.subr.mxu0 0.0
    %774 = vmatpush2.xpose.msra.mxu0 0.0
    %775 = vmatprep.subr.mxu0 0.0
    %776 = vmatpush2.xpose.msra.mxu0 0.0
    %777 = vmatprep.subr.mxu0 0.0
    %778 = vmatpush2.xpose.msra.mxu0 0.0
    %779 = vmatprep.subr.mxu0 0.0
    %780 = vmatpush2.xpose.msra.mxu0 0.0
    %781 = vmatprep.subr.mxu0 0.0
    %782 = vmatpush2.xpose.msra.mxu0 0.0
    %783 = vmatprep.subr.mxu0 0.0
    %784 = vmatpush2.xpose.msra.mxu0 0.0
    %785 = vmatprep.subr.mxu0 0.0
    %786 = vmatpush2.xpose.msra.mxu0 0.0
    %787 = vmatprep.subr.mxu0 0.0
    %788 = vmatpush2.xpose.msra.mxu0 0.0
    %789 = vmatprep.subr.mxu0 0.0
    %790 = vmatpush2.xpose.msra.mxu0 0.0
    %791 = vmatprep.mubr.f32.mxu0 0.0
    %792 = vmatmul.mubr.f32.gmra.mxu0 %v719
    %v793 = vpop.f32.mrf.mxu0
    %v794 = vadd.f32 %v152, %v793
    %v795 = vpop.f32.mrf.mxu0
    %796 = vmatprep.mubr.f32.mxu0 0.0
    %797 = vmatmul.mubr.f32.gmra.mxu0 %v721
    %v798 = vpop.f32.mrf.mxu0
    %v799 = vadd.f32 %v153, %v798
    %v800 = vpop.f32.mrf.mxu0
    %801 = vdwg.mxu0
    %v802 = vsel %vm401, %v794, -inf
    %803 = vmax.xlane.f32.xlu0 %v802
    %v804 = vpop.xlane.xlu0 %803
    %v805 = vsel %vm401, %v799, -inf
    %806 = vmax.xlane.f32.xlu0 %v805
    %v807 = vpop.xlane.xlu0 %806
    %v808 = vsub.f32 %v794, %v804
    %v809 = vsub.f32 %v799, %v807
    %v810 = vmul.f32 %v808, 1.442695
    %v811 = vpow.pop %v810
    %v812 = vmul.f32 %v809, 1.442695
    %v813 = vpow.pop %v812
    %v814 = vsel %vm401, %v811, 0.0
    %815 = vadd.xlane.f32.xlu0 %v814
    %v816 = vpop.xlane.xlu0 %815
    %v817 = vsel %vm401, %v813, 0.0
    %818 = vadd.xlane.f32.xlu0 %v817
    %v819 = vpop.xlane.xlu0 %818
    %v820 = vrcp.pop %v816
    %v821 = vrcp.pop %v819
    %v822 = vmul.f32 %v811, %v820
    %v823 = vmul.f32 %v813, %v821
    %824 = vrot.lane.b32.xlu0 %v298, 48
    %v825 = vpop.permute.xlu0 %824
    %826 = vrot.lane.b32.xlu0 %v303, 48
    %v827 = vpop.permute.xlu0 %826
    %v831 = vsel %vm401, %v822, 0
    %v834 = vsel %vm401, %v823, 0
    %836 = vmatprep.subr.mxu0 0.0
    %837 = vmatpush1.msra.mxu0 0.0
    %838 = vmatprep.subr.mxu0 0.0
    %839 = vmatpush1.msra.mxu0 0.0
    %840 = vmatprep.subr.mxu0 0.0
    %841 = vmatpush1.msra.mxu0 0.0
    %842 = vmatprep.subr.mxu0 0.0
    %843 = vmatpush1.msra.mxu0 0.0
    %844 = vmatprep.subr.mxu0 0.0
    %845 = vmatpush1.msra.mxu0 0.0
    %846 = vmatprep.subr.mxu0 0.0
    %847 = vmatpush1.msra.mxu0 0.0
    %848 = vmatprep.subr.mxu0 0.0
    %849 = vmatpush1.msra.mxu0 0.0
    %850 = vmatprep.subr.mxu0 0.0
    %851 = vmatpush1.msra.mxu0 0.0
    %852 = vmatprep.subr.mxu0 0.0
    %853 = vmatpush1.msra.mxu0 0.0
    %854 = vmatprep.subr.mxu0 0.0
    %855 = vmatpush1.msra.mxu0 0.0
    %856 = vmatprep.subr.mxu0 0.0
    %857 = vmatpush1.msra.mxu0 0.0
    %858 = vmatprep.subr.mxu0 0.0
    %859 = vmatpush1.msra.mxu0 0.0
    %860 = vmatprep.subr.mxu0 0.0
    %861 = vmatpush1.msra.mxu0 0.0
    %862 = vmatprep.subr.mxu0 0.0
    %863 = vmatpush1.msra.mxu0 0.0
    %864 = vmatprep.subr.mxu0 0.0
    %865 = vmatpush1.msra.mxu0 %v827
    %866 = vmatprep.subr.mxu0 0.0
    %867 = vmatpush1.msra.mxu0 %v825
    %868 = vmatprep.subr.mxu0 0.0
    %869 = vmatpush2.msra.mxu0 0.0
    %870 = vmatprep.subr.mxu0 0.0
    %871 = vmatpush2.msra.mxu0 0.0
    %872 = vmatprep.subr.mxu0 0.0
    %873 = vmatpush2.msra.mxu0 0.0
    %874 = vmatprep.subr.mxu0 0.0
    %875 = vmatpush2.msra.mxu0 0.0
    %876 = vmatprep.subr.mxu0 0.0
    %877 = vmatpush2.msra.mxu0 0.0
    %878 = vmatprep.subr.mxu0 0.0
    %879 = vmatpush2.msra.mxu0 0.0
    %880 = vmatprep.subr.mxu0 0.0
    %881 = vmatpush2.msra.mxu0 0.0
    %882 = vmatprep.subr.mxu0 0.0
    %883 = vmatpush2.msra.mxu0 0.0
    %884 = vmatprep.subr.mxu0 0.0
    %885 = vmatpush2.msra.mxu0 0.0
    %886 = vmatprep.subr.mxu0 0.0
    %887 = vmatpush2.msra.mxu0 0.0
    %888 = vmatprep.subr.mxu0 0.0
    %889 = vmatpush2.msra.mxu0 0.0
    %890 = vmatprep.subr.mxu0 0.0
    %891 = vmatpush2.msra.mxu0 0.0
    %892 = vmatprep.subr.mxu0 0.0
    %893 = vmatpush2.msra.mxu0 0.0
    %894 = vmatprep.subr.mxu0 0.0
    %895 = vmatpush2.msra.mxu0 0.0
    %896 = vmatprep.subr.mxu0 0.0
    %897 = vmatpush2.msra.mxu0 0.0
    %898 = vmatprep.subr.mxu0 0.0
    %899 = vmatpush2.msra.mxu0 0.0
    %900 = vmatprep.mubr.f32.mxu0 0.0
    %901 = vmatmul.mubr.f32.gmra.mxu0 %v831
    %v902 = vpop.f32.mrf.mxu0
    %v903 = vadd.f32 0.0, %v902
    %v904 = vpop.f32.mrf.mxu0
    %905 = vmatprep.mubr.f32.mxu0 0.0
    %906 = vmatmul.mubr.f32.gmra.mxu0 %v834
    %v907 = vpop.f32.mrf.mxu0
    %v908 = vadd.f32 0.0, %v907
    %v909 = vpop.f32.mrf.mxu0
    %910 = vdwg.mxu0
    %911 = vrot.lane.b32.xlu0 %v298, 104
    %v912 = vpop.permute.xlu0 %911
    %913 = vrot.lane.b32.xlu0 %v303, 104
    %v914 = vpop.permute.xlu0 %913
    %915 = vrot.lane.b32.xlu0 %v298, 72
    %v916 = vpop.permute.xlu0 %915
    %917 = vrot.lane.b32.xlu0 %v303, 72
    %v918 = vpop.permute.xlu0 %917
    %v919 = vsel %vm317, %v912, 0
    %v921 = vsel %vm317, %v914, 0
    %v923 = vsel %vm317, %v916, 0
    %v925 = vsel %vm317, %v918, 0
    %927 = vmatprep.subr.mxu0 0.0
    %928 = vmatpush1.xpose.msra.mxu0 0.0
    %929 = vmatprep.subr.mxu0 0.0
    %930 = vmatpush1.xpose.msra.mxu0 0.0
    %931 = vmatprep.subr.mxu0 0.0
    %932 = vmatpush1.xpose.msra.mxu0 0.0
    %933 = vmatprep.subr.mxu0 0.0
    %934 = vmatpush1.xpose.msra.mxu0 0.0
    %935 = vmatprep.subr.mxu0 0.0
    %936 = vmatpush1.xpose.msra.mxu0 0.0
    %937 = vmatprep.subr.mxu0 0.0
    %938 = vmatpush1.xpose.msra.mxu0 0.0
    %939 = vmatprep.subr.mxu0 0.0
    %940 = vmatpush1.xpose.msra.mxu0 0.0
    %941 = vmatprep.subr.mxu0 0.0
    %942 = vmatpush1.xpose.msra.mxu0 0.0
    %943 = vmatprep.subr.mxu0 0.0
    %944 = vmatpush1.xpose.msra.mxu0 0.0
    %945 = vmatprep.subr.mxu0 0.0
    %946 = vmatpush1.xpose.msra.mxu0 0.0
    %947 = vmatprep.subr.mxu0 0.0
    %948 = vmatpush1.xpose.msra.mxu0 0.0
    %949 = vmatprep.subr.mxu0 0.0
    %950 = vmatpush1.xpose.msra.mxu0 0.0
    %951 = vmatprep.subr.mxu0 0.0
    %952 = vmatpush1.xpose.msra.mxu0 0.0
    %953 = vmatprep.subr.mxu0 0.0
    %954 = vmatpush1.xpose.msra.mxu0 0.0
    %955 = vmatprep.subr.mxu0 0.0
    %956 = vmatpush1.xpose.msra.mxu0 %v925
    %957 = vmatprep.subr.mxu0 0.0
    %958 = vmatpush1.xpose.msra.mxu0 %v923
    %959 = vmatprep.subr.mxu0 0.0
    %960 = vmatpush2.xpose.msra.mxu0 0.0
    %961 = vmatprep.subr.mxu0 0.0
    %962 = vmatpush2.xpose.msra.mxu0 0.0
    %963 = vmatprep.subr.mxu0 0.0
    %964 = vmatpush2.xpose.msra.mxu0 0.0
    %965 = vmatprep.subr.mxu0 0.0
    %966 = vmatpush2.xpose.msra.mxu0 0.0
    %967 = vmatprep.subr.mxu0 0.0
    %968 = vmatpush2.xpose.msra.mxu0 0.0
    %969 = vmatprep.subr.mxu0 0.0
    %970 = vmatpush2.xpose.msra.mxu0 0.0
    %971 = vmatprep.subr.mxu0 0.0
    %972 = vmatpush2.xpose.msra.mxu0 0.0
    %973 = vmatprep.subr.mxu0 0.0
    %974 = vmatpush2.xpose.msra.mxu0 0.0
    %975 = vmatprep.subr.mxu0 0.0
    %976 = vmatpush2.xpose.msra.mxu0 0.0
    %977 = vmatprep.subr.mxu0 0.0
    %978 = vmatpush2.xpose.msra.mxu0 0.0
    %979 = vmatprep.subr.mxu0 0.0
    %980 = vmatpush2.xpose.msra.mxu0 0.0
    %981 = vmatprep.subr.mxu0 0.0
    %982 = vmatpush2.xpose.msra.mxu0 0.0
    %983 = vmatprep.subr.mxu0 0.0
    %984 = vmatpush2.xpose.msra.mxu0 0.0
    %985 = vmatprep.subr.mxu0 0.0
    %986 = vmatpush2.xpose.msra.mxu0 0.0
    %987 = vmatprep.subr.mxu0 0.0
    %988 = vmatpush2.xpose.msra.mxu0 0.0
    %989 = vmatprep.subr.mxu0 0.0
    %990 = vmatpush2.xpose.msra.mxu0 0.0
    %991 = vmatprep.mubr.f32.mxu0 0.0
    %992 = vmatmul.mubr.f32.gmra.mxu0 %v919
    %v993 = vpop.f32.mrf.mxu0
    %v994 = vadd.f32 %v152, %v993
    %v995 = vpop.f32.mrf.mxu0
    %996 = vmatprep.mubr.f32.mxu0 0.0
    %997 = vmatmul.mubr.f32.gmra.mxu0 %v921
    %v998 = vpop.f32.mrf.mxu0
    %v999 = vadd.f32 %v153, %v998
    %v1000 = vpop.f32.mrf.mxu0
    %1001 = vdwg.mxu0
    %v1002 = vsel %vm401, %v994, -inf
    %1003 = vmax.xlane.f32.xlu0 %v1002
    %v1004 = vpop.xlane.xlu0 %1003
    %v1005 = vsel %vm401, %v999, -inf
    %1006 = vmax.xlane.f32.xlu0 %v1005
    %v1007 = vpop.xlane.xlu0 %1006
    %v1008 = vsub.f32 %v994, %v1004
    %v1009 = vsub.f32 %v999, %v1007
    %v1010 = vmul.f32 %v1008, 1.442695
    %v1011 = vpow.pop %v1010
    %v1012 = vmul.f32 %v1009, 1.442695
    %v1013 = vpow.pop %v1012
    %v1014 = vsel %vm401, %v1011, 0.0
    %1015 = vadd.xlane.f32.xlu0 %v1014
    %v1016 = vpop.xlane.xlu0 %1015
    %v1017 = vsel %vm401, %v1013, 0.0
    %1018 = vadd.xlane.f32.xlu0 %v1017
    %v1019 = vpop.xlane.xlu0 %1018
    %v1020 = vrcp.pop %v1016
    %v1021 = vrcp.pop %v1019
    %v1022 = vmul.f32 %v1011, %v1020
    %v1023 = vmul.f32 %v1013, %v1021
    %1024 = vrot.lane.b32.xlu0 %v298, 40
    %v1025 = vpop.permute.xlu0 %1024
    %1026 = vrot.lane.b32.xlu0 %v303, 40
    %v1027 = vpop.permute.xlu0 %1026
    %v1031 = vsel %vm401, %v1022, 0
    %v1034 = vsel %vm401, %v1023, 0
    %1036 = vmatprep.subr.mxu0 0.0
    %1037 = vmatpush1.msra.mxu0 0.0
    %1038 = vmatprep.subr.mxu0 0.0
    %1039 = vmatpush1.msra.mxu0 0.0
    %1040 = vmatprep.subr.mxu0 0.0
    %1041 = vmatpush1.msra.mxu0 0.0
    %1042 = vmatprep.subr.mxu0 0.0
    %1043 = vmatpush1.msra.mxu0 0.0
    %1044 = vmatprep.subr.mxu0 0.0
    %1045 = vmatpush1.msra.mxu0 0.0
    %1046 = vmatprep.subr.mxu0 0.0
    %1047 = vmatpush1.msra.mxu0 0.0
    %1048 = vmatprep.subr.mxu0 0.0
    %1049 = vmatpush1.msra.mxu0 0.0
    %1050 = vmatprep.subr.mxu0 0.0
    %1051 = vmatpush1.msra.mxu0 0.0
    %1052 = vmatprep.subr.mxu0 0.0
    %1053 = vmatpush1.msra.mxu0 0.0
    %1054 = vmatprep.subr.mxu0 0.0
    %1055 = vmatpush1.msra.mxu0 0.0
    %1056 = vmatprep.subr.mxu0 0.0
    %1057 = vmatpush1.msra.mxu0 0.0
    %1058 = vmatprep.subr.mxu0 0.0
    %1059 = vmatpush1.msra.mxu0 0.0
    %1060 = vmatprep.subr.mxu0 0.0
    %1061 = vmatpush1.msra.mxu0 0.0
    %1062 = vmatprep.subr.mxu0 0.0
    %1063 = vmatpush1.msra.mxu0 0.0
    %1064 = vmatprep.subr.mxu0 0.0
    %1065 = vmatpush1.msra.mxu0 %v1027
    %1066 = vmatprep.subr.mxu0 0.0
    %1067 = vmatpush1.msra.mxu0 %v1025
    %1068 = vmatprep.subr.mxu0 0.0
    %1069 = vmatpush2.msra.mxu0 0.0
    %1070 = vmatprep.subr.mxu0 0.0
    %1071 = vmatpush2.msra.mxu0 0.0
    %1072 = vmatprep.subr.mxu0 0.0
    %1073 = vmatpush2.msra.mxu0 0.0
    %1074 = vmatprep.subr.mxu0 0.0
    %1075 = vmatpush2.msra.mxu0 0.0
    %1076 = vmatprep.subr.mxu0 0.0
    %1077 = vmatpush2.msra.mxu0 0.0
    %1078 = vmatprep.subr.mxu0 0.0
    %1079 = vmatpush2.msra.mxu0 0.0
    %1080 = vmatprep.subr.mxu0 0.0
    %1081 = vmatpush2.msra.mxu0 0.0
    %1082 = vmatprep.subr.mxu0 0.0
    %1083 = vmatpush2.msra.mxu0 0.0
    %1084 = vmatprep.subr.mxu0 0.0
    %1085 = vmatpush2.msra.mxu0 0.0
    %1086 = vmatprep.subr.mxu0 0.0
    %1087 = vmatpush2.msra.mxu0 0.0
    %1088 = vmatprep.subr.mxu0 0.0
    %1089 = vmatpush2.msra.mxu0 0.0
    %1090 = vmatprep.subr.mxu0 0.0
    %1091 = vmatpush2.msra.mxu0 0.0
    %1092 = vmatprep.subr.mxu0 0.0
    %1093 = vmatpush2.msra.mxu0 0.0
    %1094 = vmatprep.subr.mxu0 0.0
    %1095 = vmatpush2.msra.mxu0 0.0
    %1096 = vmatprep.subr.mxu0 0.0
    %1097 = vmatpush2.msra.mxu0 0.0
    %1098 = vmatprep.subr.mxu0 0.0
    %1099 = vmatpush2.msra.mxu0 0.0
    %1100 = vmatprep.mubr.f32.mxu0 0.0
    %1101 = vmatmul.mubr.f32.gmra.mxu0 %v1031
    %v1102 = vpop.f32.mrf.mxu0
    %v1103 = vadd.f32 0.0, %v1102
    %v1104 = vpop.f32.mrf.mxu0
    %1105 = vmatprep.mubr.f32.mxu0 0.0
    %1106 = vmatmul.mubr.f32.gmra.mxu0 %v1034
    %v1107 = vpop.f32.mrf.mxu0
    %v1108 = vadd.f32 0.0, %v1107
    %v1109 = vpop.f32.mrf.mxu0
    %1110 = vdwg.mxu0
    %1113 = vrot.lane.b32.xlu0 %v703, 8
    %v1114 = vpop.permute.xlu0 %1113
    %1115 = vrot.lane.b32.xlu0 %v708, 8
    %v1116 = vpop.permute.xlu0 %1115
    %1121 = vrot.lane.b32.xlu0 %v903, 16
    %v1122 = vpop.permute.xlu0 %1121
    %1123 = vrot.lane.b32.xlu0 %v908, 16
    %v1124 = vpop.permute.xlu0 %1123
    %1129 = vrot.lane.b32.xlu0 %v1103, 24
    %v1130 = vpop.permute.xlu0 %1129
    %1131 = vrot.lane.b32.xlu0 %v1108, 24
    %v1132 = vpop.permute.xlu0 %1131
    %v1135 = vsel %vm317, %v503, %v1114
    %v1136 = vsel %vm317, %v508, %v1116
    %v1137 = vsel %vm401, %v1135, %v1122
    %v1138 = vsel %vm401, %v1136, %v1124
    %vm1139 = vcmask 195584
    %v1140 = vsel %vm1139, %v1137, %v1130
    %v1141 = vsel %vm1139, %v1138, %v1132
    %v1143 = vlaneseq
    %v1144 = vshrl.u32 %v1143, 7
    %v1145 = vsub.s32 0, %v1144
    %v1146 = vrot.slane %v310, %v1145
    %v1149 = vsel %vm158, %v1140, 0
    %v1152 = vsel %vm158, %v1141, 0
    %1154 = vmatprep.subr.mxu0 0.0
    %1155 = vmatpush1.msra.mxu0 0.0
    %1156 = vmatprep.subr.mxu0 0.0
    %1157 = vmatpush1.msra.mxu0 0.0
    %1158 = vmatprep.subr.mxu0 0.0
    %1159 = vmatpush1.msra.mxu0 0.0
    %1160 = vmatprep.subr.mxu0 0.0
    %1161 = vmatpush1.msra.mxu0 0.0
    %1162 = vmatprep.subr.mxu0 0.0
    %1163 = vmatpush1.msra.mxu0 0.0
    %1164 = vmatprep.subr.mxu0 0.0
    %1165 = vmatpush1.msra.mxu0 0.0
    %1166 = vmatprep.subr.mxu0 0.0
    %1167 = vmatpush1.msra.mxu0 0.0
    %1168 = vmatprep.subr.mxu0 0.0
    %1169 = vmatpush1.msra.mxu0 0.0
    %1170 = vmatprep.subr.mxu0 0.0
    %1171 = vmatpush1.msra.mxu0 0.0
    %1172 = vmatprep.subr.mxu0 0.0
    %1173 = vmatpush1.msra.mxu0 0.0
    %1174 = vmatprep.subr.mxu0 0.0
    %1175 = vmatpush1.msra.mxu0 0.0
    %1176 = vmatprep.subr.mxu0 0.0
    %1177 = vmatpush1.msra.mxu0 0.0
    %1178 = vmatprep.subr.mxu0 0.0
    %1179 = vmatpush1.msra.mxu0 %v309
    %1180 = vmatprep.subr.mxu0 0.0
    %1181 = vmatpush1.msra.mxu0 %v308
    %1182 = vmatprep.subr.mxu0 0.0
    %1183 = vmatpush1.msra.mxu0 %v307
    %1184 = vmatprep.subr.mxu0 0.0
    %1185 = vmatpush1.msra.mxu0 %v306
    %1186 = vmatprep.subr.mxu0 0.0
    %1187 = vmatpush2.msra.mxu0 0.0
    %1188 = vmatprep.subr.mxu0 0.0
    %1189 = vmatpush2.msra.mxu0 0.0
    %1190 = vmatprep.subr.mxu0 0.0
    %1191 = vmatpush2.msra.mxu0 0.0
    %1192 = vmatprep.subr.mxu0 0.0
    %1193 = vmatpush2.msra.mxu0 0.0
    %1194 = vmatprep.subr.mxu0 0.0
    %1195 = vmatpush2.msra.mxu0 0.0
    %1196 = vmatprep.subr.mxu0 0.0
    %1197 = vmatpush2.msra.mxu0 0.0
    %1198 = vmatprep.subr.mxu0 0.0
    %1199 = vmatpush2.msra.mxu0 0.0
    %1200 = vmatprep.subr.mxu0 0.0
    %1201 = vmatpush2.msra.mxu0 0.0
    %1202 = vmatprep.subr.mxu0 0.0
    %1203 = vmatpush2.msra.mxu0 0.0
    %1204 = vmatprep.subr.mxu0 0.0
    %1205 = vmatpush2.msra.mxu0 0.0
    %1206 = vmatprep.subr.mxu0 0.0
    %1207 = vmatpush2.msra.mxu0 0.0
    %1208 = vmatprep.subr.mxu0 0.0
    %1209 = vmatpush2.msra.mxu0 0.0
    %1210 = vmatprep.subr.mxu0 0.0
    %1211 = vmatpush2.msra.mxu0 0.0
    %1212 = vmatprep.subr.mxu0 0.0
    %1213 = vmatpush2.msra.mxu0 0.0
    %1214 = vmatprep.subr.mxu0 0.0
    %1215 = vmatpush2.msra.mxu0 0.0
    %1216 = vmatprep.subr.mxu0 0.0
    %1217 = vmatpush2.msra.mxu0 0.0
    %1218 = vmatprep.mubr.f32.mxu0 0.0
    %1219 = vmatmul.mubr.f32.gmra.mxu0 %v1149
    %v1220 = vpop.f32.mrf.mxu0
    %v1221 = vadd.f32 %v1146, %v1220
    %v1222 = vpop.f32.mrf.mxu0
    %1223 = vmatprep.mubr.f32.mxu0 0.0
    %1224 = vmatmul.mubr.f32.gmra.mxu0 %v1152
    %v1225 = vpop.f32.mrf.mxu0
    %v1226 = vadd.f32 %v1146, %v1225
    %v1227 = vpop.f32.mrf.mxu0
    %1228 = vdwg.mxu0
    %v1229 = vadd.f32 %v148, %v1221
    %v1230 = vadd.f32 %v149, %v1226
    %v1231 = vsel %vm158, %v1229, 0.0
    %1232 = vadd.xlane.f32.xlu0 %v1231
    %v1233 = vpop.xlane.xlu0 %1232
    %v1234 = vsel %vm158, %v1230, 0.0
    %1235 = vadd.xlane.f32.xlu0 %v1234
    %v1236 = vpop.xlane.xlu0 %1235
    %v1237 = vmul.f32 %v1233, %v165
    %v1238 = vmul.f32 %v1236, %v165
    %v1239 = vsub.f32 %v1229, %v1237
    %v1240 = vsub.f32 %v1230, %v1238
    %v1241 = vmul.f32 %v1239, %v1239
    %v1242 = vmul.f32 %v1240, %v1240
    %v1243 = vsel %vm158, %v1241, 0.0
    %1244 = vadd.xlane.f32.xlu0 %v1243
    %v1245 = vpop.xlane.xlu0 %1244
    %v1246 = vsel %vm158, %v1242, 0.0
    %1247 = vadd.xlane.f32.xlu0 %v1246
    %v1248 = vpop.xlane.xlu0 %1247
    %v1249 = vmul.f32 %v1245, %v165
    %v1250 = vmul.f32 %v1248, %v165
    %v1251 = vmul.f32 %v1249, 1.032258
    %v1252 = vmul.f32 %v1250, 1.032258
    %v1253 = vrsqrt.pop %v1251
    %v1254 = vmul.f32 %v1251, %v1253
    %vm1255 = vcmp.eq.f32.partialorder %v1251, inf
    %v1256 = vsel %vm1255, %v1251, %v1254
    %vm1257 = vcmp.eq.f32.partialorder %v1251, 0.0
    %v1258 = vand.u32 %v1251, 2147483648
    %v1259 = vsel %vm1257, %v1258, %v1256
    %v1260 = vrsqrt.pop %v1252
    %v1261 = vmul.f32 %v1252, %v1260
    %vm1262 = vcmp.eq.f32.partialorder %v1252, inf
    %v1263 = vsel %vm1262, %v1252, %v1261
    %vm1264 = vcmp.eq.f32.partialorder %v1252, 0.0
    %v1265 = vand.u32 %v1252, 2147483648
    %v1266 = vsel %vm1264, %v1265, %v1263
    %v1267 = vlaneseq
    %v1268 = vshrl.u32 %v1267, 7
    %v1269 = vsub.s32 1, %v1268
    %v1270 = vrot.slane %v156, %v1269
    %v1271 = vmul.f32 %v1270, %v1239
    %v1272 = vmul.f32 %v1270, %v1240
    %v1273 = vadd.f32 %v1259, 1e-06
    %v1274 = vadd.f32 %v1266, 1e-06
    %v1275 = vrcp.pop %v1273
    %v1276 = vrcp.pop %v1274
    %v1277 = vmul.f32 %v1271, %v1275
    %v1278 = vmul.f32 %v1272, %v1276
    %v1279 = vlaneseq
    %v1280 = vshrl.u32 %v1279, 7
    %v1281 = vsub.s32 1, %v1280
    %v1282 = vrot.slane %v157, %v1281
    %v1283 = vadd.f32 %v1277, %v1282
    %v1284 = vadd.f32 %v1278, %v1282
    %v1285 = vld [vmem:[%s8] sm:$0xff]
    %v1286 = vld [vmem:[%s8 + $0x8] sm:$0xff]
    %v1287 = vld [vmem:[%s8 + $0x10] sm:$0xff]
    %v1288 = vld [vmem:[%s8 + $0x18] sm:$0xff]
    %v1289 = vld [vmem:[%s9] sm:$0x1]
    %v1291 = vlaneseq
    %v1292 = vshrl.u32 %v1291, 7
    %v1293 = vsub.s32 0, %v1292
    %v1294 = vrot.slane %v1289, %v1293
    %v1297 = vsel %vm158, %v1283, 0
    %v1300 = vsel %vm158, %v1284, 0
    %1302 = vmatprep.subr.mxu0 0.0
    %1303 = vmatpush1.msra.mxu0 0.0
    %1304 = vmatprep.subr.mxu0 0.0
    %1305 = vmatpush1.msra.mxu0 0.0
    %1306 = vmatprep.subr.mxu0 0.0
    %1307 = vmatpush1.msra.mxu0 0.0
    %1308 = vmatprep.subr.mxu0 0.0
    %1309 = vmatpush1.msra.mxu0 0.0
    %1310 = vmatprep.subr.mxu0 0.0
    %1311 = vmatpush1.msra.mxu0 0.0
    %1312 = vmatprep.subr.mxu0 0.0
    %1313 = vmatpush1.msra.mxu0 0.0
    %1314 = vmatprep.subr.mxu0 0.0
    %1315 = vmatpush1.msra.mxu0 0.0
    %1316 = vmatprep.subr.mxu0 0.0
    %1317 = vmatpush1.msra.mxu0 0.0
    %1318 = vmatprep.subr.mxu0 0.0
    %1319 = vmatpush1.msra.mxu0 0.0
    %1320 = vmatprep.subr.mxu0 0.0
    %1321 = vmatpush1.msra.mxu0 0.0
    %1322 = vmatprep.subr.mxu0 0.0
    %1323 = vmatpush1.msra.mxu0 0.0
    %1324 = vmatprep.subr.mxu0 0.0
    %1325 = vmatpush1.msra.mxu0 0.0
    %1326 = vmatprep.subr.mxu0 0.0
    %1327 = vmatpush1.msra.mxu0 %v1288
    %1328 = vmatprep.subr.mxu0 0.0
    %1329 = vmatpush1.msra.mxu0 %v1287
    %1330 = vmatprep.subr.mxu0 0.0
    %1331 = vmatpush1.msra.mxu0 %v1286
    %1332 = vmatprep.subr.mxu0 0.0
    %1333 = vmatpush1.msra.mxu0 %v1285
    %1334 = vmatprep.subr.mxu0 0.0
    %1335 = vmatpush2.msra.mxu0 0.0
    %1336 = vmatprep.subr.mxu0 0.0
    %1337 = vmatpush2.msra.mxu0 0.0
    %1338 = vmatprep.subr.mxu0 0.0
    %1339 = vmatpush2.msra.mxu0 0.0
    %1340 = vmatprep.subr.mxu0 0.0
    %1341 = vmatpush2.msra.mxu0 0.0
    %1342 = vmatprep.subr.mxu0 0.0
    %1343 = vmatpush2.msra.mxu0 0.0
    %1344 = vmatprep.subr.mxu0 0.0
    %1345 = vmatpush2.msra.mxu0 0.0
    %1346 = vmatprep.subr.mxu0 0.0
    %1347 = vmatpush2.msra.mxu0 0.0
    %1348 = vmatprep.subr.mxu0 0.0
    %1349 = vmatpush2.msra.mxu0 0.0
    %1350 = vmatprep.subr.mxu0 0.0
    %1351 = vmatpush2.msra.mxu0 0.0
    %1352 = vmatprep.subr.mxu0 0.0
    %1353 = vmatpush2.msra.mxu0 0.0
    %1354 = vmatprep.subr.mxu0 0.0
    %1355 = vmatpush2.msra.mxu0 0.0
    %1356 = vmatprep.subr.mxu0 0.0
    %1357 = vmatpush2.msra.mxu0 0.0
    %1358 = vmatprep.subr.mxu0 0.0
    %1359 = vmatpush2.msra.mxu0 0.0
    %1360 = vmatprep.subr.mxu0 0.0
    %1361 = vmatpush2.msra.mxu0 0.0
    %1362 = vmatprep.subr.mxu0 0.0
    %1363 = vmatpush2.msra.mxu0 0.0
    %1364 = vmatprep.subr.mxu0 0.0
    %1365 = vmatpush2.msra.mxu0 0.0
    %1366 = vmatprep.mubr.f32.mxu0 0.0
    %1367 = vmatmul.mubr.f32.gmra.mxu0 %v1297
    %v1368 = vpop.f32.mrf.mxu0
    %v1369 = vadd.f32 %v1294, %v1368
    %v1370 = vpop.f32.mrf.mxu0
    %1371 = vmatprep.mubr.f32.mxu0 0.0
    %1372 = vmatmul.mubr.f32.gmra.mxu0 %v1300
    %v1373 = vpop.f32.mrf.mxu0
    %v1374 = vadd.f32 %v1294, %v1373
    %v1375 = vpop.f32.mrf.mxu0
    %1376 = vdwg.mxu0
    %v1377 = vld [vmem:[#allocation8] sm:$0xff]
    %v1378 = vld [vmem:[#allocation8 + $0x8] sm:$0xff]
    %v1379 = vld [vmem:[#allocation8 + $0x10] sm:$0xff]
    %v1380 = vld [vmem:[#allocation8 + $0x18] sm:$0xff]
    %v1381 = vld [vmem:[%s11] sm:$0x1]
    %v1383 = vlaneseq
    %v1384 = vshrl.u32 %v1383, 7
    %v1385 = vsub.s32 0, %v1384
    %v1386 = vrot.slane %v1381, %v1385
    %v1389 = vsel %vm158, %v150, 0
    %v1392 = vsel %vm158, %v151, 0
    %1394 = vmatprep.subr.mxu0 0.0
    %1395 = vmatpush1.msra.mxu0 0.0
    %1396 = vmatprep.subr.mxu0 0.0
    %1397 = vmatpush1.msra.mxu0 0.0
    %1398 = vmatprep.subr.mxu0 0.0
    %1399 = vmatpush1.msra.mxu0 0.0
    %1400 = vmatprep.subr.mxu0 0.0
    %1401 = vmatpush1.msra.mxu0 0.0
    %1402 = vmatprep.subr.mxu0 0.0
    %1403 = vmatpush1.msra.mxu0 0.0
    %1404 = vmatprep.subr.mxu0 0.0
    %1405 = vmatpush1.msra.mxu0 0.0
    %1406 = vmatprep.subr.mxu0 0.0
    %1407 = vmatpush1.msra.mxu0 0.0
    %1408 = vmatprep.subr.mxu0 0.0
    %1409 = vmatpush1.msra.mxu0 0.0
    %1410 = vmatprep.subr.mxu0 0.0
    %1411 = vmatpush1.msra.mxu0 0.0
    %1412 = vmatprep.subr.mxu0 0.0
    %1413 = vmatpush1.msra.mxu0 0.0
    %1414 = vmatprep.subr.mxu0 0.0
    %1415 = vmatpush1.msra.mxu0 0.0
    %1416 = vmatprep.subr.mxu0 0.0
    %1417 = vmatpush1.msra.mxu0 0.0
    %1418 = vmatprep.subr.mxu0 0.0
    %1419 = vmatpush1.msra.mxu0 %v1380
    %1420 = vmatprep.subr.mxu0 0.0
    %1421 = vmatpush1.msra.mxu0 %v1379
    %1422 = vmatprep.subr.mxu0 0.0
    %1423 = vmatpush1.msra.mxu0 %v1378
    %1424 = vmatprep.subr.mxu0 0.0
    %1425 = vmatpush1.msra.mxu0 %v1377
    %1426 = vmatprep.subr.mxu0 0.0
    %1427 = vmatpush2.msra.mxu0 0.0
    %1428 = vmatprep.subr.mxu0 0.0
    %1429 = vmatpush2.msra.mxu0 0.0
    %1430 = vmatprep.subr.mxu0 0.0
    %1431 = vmatpush2.msra.mxu0 0.0
    %1432 = vmatprep.subr.mxu0 0.0
    %1433 = vmatpush2.msra.mxu0 0.0
    %1434 = vmatprep.subr.mxu0 0.0
    %1435 = vmatpush2.msra.mxu0 0.0
    %1436 = vmatprep.subr.mxu0 0.0
    %1437 = vmatpush2.msra.mxu0 0.0
    %1438 = vmatprep.subr.mxu0 0.0
    %1439 = vmatpush2.msra.mxu0 0.0
    %1440 = vmatprep.subr.mxu0 0.0
    %1441 = vmatpush2.msra.mxu0 0.0
    %1442 = vmatprep.subr.mxu0 0.0
    %1443 = vmatpush2.msra.mxu0 0.0
    %1444 = vmatprep.subr.mxu0 0.0
    %1445 = vmatpush2.msra.mxu0 0.0
    %1446 = vmatprep.subr.mxu0 0.0
    %1447 = vmatpush2.msra.mxu0 0.0
    %1448 = vmatprep.subr.mxu0 0.0
    %1449 = vmatpush2.msra.mxu0 0.0
    %1450 = vmatprep.subr.mxu0 0.0
    %1451 = vmatpush2.msra.mxu0 0.0
    %1452 = vmatprep.subr.mxu0 0.0
    %1453 = vmatpush2.msra.mxu0 0.0
    %1454 = vmatprep.subr.mxu0 0.0
    %1455 = vmatpush2.msra.mxu0 0.0
    %1456 = vmatprep.subr.mxu0 0.0
    %1457 = vmatpush2.msra.mxu0 0.0
    %1458 = vmatprep.mubr.f32.mxu0 0.0
    %1459 = vmatmul.mubr.f32.gmra.mxu0 %v1389
    %v1460 = vpop.f32.mrf.mxu0
    %v1461 = vadd.f32 %v1386, %v1460
    %v1462 = vpop.f32.mrf.mxu0
    %1463 = vmatprep.mubr.f32.mxu0 0.0
    %1464 = vmatmul.mubr.f32.gmra.mxu0 %v1392
    %v1465 = vpop.f32.mrf.mxu0
    %v1466 = vadd.f32 %v1386, %v1465
    %v1467 = vpop.f32.mrf.mxu0
    %1468 = vdwg.mxu0
    %v1469 = vld [vmem:[#allocation10] sm:$0xff]
    %v1470 = vld [vmem:[#allocation10 + $0x8] sm:$0xff]
    %v1471 = vld [vmem:[#allocation10 + $0x10] sm:$0xff]
    %v1472 = vld [vmem:[#allocation10 + $0x18] sm:$0xff]
    %v1473 = vld [vmem:[%s13] sm:$0x1]
    %v1475 = vsel %vm317, %v1369, 0
    %v1478 = vsel %vm317, %v1374, 0
    %v1481 = vsel %vm317, %v1461, 0
    %v1484 = vsel %vm317, %v1466, 0
    %1486 = vmatprep.subr.mxu0 0.0
    %1487 = vmatpush1.xpose.msra.mxu0 0.0
    %1488 = vmatprep.subr.mxu0 0.0
    %1489 = vmatpush1.xpose.msra.mxu0 0.0
    %1490 = vmatprep.subr.mxu0 0.0
    %1491 = vmatpush1.xpose.msra.mxu0 0.0
    %1492 = vmatprep.subr.mxu0 0.0
    %1493 = vmatpush1.xpose.msra.mxu0 0.0
    %1494 = vmatprep.subr.mxu0 0.0
    %1495 = vmatpush1.xpose.msra.mxu0 0.0
    %1496 = vmatprep.subr.mxu0 0.0
    %1497 = vmatpush1.xpose.msra.mxu0 0.0
    %1498 = vmatprep.subr.mxu0 0.0
    %1499 = vmatpush1.xpose.msra.mxu0 0.0
    %1500 = vmatprep.subr.mxu0 0.0
    %1501 = vmatpush1.xpose.msra.mxu0 0.0
    %1502 = vmatprep.subr.mxu0 0.0
    %1503 = vmatpush1.xpose.msra.mxu0 0.0
    %1504 = vmatprep.subr.mxu0 0.0
    %1505 = vmatpush1.xpose.msra.mxu0 0.0
    %1506 = vmatprep.subr.mxu0 0.0
    %1507 = vmatpush1.xpose.msra.mxu0 0.0
    %1508 = vmatprep.subr.mxu0 0.0
    %1509 = vmatpush1.xpose.msra.mxu0 0.0
    %1510 = vmatprep.subr.mxu0 0.0
    %1511 = vmatpush1.xpose.msra.mxu0 0.0
    %1512 = vmatprep.subr.mxu0 0.0
    %1513 = vmatpush1.xpose.msra.mxu0 0.0
    %1514 = vmatprep.subr.mxu0 0.0
    %1515 = vmatpush1.xpose.msra.mxu0 %v1484
    %1516 = vmatprep.subr.mxu0 0.0
    %1517 = vmatpush1.xpose.msra.mxu0 %v1481
    %1518 = vmatprep.subr.mxu0 0.0
    %1519 = vmatpush2.xpose.msra.mxu0 0.0
    %1520 = vmatprep.subr.mxu0 0.0
    %1521 = vmatpush2.xpose.msra.mxu0 0.0
    %1522 = vmatprep.subr.mxu0 0.0
    %1523 = vmatpush2.xpose.msra.mxu0 0.0
    %1524 = vmatprep.subr.mxu0 0.0
    %1525 = vmatpush2.xpose.msra.mxu0 0.0
    %1526 = vmatprep.subr.mxu0 0.0
    %1527 = vmatpush2.xpose.msra.mxu0 0.0
    %1528 = vmatprep.subr.mxu0 0.0
    %1529 = vmatpush2.xpose.msra.mxu0 0.0
    %1530 = vmatprep.subr.mxu0 0.0
    %1531 = vmatpush2.xpose.msra.mxu0 0.0
    %1532 = vmatprep.subr.mxu0 0.0
    %1533 = vmatpush2.xpose.msra.mxu0 0.0
    %1534 = vmatprep.subr.mxu0 0.0
    %1535 = vmatpush2.xpose.msra.mxu0 0.0
    %1536 = vmatprep.subr.mxu0 0.0
    %1537 = vmatpush2.xpose.msra.mxu0 0.0
    %1538 = vmatprep.subr.mxu0 0.0
    %1539 = vmatpush2.xpose.msra.mxu0 0.0
    %1540 = vmatprep.subr.mxu0 0.0
    %1541 = vmatpush2.xpose.msra.mxu0 0.0
    %1542 = vmatprep.subr.mxu0 0.0
    %1543 = vmatpush2.xpose.msra.mxu0 0.0
    %1544 = vmatprep.subr.mxu0 0.0
    %1545 = vmatpush2.xpose.msra.mxu0 0.0
    %1546 = vmatprep.subr.mxu0 0.0
    %1547 = vmatpush2.xpose.msra.mxu0 0.0
    %1548 = vmatprep.subr.mxu0 0.0
    %1549 = vmatpush2.xpose.msra.mxu0 0.0
    %1550 = vmatprep.mubr.f32.mxu0 0.0
    %1551 = vmatmul.mubr.f32.gmra.mxu0 %v1475
    %v1552 = vpop.f32.mrf.mxu0
    %v1553 = vadd.f32 %v154, %v1552
    %v1554 = vpop.f32.mrf.mxu0
    %1555 = vmatprep.mubr.f32.mxu0 0.0
    %1556 = vmatmul.mubr.f32.gmra.mxu0 %v1478
    %v1557 = vpop.f32.mrf.mxu0
    %v1558 = vadd.f32 %v155, %v1557
    %v1559 = vpop.f32.mrf.mxu0
    %1560 = vdwg.mxu0
    %v1561 = vsel %vm401, %v1553, -inf
    %1562 = vmax.xlane.f32.xlu0 %v1561
    %v1563 = vpop.xlane.xlu0 %1562
    %v1564 = vsel %vm401, %v1558, -inf
    %1565 = vmax.xlane.f32.xlu0 %v1564
    %v1566 = vpop.xlane.xlu0 %1565
    %v1567 = vsub.f32 %v1553, %v1563
    %v1568 = vsub.f32 %v1558, %v1566
    %v1569 = vmul.f32 %v1567, 1.442695
    %v1570 = vpow.pop %v1569
    %v1571 = vmul.f32 %v1568, 1.442695
    %v1572 = vpow.pop %v1571
    %v1573 = vsel %vm401, %v1570, 0.0
    %1574 = vadd.xlane.f32.xlu0 %v1573
    %v1575 = vpop.xlane.xlu0 %1574
    %v1576 = vsel %vm401, %v1572, 0.0
    %1577 = vadd.xlane.f32.xlu0 %v1576
    %v1578 = vpop.xlane.xlu0 %1577
    %v1579 = vrcp.pop %v1575
    %v1580 = vrcp.pop %v1578
    %v1581 = vmul.f32 %v1570, %v1579
    %v1582 = vmul.f32 %v1572, %v1580
    %1583 = vrot.lane.b32.xlu0 %v1461, 96
    %v1584 = vpop.permute.xlu0 %1583
    %1585 = vrot.lane.b32.xlu0 %v1466, 96
    %v1586 = vpop.permute.xlu0 %1585
    %v1590 = vsel %vm401, %v1581, 0
    %v1593 = vsel %vm401, %v1582, 0
    %1595 = vmatprep.subr.mxu0 0.0
    %1596 = vmatpush1.msra.mxu0 0.0
    %1597 = vmatprep.subr.mxu0 0.0
    %1598 = vmatpush1.msra.mxu0 0.0
    %1599 = vmatprep.subr.mxu0 0.0
    %1600 = vmatpush1.msra.mxu0 0.0
    %1601 = vmatprep.subr.mxu0 0.0
    %1602 = vmatpush1.msra.mxu0 0.0
    %1603 = vmatprep.subr.mxu0 0.0
    %1604 = vmatpush1.msra.mxu0 0.0
    %1605 = vmatprep.subr.mxu0 0.0
    %1606 = vmatpush1.msra.mxu0 0.0
    %1607 = vmatprep.subr.mxu0 0.0
    %1608 = vmatpush1.msra.mxu0 0.0
    %1609 = vmatprep.subr.mxu0 0.0
    %1610 = vmatpush1.msra.mxu0 0.0
    %1611 = vmatprep.subr.mxu0 0.0
    %1612 = vmatpush1.msra.mxu0 0.0
    %1613 = vmatprep.subr.mxu0 0.0
    %1614 = vmatpush1.msra.mxu0 0.0
    %1615 = vmatprep.subr.mxu0 0.0
    %1616 = vmatpush1.msra.mxu0 0.0
    %1617 = vmatprep.subr.mxu0 0.0
    %1618 = vmatpush1.msra.mxu0 0.0
    %1619 = vmatprep.subr.mxu0 0.0
    %1620 = vmatpush1.msra.mxu0 0.0
    %1621 = vmatprep.subr.mxu0 0.0
    %1622 = vmatpush1.msra.mxu0 0.0
    %1623 = vmatprep.subr.mxu0 0.0
    %1624 = vmatpush1.msra.mxu0 %v1586
    %1625 = vmatprep.subr.mxu0 0.0
    %1626 = vmatpush1.msra.mxu0 %v1584
    %1627 = vmatprep.subr.mxu0 0.0
    %1628 = vmatpush2.msra.mxu0 0.0
    %1629 = vmatprep.subr.mxu0 0.0
    %1630 = vmatpush2.msra.mxu0 0.0
    %1631 = vmatprep.subr.mxu0 0.0
    %1632 = vmatpush2.msra.mxu0 0.0
    %1633 = vmatprep.subr.mxu0 0.0
    %1634 = vmatpush2.msra.mxu0 0.0
    %1635 = vmatprep.subr.mxu0 0.0
    %1636 = vmatpush2.msra.mxu0 0.0
    %1637 = vmatprep.subr.mxu0 0.0
    %1638 = vmatpush2.msra.mxu0 0.0
    %1639 = vmatprep.subr.mxu0 0.0
    %1640 = vmatpush2.msra.mxu0 0.0
    %1641 = vmatprep.subr.mxu0 0.0
    %1642 = vmatpush2.msra.mxu0 0.0
    %1643 = vmatprep.subr.mxu0 0.0
    %1644 = vmatpush2.msra.mxu0 0.0
    %1645 = vmatprep.subr.mxu0 0.0
    %1646 = vmatpush2.msra.mxu0 0.0
    %1647 = vmatprep.subr.mxu0 0.0
    %1648 = vmatpush2.msra.mxu0 0.0
    %1649 = vmatprep.subr.mxu0 0.0
    %1650 = vmatpush2.msra.mxu0 0.0
    %1651 = vmatprep.subr.mxu0 0.0
    %1652 = vmatpush2.msra.mxu0 0.0
    %1653 = vmatprep.subr.mxu0 0.0
    %1654 = vmatpush2.msra.mxu0 0.0
    %1655 = vmatprep.subr.mxu0 0.0
    %1656 = vmatpush2.msra.mxu0 0.0
    %1657 = vmatprep.subr.mxu0 0.0
    %1658 = vmatpush2.msra.mxu0 0.0
    %1659 = vmatprep.mubr.f32.mxu0 0.0
    %1660 = vmatmul.mubr.f32.gmra.mxu0 %v1590
    %v1661 = vpop.f32.mrf.mxu0
    %v1662 = vadd.f32 0.0, %v1661
    %v1663 = vpop.f32.mrf.mxu0
    %1664 = vmatprep.mubr.f32.mxu0 0.0
    %1665 = vmatmul.mubr.f32.gmra.mxu0 %v1593
    %v1666 = vpop.f32.mrf.mxu0
    %v1667 = vadd.f32 0.0, %v1666
    %v1668 = vpop.f32.mrf.mxu0
    %1669 = vdwg.mxu0
    %1670 = vrot.lane.b32.xlu0 %v1369, 120
    %v1671 = vpop.permute.xlu0 %1670
    %1672 = vrot.lane.b32.xlu0 %v1374, 120
    %v1673 = vpop.permute.xlu0 %1672
    %1674 = vrot.lane.b32.xlu0 %v1461, 120
    %v1675 = vpop.permute.xlu0 %1674
    %1676 = vrot.lane.b32.xlu0 %v1466, 120
    %v1677 = vpop.permute.xlu0 %1676
    %v1678 = vsel %vm317, %v1671, 0
    %v1680 = vsel %vm317, %v1673, 0
    %v1682 = vsel %vm317, %v1675, 0
    %v1684 = vsel %vm317, %v1677, 0
    %1686 = vmatprep.subr.mxu0 0.0
    %1687 = vmatpush1.xpose.msra.mxu0 0.0
    %1688 = vmatprep.subr.mxu0 0.0
    %1689 = vmatpush1.xpose.msra.mxu0 0.0
    %1690 = vmatprep.subr.mxu0 0.0
    %1691 = vmatpush1.xpose.msra.mxu0 0.0
    %1692 = vmatprep.subr.mxu0 0.0
    %1693 = vmatpush1.xpose.msra.mxu0 0.0
    %1694 = vmatprep.subr.mxu0 0.0
    %1695 = vmatpush1.xpose.msra.mxu0 0.0
    %1696 = vmatprep.subr.mxu0 0.0
    %1697 = vmatpush1.xpose.msra.mxu0 0.0
    %1698 = vmatprep.subr.mxu0 0.0
    %1699 = vmatpush1.xpose.msra.mxu0 0.0
    %1700 = vmatprep.subr.mxu0 0.0
    %1701 = vmatpush1.xpose.msra.mxu0 0.0
    %1702 = vmatprep.subr.mxu0 0.0
    %1703 = vmatpush1.xpose.msra.mxu0 0.0
    %1704 = vmatprep.subr.mxu0 0.0
    %1705 = vmatpush1.xpose.msra.mxu0 0.0
    %1706 = vmatprep.subr.mxu0 0.0
    %1707 = vmatpush1.xpose.msra.mxu0 0.0
    %1708 = vmatprep.subr.mxu0 0.0
    %1709 = vmatpush1.xpose.msra.mxu0 0.0
    %1710 = vmatprep.subr.mxu0 0.0
    %1711 = vmatpush1.xpose.msra.mxu0 0.0
    %1712 = vmatprep.subr.mxu0 0.0
    %1713 = vmatpush1.xpose.msra.mxu0 0.0
    %1714 = vmatprep.subr.mxu0 0.0
    %1715 = vmatpush1.xpose.msra.mxu0 %v1684
    %1716 = vmatprep.subr.mxu0 0.0
    %1717 = vmatpush1.xpose.msra.mxu0 %v1682
    %1718 = vmatprep.subr.mxu0 0.0
    %1719 = vmatpush2.xpose.msra.mxu0 0.0
    %1720 = vmatprep.subr.mxu0 0.0
    %1721 = vmatpush2.xpose.msra.mxu0 0.0
    %1722 = vmatprep.subr.mxu0 0.0
    %1723 = vmatpush2.xpose.msra.mxu0 0.0
    %1724 = vmatprep.subr.mxu0 0.0
    %1725 = vmatpush2.xpose.msra.mxu0 0.0
    %1726 = vmatprep.subr.mxu0 0.0
    %1727 = vmatpush2.xpose.msra.mxu0 0.0
    %1728 = vmatprep.subr.mxu0 0.0
    %1729 = vmatpush2.xpose.msra.mxu0 0.0
    %1730 = vmatprep.subr.mxu0 0.0
    %1731 = vmatpush2.xpose.msra.mxu0 0.0
    %1732 = vmatprep.subr.mxu0 0.0
    %1733 = vmatpush2.xpose.msra.mxu0 0.0
    %1734 = vmatprep.subr.mxu0 0.0
    %1735 = vmatpush2.xpose.msra.mxu0 0.0
    %1736 = vmatprep.subr.mxu0 0.0
    %1737 = vmatpush2.xpose.msra.mxu0 0.0
    %1738 = vmatprep.subr.mxu0 0.0
    %1739 = vmatpush2.xpose.msra.mxu0 0.0
    %1740 = vmatprep.subr.mxu0 0.0
    %1741 = vmatpush2.xpose.msra.mxu0 0.0
    %1742 = vmatprep.subr.mxu0 0.0
    %1743 = vmatpush2.xpose.msra.mxu0 0.0
    %1744 = vmatprep.subr.mxu0 0.0
    %1745 = vmatpush2.xpose.msra.mxu0 0.0
    %1746 = vmatprep.subr.mxu0 0.0
    %1747 = vmatpush2.xpose.msra.mxu0 0.0
    %1748 = vmatprep.subr.mxu0 0.0
    %1749 = vmatpush2.xpose.msra.mxu0 0.0
    %1750 = vmatprep.mubr.f32.mxu0 0.0
    %1751 = vmatmul.mubr.f32.gmra.mxu0 %v1678
    %v1752 = vpop.f32.mrf.mxu0
    %v1753 = vadd.f32 %v154, %v1752
    %v1754 = vpop.f32.mrf.mxu0
    %1755 = vmatprep.mubr.f32.mxu0 0.0
    %1756 = vmatmul.mubr.f32.gmra.mxu0 %v1680
    %v1757 = vpop.f32.mrf.mxu0
    %v1758 = vadd.f32 %v155, %v1757
    %v1759 = vpop.f32.mrf.mxu0
    %1760 = vdwg.mxu0
    %v1761 = vsel %vm401, %v1753, -inf
    %1762 = vmax.xlane.f32.xlu0 %v1761
    %v1763 = vpop.xlane.xlu0 %1762
    %v1764 = vsel %vm401, %v1758, -inf
    %1765 = vmax.xlane.f32.xlu0 %v1764
    %v1766 = vpop.xlane.xlu0 %1765
    %v1767 = vsub.f32 %v1753, %v1763
    %v1768 = vsub.f32 %v1758, %v1766
    %v1769 = vmul.f32 %v1767, 1.442695
    %v1770 = vpow.pop %v1769
    %v1771 = vmul.f32 %v1768, 1.442695
    %v1772 = vpow.pop %v1771
    %v1773 = vsel %vm401, %v1770, 0.0
    %1774 = vadd.xlane.f32.xlu0 %v1773
    %v1775 = vpop.xlane.xlu0 %1774
    %v1776 = vsel %vm401, %v1772, 0.0
    %1777 = vadd.xlane.f32.xlu0 %v1776
    %v1778 = vpop.xlane.xlu0 %1777
    %v1779 = vrcp.pop %v1775
    %v1780 = vrcp.pop %v1778
    %v1781 = vmul.f32 %v1770, %v1779
    %v1782 = vmul.f32 %v1772, %v1780
    %1783 = vrot.lane.b32.xlu0 %v1461, 88
    %v1784 = vpop.permute.xlu0 %1783
    %1785 = vrot.lane.b32.xlu0 %v1466, 88
    %v1786 = vpop.permute.xlu0 %1785
    %v1790 = vsel %vm401, %v1781, 0
    %v1793 = vsel %vm401, %v1782, 0
    %1795 = vmatprep.subr.mxu0 0.0
    %1796 = vmatpush1.msra.mxu0 0.0
    %1797 = vmatprep.subr.mxu0 0.0
    %1798 = vmatpush1.msra.mxu0 0.0
    %1799 = vmatprep.subr.mxu0 0.0
    %1800 = vmatpush1.msra.mxu0 0.0
    %1801 = vmatprep.subr.mxu0 0.0
    %1802 = vmatpush1.msra.mxu0 0.0
    %1803 = vmatprep.subr.mxu0 0.0
    %1804 = vmatpush1.msra.mxu0 0.0
    %1805 = vmatprep.subr.mxu0 0.0
    %1806 = vmatpush1.msra.mxu0 0.0
    %1807 = vmatprep.subr.mxu0 0.0
    %1808 = vmatpush1.msra.mxu0 0.0
    %1809 = vmatprep.subr.mxu0 0.0
    %1810 = vmatpush1.msra.mxu0 0.0
    %1811 = vmatprep.subr.mxu0 0.0
    %1812 = vmatpush1.msra.mxu0 0.0
    %1813 = vmatprep.subr.mxu0 0.0
    %1814 = vmatpush1.msra.mxu0 0.0
    %1815 = vmatprep.subr.mxu0 0.0
    %1816 = vmatpush1.msra.mxu0 0.0
    %1817 = vmatprep.subr.mxu0 0.0
    %1818 = vmatpush1.msra.mxu0 0.0
    %1819 = vmatprep.subr.mxu0 0.0
    %1820 = vmatpush1.msra.mxu0 0.0
    %1821 = vmatprep.subr.mxu0 0.0
    %1822 = vmatpush1.msra.mxu0 0.0
    %1823 = vmatprep.subr.mxu0 0.0
    %1824 = vmatpush1.msra.mxu0 %v1786
    %1825 = vmatprep.subr.mxu0 0.0
    %1826 = vmatpush1.msra.mxu0 %v1784
    %1827 = vmatprep.subr.mxu0 0.0
    %1828 = vmatpush2.msra.mxu0 0.0
    %1829 = vmatprep.subr.mxu0 0.0
    %1830 = vmatpush2.msra.mxu0 0.0
    %1831 = vmatprep.subr.mxu0 0.0
    %1832 = vmatpush2.msra.mxu0 0.0
    %1833 = vmatprep.subr.mxu0 0.0
    %1834 = vmatpush2.msra.mxu0 0.0
    %1835 = vmatprep.subr.mxu0 0.0
    %1836 = vmatpush2.msra.mxu0 0.0
    %1837 = vmatprep.subr.mxu0 0.0
    %1838 = vmatpush2.msra.mxu0 0.0
    %1839 = vmatprep.subr.mxu0 0.0
    %1840 = vmatpush2.msra.mxu0 0.0
    %1841 = vmatprep.subr.mxu0 0.0
    %1842 = vmatpush2.msra.mxu0 0.0
    %1843 = vmatprep.subr.mxu0 0.0
    %1844 = vmatpush2.msra.mxu0 0.0
    %1845 = vmatprep.subr.mxu0 0.0
    %1846 = vmatpush2.msra.mxu0 0.0
    %1847 = vmatprep.subr.mxu0 0.0
    %1848 = vmatpush2.msra.mxu0 0.0
    %1849 = vmatprep.subr.mxu0 0.0
    %1850 = vmatpush2.msra.mxu0 0.0
    %1851 = vmatprep.subr.mxu0 0.0
    %1852 = vmatpush2.msra.mxu0 0.0
    %1853 = vmatprep.subr.mxu0 0.0
    %1854 = vmatpush2.msra.mxu0 0.0
    %1855 = vmatprep.subr.mxu0 0.0
    %1856 = vmatpush2.msra.mxu0 0.0
    %1857 = vmatprep.subr.mxu0 0.0
    %1858 = vmatpush2.msra.mxu0 0.0
    %1859 = vmatprep.mubr.f32.mxu0 0.0
    %1860 = vmatmul.mubr.f32.gmra.mxu0 %v1790
    %v1861 = vpop.f32.mrf.mxu0
    %v1862 = vadd.f32 0.0, %v1861
    %v1863 = vpop.f32.mrf.mxu0
    %1864 = vmatprep.mubr.f32.mxu0 0.0
    %1865 = vmatmul.mubr.f32.gmra.mxu0 %v1793
    %v1866 = vpop.f32.mrf.mxu0
    %v1867 = vadd.f32 0.0, %v1866
    %v1868 = vpop.f32.mrf.mxu0
    %1869 = vdwg.mxu0
    %1870 = vrot.lane.b32.xlu0 %v1369, 112
    %v1871 = vpop.permute.xlu0 %1870
    %1872 = vrot.lane.b32.xlu0 %v1374, 112
    %v1873 = vpop.permute.xlu0 %1872
    %1874 = vrot.lane.b32.xlu0 %v1461, 112
    %v1875 = vpop.permute.xlu0 %1874
    %1876 = vrot.lane.b32.xlu0 %v1466, 112
    %v1877 = vpop.permute.xlu0 %1876
    %v1878 = vsel %vm317, %v1871, 0
    %v1880 = vsel %vm317, %v1873, 0
    %v1882 = vsel %vm317, %v1875, 0
    %v1884 = vsel %vm317, %v1877, 0
    %1886 = vmatprep.subr.mxu0 0.0
    %1887 = vmatpush1.xpose.msra.mxu0 0.0
    %1888 = vmatprep.subr.mxu0 0.0
    %1889 = vmatpush1.xpose.msra.mxu0 0.0
    %1890 = vmatprep.subr.mxu0 0.0
    %1891 = vmatpush1.xpose.msra.mxu0 0.0
    %1892 = vmatprep.subr.mxu0 0.0
    %1893 = vmatpush1.xpose.msra.mxu0 0.0
    %1894 = vmatprep.subr.mxu0 0.0
    %1895 = vmatpush1.xpose.msra.mxu0 0.0
    %1896 = vmatprep.subr.mxu0 0.0
    %1897 = vmatpush1.xpose.msra.mxu0 0.0
    %1898 = vmatprep.subr.mxu0 0.0
    %1899 = vmatpush1.xpose.msra.mxu0 0.0
    %1900 = vmatprep.subr.mxu0 0.0
    %1901 = vmatpush1.xpose.msra.mxu0 0.0
    %1902 = vmatprep.subr.mxu0 0.0
    %1903 = vmatpush1.xpose.msra.mxu0 0.0
    %1904 = vmatprep.subr.mxu0 0.0
    %1905 = vmatpush1.xpose.msra.mxu0 0.0
    %1906 = vmatprep.subr.mxu0 0.0
    %1907 = vmatpush1.xpose.msra.mxu0 0.0
    %1908 = vmatprep.subr.mxu0 0.0
    %1909 = vmatpush1.xpose.msra.mxu0 0.0
    %1910 = vmatprep.subr.mxu0 0.0
    %1911 = vmatpush1.xpose.msra.mxu0 0.0
    %1912 = vmatprep.subr.mxu0 0.0
    %1913 = vmatpush1.xpose.msra.mxu0 0.0
    %1914 = vmatprep.subr.mxu0 0.0
    %1915 = vmatpush1.xpose.msra.mxu0 %v1884
    %1916 = vmatprep.subr.mxu0 0.0
    %1917 = vmatpush1.xpose.msra.mxu0 %v1882
    %1918 = vmatprep.subr.mxu0 0.0
    %1919 = vmatpush2.xpose.msra.mxu0 0.0
    %1920 = vmatprep.subr.mxu0 0.0
    %1921 = vmatpush2.xpose.msra.mxu0 0.0
    %1922 = vmatprep.subr.mxu0 0.0
    %1923 = vmatpush2.xpose.msra.mxu0 0.0
    %1924 = vmatprep.subr.mxu0 0.0
    %1925 = vmatpush2.xpose.msra.mxu0 0.0
    %1926 = vmatprep.subr.mxu0 0.0
    %1927 = vmatpush2.xpose.msra.mxu0 0.0
    %1928 = vmatprep.subr.mxu0 0.0
    %1929 = vmatpush2.xpose.msra.mxu0 0.0
    %1930 = vmatprep.subr.mxu0 0.0
    %1931 = vmatpush2.xpose.msra.mxu0 0.0
    %1932 = vmatprep.subr.mxu0 0.0
    %1933 = vmatpush2.xpose.msra.mxu0 0.0
    %1934 = vmatprep.subr.mxu0 0.0
    %1935 = vmatpush2.xpose.msra.mxu0 0.0
    %1936 = vmatprep.subr.mxu0 0.0
    %1937 = vmatpush2.xpose.msra.mxu0 0.0
    %1938 = vmatprep.subr.mxu0 0.0
    %1939 = vmatpush2.xpose.msra.mxu0 0.0
    %1940 = vmatprep.subr.mxu0 0.0
    %1941 = vmatpush2.xpose.msra.mxu0 0.0
    %1942 = vmatprep.subr.mxu0 0.0
    %1943 = vmatpush2.xpose.msra.mxu0 0.0
    %1944 = vmatprep.subr.mxu0 0.0
    %1945 = vmatpush2.xpose.msra.mxu0 0.0
    %1946 = vmatprep.subr.mxu0 0.0
    %1947 = vmatpush2.xpose.msra.mxu0 0.0
    %1948 = vmatprep.subr.mxu0 0.0
    %1949 = vmatpush2.xpose.msra.mxu0 0.0
    %1950 = vmatprep.mubr.f32.mxu0 0.0
    %1951 = vmatmul.mubr.f32.gmra.mxu0 %v1878
    %v1952 = vpop.f32.mrf.mxu0
    %v1953 = vadd.f32 %v154, %v1952
    %v1954 = vpop.f32.mrf.mxu0
    %1955 = vmatprep.mubr.f32.mxu0 0.0
    %1956 = vmatmul.mubr.f32.gmra.mxu0 %v1880
    %v1957 = vpop.f32.mrf.mxu0
    %v1958 = vadd.f32 %v155, %v1957
    %v1959 = vpop.f32.mrf.mxu0
    %1960 = vdwg.mxu0
    %v1961 = vsel %vm401, %v1953, -inf
    %1962 = vmax.xlane.f32.xlu0 %v1961
    %v1963 = vpop.xlane.xlu0 %1962
    %v1964 = vsel %vm401, %v1958, -inf
    %1965 = vmax.xlane.f32.xlu0 %v1964
    %v1966 = vpop.xlane.xlu0 %1965
    %v1967 = vsub.f32 %v1953, %v1963
    %v1968 = vsub.f32 %v1958, %v1966
    %v1969 = vmul.f32 %v1967, 1.442695
    %v1970 = vpow.pop %v1969
    %v1971 = vmul.f32 %v1968, 1.442695
    %v1972 = vpow.pop %v1971
    %v1973 = vsel %vm401, %v1970, 0.0
    %1974 = vadd.xlane.f32.xlu0 %v1973
    %v1975 = vpop.xlane.xlu0 %1974
    %v1976 = vsel %vm401, %v1972, 0.0
    %1977 = vadd.xlane.f32.xlu0 %v1976
    %v1978 = vpop.xlane.xlu0 %1977
    %v1979 = vrcp.pop %v1975
    %v1980 = vrcp.pop %v1978
    %v1981 = vmul.f32 %v1970, %v1979
    %v1982 = vmul.f32 %v1972, %v1980
    %1983 = vrot.lane.b32.xlu0 %v1461, 80
    %v1984 = vpop.permute.xlu0 %1983
    %1985 = vrot.lane.b32.xlu0 %v1466, 80
    %v1986 = vpop.permute.xlu0 %1985
    %v1990 = vsel %vm401, %v1981, 0
    %v1993 = vsel %vm401, %v1982, 0
    %1995 = vmatprep.subr.mxu0 0.0
    %1996 = vmatpush1.msra.mxu0 0.0
    %1997 = vmatprep.subr.mxu0 0.0
    %1998 = vmatpush1.msra.mxu0 0.0
    %1999 = vmatprep.subr.mxu0 0.0
    %2000 = vmatpush1.msra.mxu0 0.0
    %2001 = vmatprep.subr.mxu0 0.0
    %2002 = vmatpush1.msra.mxu0 0.0
    %2003 = vmatprep.subr.mxu0 0.0
    %2004 = vmatpush1.msra.mxu0 0.0
    %2005 = vmatprep.subr.mxu0 0.0
    %2006 = vmatpush1.msra.mxu0 0.0
    %2007 = vmatprep.subr.mxu0 0.0
    %2008 = vmatpush1.msra.mxu0 0.0
    %2009 = vmatprep.subr.mxu0 0.0
    %2010 = vmatpush1.msra.mxu0 0.0
    %2011 = vmatprep.subr.mxu0 0.0
    %2012 = vmatpush1.msra.mxu0 0.0
    %2013 = vmatprep.subr.mxu0 0.0
    %2014 = vmatpush1.msra.mxu0 0.0
    %2015 = vmatprep.subr.mxu0 0.0
    %2016 = vmatpush1.msra.mxu0 0.0
    %2017 = vmatprep.subr.mxu0 0.0
    %2018 = vmatpush1.msra.mxu0 0.0
    %2019 = vmatprep.subr.mxu0 0.0
    %2020 = vmatpush1.msra.mxu0 0.0
    %2021 = vmatprep.subr.mxu0 0.0
    %2022 = vmatpush1.msra.mxu0 0.0
    %2023 = vmatprep.subr.mxu0 0.0
    %2024 = vmatpush1.msra.mxu0 %v1986
    %2025 = vmatprep.subr.mxu0 0.0
    %2026 = vmatpush1.msra.mxu0 %v1984
    %2027 = vmatprep.subr.mxu0 0.0
    %2028 = vmatpush2.msra.mxu0 0.0
    %2029 = vmatprep.subr.mxu0 0.0
    %2030 = vmatpush2.msra.mxu0 0.0
    %2031 = vmatprep.subr.mxu0 0.0
    %2032 = vmatpush2.msra.mxu0 0.0
    %2033 = vmatprep.subr.mxu0 0.0
    %2034 = vmatpush2.msra.mxu0 0.0
    %2035 = vmatprep.subr.mxu0 0.0
    %2036 = vmatpush2.msra.mxu0 0.0
    %2037 = vmatprep.subr.mxu0 0.0
    %2038 = vmatpush2.msra.mxu0 0.0
    %2039 = vmatprep.subr.mxu0 0.0
    %2040 = vmatpush2.msra.mxu0 0.0
    %2041 = vmatprep.subr.mxu0 0.0
    %2042 = vmatpush2.msra.mxu0 0.0
    %2043 = vmatprep.subr.mxu0 0.0
    %2044 = vmatpush2.msra.mxu0 0.0
    %2045 = vmatprep.subr.mxu0 0.0
    %2046 = vmatpush2.msra.mxu0 0.0
    %2047 = vmatprep.subr.mxu0 0.0
    %2048 = vmatpush2.msra.mxu0 0.0
    %2049 = vmatprep.subr.mxu0 0.0
    %2050 = vmatpush2.msra.mxu0 0.0
    %2051 = vmatprep.subr.mxu0 0.0
    %2052 = vmatpush2.msra.mxu0 0.0
    %2053 = vmatprep.subr.mxu0 0.0
    %2054 = vmatpush2.msra.mxu0 0.0
    %2055 = vmatprep.subr.mxu0 0.0
    %2056 = vmatpush2.msra.mxu0 0.0
    %2057 = vmatprep.subr.mxu0 0.0
    %2058 = vmatpush2.msra.mxu0 0.0
    %2059 = vmatprep.mubr.f32.mxu0 0.0
    %2060 = vmatmul.mubr.f32.gmra.mxu0 %v1990
    %v2061 = vpop.f32.mrf.mxu0
    %v2062 = vadd.f32 0.0, %v2061
    %v2063 = vpop.f32.mrf.mxu0
    %2064 = vmatprep.mubr.f32.mxu0 0.0
    %2065 = vmatmul.mubr.f32.gmra.mxu0 %v1993
    %v2066 = vpop.f32.mrf.mxu0
    %v2067 = vadd.f32 0.0, %v2066
    %v2068 = vpop.f32.mrf.mxu0
    %2069 = vdwg.mxu0
    %2070 = vrot.lane.b32.xlu0 %v1369, 104
    %v2071 = vpop.permute.xlu0 %2070
    %2072 = vrot.lane.b32.xlu0 %v1374, 104
    %v2073 = vpop.permute.xlu0 %2072
    %2074 = vrot.lane.b32.xlu0 %v1461, 104
    %v2075 = vpop.permute.xlu0 %2074
    %2076 = vrot.lane.b32.xlu0 %v1466, 104
    %v2077 = vpop.permute.xlu0 %2076
    %v2078 = vsel %vm317, %v2071, 0
    %v2080 = vsel %vm317, %v2073, 0
    %v2082 = vsel %vm317, %v2075, 0
    %v2084 = vsel %vm317, %v2077, 0
    %2086 = vmatprep.subr.mxu0 0.0
    %2087 = vmatpush1.xpose.msra.mxu0 0.0
    %2088 = vmatprep.subr.mxu0 0.0
    %2089 = vmatpush1.xpose.msra.mxu0 0.0
    %2090 = vmatprep.subr.mxu0 0.0
    %2091 = vmatpush1.xpose.msra.mxu0 0.0
    %2092 = vmatprep.subr.mxu0 0.0
    %2093 = vmatpush1.xpose.msra.mxu0 0.0
    %2094 = vmatprep.subr.mxu0 0.0
    %2095 = vmatpush1.xpose.msra.mxu0 0.0
    %2096 = vmatprep.subr.mxu0 0.0
    %2097 = vmatpush1.xpose.msra.mxu0 0.0
    %2098 = vmatprep.subr.mxu0 0.0
    %2099 = vmatpush1.xpose.msra.mxu0 0.0
    %2100 = vmatprep.subr.mxu0 0.0
    %2101 = vmatpush1.xpose.msra.mxu0 0.0
    %2102 = vmatprep.subr.mxu0 0.0
    %2103 = vmatpush1.xpose.msra.mxu0 0.0
    %2104 = vmatprep.subr.mxu0 0.0
    %2105 = vmatpush1.xpose.msra.mxu0 0.0
    %2106 = vmatprep.subr.mxu0 0.0
    %2107 = vmatpush1.xpose.msra.mxu0 0.0
    %2108 = vmatprep.subr.mxu0 0.0
    %2109 = vmatpush1.xpose.msra.mxu0 0.0
    %2110 = vmatprep.subr.mxu0 0.0
    %2111 = vmatpush1.xpose.msra.mxu0 0.0
    %2112 = vmatprep.subr.mxu0 0.0
    %2113 = vmatpush1.xpose.msra.mxu0 0.0
    %2114 = vmatprep.subr.mxu0 0.0
    %2115 = vmatpush1.xpose.msra.mxu0 %v2084
    %2116 = vmatprep.subr.mxu0 0.0
    %2117 = vmatpush1.xpose.msra.mxu0 %v2082
    %2118 = vmatprep.subr.mxu0 0.0
    %2119 = vmatpush2.xpose.msra.mxu0 0.0
    %2120 = vmatprep.subr.mxu0 0.0
    %2121 = vmatpush2.xpose.msra.mxu0 0.0
    %2122 = vmatprep.subr.mxu0 0.0
    %2123 = vmatpush2.xpose.msra.mxu0 0.0
    %2124 = vmatprep.subr.mxu0 0.0
    %2125 = vmatpush2.xpose.msra.mxu0 0.0
    %2126 = vmatprep.subr.mxu0 0.0
    %2127 = vmatpush2.xpose.msra.mxu0 0.0
    %2128 = vmatprep.subr.mxu0 0.0
    %2129 = vmatpush2.xpose.msra.mxu0 0.0
    %2130 = vmatprep.subr.mxu0 0.0
    %2131 = vmatpush2.xpose.msra.mxu0 0.0
    %2132 = vmatprep.subr.mxu0 0.0
    %2133 = vmatpush2.xpose.msra.mxu0 0.0
    %2134 = vmatprep.subr.mxu0 0.0
    %2135 = vmatpush2.xpose.msra.mxu0 0.0
    %2136 = vmatprep.subr.mxu0 0.0
    %2137 = vmatpush2.xpose.msra.mxu0 0.0
    %2138 = vmatprep.subr.mxu0 0.0
    %2139 = vmatpush2.xpose.msra.mxu0 0.0
    %2140 = vmatprep.subr.mxu0 0.0
    %2141 = vmatpush2.xpose.msra.mxu0 0.0
    %2142 = vmatprep.subr.mxu0 0.0
    %2143 = vmatpush2.xpose.msra.mxu0 0.0
    %2144 = vmatprep.subr.mxu0 0.0
    %2145 = vmatpush2.xpose.msra.mxu0 0.0
    %2146 = vmatprep.subr.mxu0 0.0
    %2147 = vmatpush2.xpose.msra.mxu0 0.0
    %2148 = vmatprep.subr.mxu0 0.0
    %2149 = vmatpush2.xpose.msra.mxu0 0.0
    %2150 = vmatprep.mubr.f32.mxu0 0.0
    %2151 = vmatmul.mubr.f32.gmra.mxu0 %v2078
    %v2152 = vpop.f32.mrf.mxu0
    %v2153 = vadd.f32 %v154, %v2152
    %v2154 = vpop.f32.mrf.mxu0
    %2155 = vmatprep.mubr.f32.mxu0 0.0
    %2156 = vmatmul.mubr.f32.gmra.mxu0 %v2080
    %v2157 = vpop.f32.mrf.mxu0
    %v2158 = vadd.f32 %v155, %v2157
    %v2159 = vpop.f32.mrf.mxu0
    %2160 = vdwg.mxu0
    %v2161 = vsel %vm401, %v2153, -inf
    %2162 = vmax.xlane.f32.xlu0 %v2161
    %v2163 = vpop.xlane.xlu0 %2162
    %v2164 = vsel %vm401, %v2158, -inf
    %2165 = vmax.xlane.f32.xlu0 %v2164
    %v2166 = vpop.xlane.xlu0 %2165
    %v2167 = vsub.f32 %v2153, %v2163
    %v2168 = vsub.f32 %v2158, %v2166
    %v2169 = vmul.f32 %v2167, 1.442695
    %v2170 = vpow.pop %v2169
    %v2171 = vmul.f32 %v2168, 1.442695
    %v2172 = vpow.pop %v2171
    %v2173 = vsel %vm401, %v2170, 0.0
    %2174 = vadd.xlane.f32.xlu0 %v2173
    %v2175 = vpop.xlane.xlu0 %2174
    %v2176 = vsel %vm401, %v2172, 0.0
    %2177 = vadd.xlane.f32.xlu0 %v2176
    %v2178 = vpop.xlane.xlu0 %2177
    %v2179 = vrcp.pop %v2175
    %v2180 = vrcp.pop %v2178
    %v2181 = vmul.f32 %v2170, %v2179
    %v2182 = vmul.f32 %v2172, %v2180
    %2183 = vrot.lane.b32.xlu0 %v1461, 72
    %v2184 = vpop.permute.xlu0 %2183
    %2185 = vrot.lane.b32.xlu0 %v1466, 72
    %v2186 = vpop.permute.xlu0 %2185
    %v2190 = vsel %vm401, %v2181, 0
    %v2193 = vsel %vm401, %v2182, 0
    %2195 = vmatprep.subr.mxu0 0.0
    %2196 = vmatpush1.msra.mxu0 0.0
    %2197 = vmatprep.subr.mxu0 0.0
    %2198 = vmatpush1.msra.mxu0 0.0
    %2199 = vmatprep.subr.mxu0 0.0
    %2200 = vmatpush1.msra.mxu0 0.0
    %2201 = vmatprep.subr.mxu0 0.0
    %2202 = vmatpush1.msra.mxu0 0.0
    %2203 = vmatprep.subr.mxu0 0.0
    %2204 = vmatpush1.msra.mxu0 0.0
    %2205 = vmatprep.subr.mxu0 0.0
    %2206 = vmatpush1.msra.mxu0 0.0
    %2207 = vmatprep.subr.mxu0 0.0
    %2208 = vmatpush1.msra.mxu0 0.0
    %2209 = vmatprep.subr.mxu0 0.0
    %2210 = vmatpush1.msra.mxu0 0.0
    %2211 = vmatprep.subr.mxu0 0.0
    %2212 = vmatpush1.msra.mxu0 0.0
    %2213 = vmatprep.subr.mxu0 0.0
    %2214 = vmatpush1.msra.mxu0 0.0
    %2215 = vmatprep.subr.mxu0 0.0
    %2216 = vmatpush1.msra.mxu0 0.0
    %2217 = vmatprep.subr.mxu0 0.0
    %2218 = vmatpush1.msra.mxu0 0.0
    %2219 = vmatprep.subr.mxu0 0.0
    %2220 = vmatpush1.msra.mxu0 0.0
    %2221 = vmatprep.subr.mxu0 0.0
    %2222 = vmatpush1.msra.mxu0 0.0
    %2223 = vmatprep.subr.mxu0 0.0
    %2224 = vmatpush1.msra.mxu0 %v2186
    %2225 = vmatprep.subr.mxu0 0.0
    %2226 = vmatpush1.msra.mxu0 %v2184
    %2227 = vmatprep.subr.mxu0 0.0
    %2228 = vmatpush2.msra.mxu0 0.0
    %2229 = vmatprep.subr.mxu0 0.0
    %2230 = vmatpush2.msra.mxu0 0.0
    %2231 = vmatprep.subr.mxu0 0.0
    %2232 = vmatpush2.msra.mxu0 0.0
    %2233 = vmatprep.subr.mxu0 0.0
    %2234 = vmatpush2.msra.mxu0 0.0
    %2235 = vmatprep.subr.mxu0 0.0
    %2236 = vmatpush2.msra.mxu0 0.0
    %2237 = vmatprep.subr.mxu0 0.0
    %2238 = vmatpush2.msra.mxu0 0.0
    %2239 = vmatprep.subr.mxu0 0.0
    %2240 = vmatpush2.msra.mxu0 0.0
    %2241 = vmatprep.subr.mxu0 0.0
    %2242 = vmatpush2.msra.mxu0 0.0
    %2243 = vmatprep.subr.mxu0 0.0
    %2244 = vmatpush2.msra.mxu0 0.0
    %2245 = vmatprep.subr.mxu0 0.0
    %2246 = vmatpush2.msra.mxu0 0.0
    %2247 = vmatprep.subr.mxu0 0.0
    %2248 = vmatpush2.msra.mxu0 0.0
    %2249 = vmatprep.subr.mxu0 0.0
    %2250 = vmatpush2.msra.mxu0 0.0
    %2251 = vmatprep.subr.mxu0 0.0
    %2252 = vmatpush2.msra.mxu0 0.0
    %2253 = vmatprep.subr.mxu0 0.0
    %2254 = vmatpush2.msra.mxu0 0.0
    %2255 = vmatprep.subr.mxu0 0.0
    %2256 = vmatpush2.msra.mxu0 0.0
    %2257 = vmatprep.subr.mxu0 0.0
    %2258 = vmatpush2.msra.mxu0 0.0
    %2259 = vmatprep.mubr.f32.mxu0 0.0
    %2260 = vmatmul.mubr.f32.gmra.mxu0 %v2190
    %v2261 = vpop.f32.mrf.mxu0
    %v2262 = vadd.f32 0.0, %v2261
    %v2263 = vpop.f32.mrf.mxu0
    %2264 = vmatprep.mubr.f32.mxu0 0.0
    %2265 = vmatmul.mubr.f32.gmra.mxu0 %v2193
    %v2266 = vpop.f32.mrf.mxu0
    %v2267 = vadd.f32 0.0, %v2266
    %v2268 = vpop.f32.mrf.mxu0
    %2269 = vdwg.mxu0
    %2272 = vrot.lane.b32.xlu0 %v1862, 8
    %v2273 = vpop.permute.xlu0 %2272
    %2274 = vrot.lane.b32.xlu0 %v1867, 8
    %v2275 = vpop.permute.xlu0 %2274
    %2280 = vrot.lane.b32.xlu0 %v2062, 16
    %v2281 = vpop.permute.xlu0 %2280
    %2282 = vrot.lane.b32.xlu0 %v2067, 16
    %v2283 = vpop.permute.xlu0 %2282
    %2288 = vrot.lane.b32.xlu0 %v2262, 24
    %v2289 = vpop.permute.xlu0 %2288
    %2290 = vrot.lane.b32.xlu0 %v2267, 24
    %v2291 = vpop.permute.xlu0 %2290
    %v2294 = vsel %vm317, %v1662, %v2273
    %v2295 = vsel %vm317, %v1667, %v2275
    %v2296 = vsel %vm401, %v2294, %v2281
    %v2297 = vsel %vm401, %v2295, %v2283
    %v2298 = vsel %vm1139, %v2296, %v2289
    %v2299 = vsel %vm1139, %v2297, %v2291
    %v2301 = vlaneseq
    %v2302 = vshrl.u32 %v2301, 7
    %v2303 = vsub.s32 0, %v2302
    %v2304 = vrot.slane %v1473, %v2303
    %v2307 = vsel %vm158, %v2298, 0
    %v2310 = vsel %vm158, %v2299, 0
    %2312 = vmatprep.subr.mxu0 0.0
    %2313 = vmatpush1.msra.mxu0 0.0
    %2314 = vmatprep.subr.mxu0 0.0
    %2315 = vmatpush1.msra.mxu0 0.0
    %2316 = vmatprep.subr.mxu0 0.0
    %2317 = vmatpush1.msra.mxu0 0.0
    %2318 = vmatprep.subr.mxu0 0.0
    %2319 = vmatpush1.msra.mxu0 0.0
    %2320 = vmatprep.subr.mxu0 0.0
    %2321 = vmatpush1.msra.mxu0 0.0
    %2322 = vmatprep.subr.mxu0 0.0
    %2323 = vmatpush1.msra.mxu0 0.0
    %2324 = vmatprep.subr.mxu0 0.0
    %2325 = vmatpush1.msra.mxu0 0.0
    %2326 = vmatprep.subr.mxu0 0.0
    %2327 = vmatpush1.msra.mxu0 0.0
    %2328 = vmatprep.subr.mxu0 0.0
    %2329 = vmatpush1.msra.mxu0 0.0
    %2330 = vmatprep.subr.mxu0 0.0
    %2331 = vmatpush1.msra.mxu0 0.0
    %2332 = vmatprep.subr.mxu0 0.0
    %2333 = vmatpush1.msra.mxu0 0.0
    %2334 = vmatprep.subr.mxu0 0.0
    %2335 = vmatpush1.msra.mxu0 0.0
    %2336 = vmatprep.subr.mxu0 0.0
    %2337 = vmatpush1.msra.mxu0 %v1472
    %2338 = vmatprep.subr.mxu0 0.0
    %2339 = vmatpush1.msra.mxu0 %v1471
    %2340 = vmatprep.subr.mxu0 0.0
    %2341 = vmatpush1.msra.mxu0 %v1470
    %2342 = vmatprep.subr.mxu0 0.0
    %2343 = vmatpush1.msra.mxu0 %v1469
    %2344 = vmatprep.subr.mxu0 0.0
    %2345 = vmatpush2.msra.mxu0 0.0
    %2346 = vmatprep.subr.mxu0 0.0
    %2347 = vmatpush2.msra.mxu0 0.0
    %2348 = vmatprep.subr.mxu0 0.0
    %2349 = vmatpush2.msra.mxu0 0.0
    %2350 = vmatprep.subr.mxu0 0.0
    %2351 = vmatpush2.msra.mxu0 0.0
    %2352 = vmatprep.subr.mxu0 0.0
    %2353 = vmatpush2.msra.mxu0 0.0
    %2354 = vmatprep.subr.mxu0 0.0
    %2355 = vmatpush2.msra.mxu0 0.0
    %2356 = vmatprep.subr.mxu0 0.0
    %2357 = vmatpush2.msra.mxu0 0.0
    %2358 = vmatprep.subr.mxu0 0.0
    %2359 = vmatpush2.msra.mxu0 0.0
    %2360 = vmatprep.subr.mxu0 0.0
    %2361 = vmatpush2.msra.mxu0 0.0
    %2362 = vmatprep.subr.mxu0 0.0
    %2363 = vmatpush2.msra.mxu0 0.0
    %2364 = vmatprep.subr.mxu0 0.0
    %2365 = vmatpush2.msra.mxu0 0.0
    %2366 = vmatprep.subr.mxu0 0.0
    %2367 = vmatpush2.msra.mxu0 0.0
    %2368 = vmatprep.subr.mxu0 0.0
    %2369 = vmatpush2.msra.mxu0 0.0
    %2370 = vmatprep.subr.mxu0 0.0
    %2371 = vmatpush2.msra.mxu0 0.0
    %2372 = vmatprep.subr.mxu0 0.0
    %2373 = vmatpush2.msra.mxu0 0.0
    %2374 = vmatprep.subr.mxu0 0.0
    %2375 = vmatpush2.msra.mxu0 0.0
    %2376 = vmatprep.mubr.f32.mxu0 0.0
    %2377 = vmatmul.mubr.f32.gmra.mxu0 %v2307
    %v2378 = vpop.f32.mrf.mxu0
    %v2379 = vadd.f32 %v2304, %v2378
    %v2380 = vpop.f32.mrf.mxu0
    %2381 = vmatprep.mubr.f32.mxu0 0.0
    %2382 = vmatmul.mubr.f32.gmra.mxu0 %v2310
    %v2383 = vpop.f32.mrf.mxu0
    %v2384 = vadd.f32 %v2304, %v2383
    %v2385 = vpop.f32.mrf.mxu0
    %2386 = vdwg.mxu0
    %v2387 = vadd.f32 %v1229, %v2379
    %v2388 = vadd.f32 %v1230, %v2384
    %v2389 = vsel %vm158, %v2387, 0.0
    %2390 = vadd.xlane.f32.xlu0 %v2389
    %v2391 = vpop.xlane.xlu0 %2390
    %v2392 = vsel %vm158, %v2388, 0.0
    %2393 = vadd.xlane.f32.xlu0 %v2392
    %v2394 = vpop.xlane.xlu0 %2393
    %v2395 = vmul.f32 %v2391, %v165
    %v2396 = vmul.f32 %v2394, %v165
    %v2397 = vsub.f32 %v2387, %v2395
    %v2398 = vsub.f32 %v2388, %v2396
    %v2399 = vmul.f32 %v2397, %v2397
    %v2400 = vmul.f32 %v2398, %v2398
    %v2401 = vsel %vm158, %v2399, 0.0
    %2402 = vadd.xlane.f32.xlu0 %v2401
    %v2403 = vpop.xlane.xlu0 %2402
    %v2404 = vsel %vm158, %v2400, 0.0
    %2405 = vadd.xlane.f32.xlu0 %v2404
    %v2406 = vpop.xlane.xlu0 %2405
    %v2407 = vmul.f32 %v2403, %v165
    %v2408 = vmul.f32 %v2406, %v165
    %v2409 = vmul.f32 %v2407, 1.032258
    %v2410 = vmul.f32 %v2408, 1.032258
    %v2411 = vrsqrt.pop %v2409
    %v2412 = vmul.f32 %v2409, %v2411
    %vm2413 = vcmp.eq.f32.partialorder %v2409, inf
    %v2414 = vsel %vm2413, %v2409, %v2412
    %vm2415 = vcmp.eq.f32.partialorder %v2409, 0.0
    %v2416 = vand.u32 %v2409, 2147483648
    %v2417 = vsel %vm2415, %v2416, %v2414
    %v2418 = vrsqrt.pop %v2410
    %v2419 = vmul.f32 %v2410, %v2418
    %vm2420 = vcmp.eq.f32.partialorder %v2410, inf
    %v2421 = vsel %vm2420, %v2410, %v2419
    %vm2422 = vcmp.eq.f32.partialorder %v2410, 0.0
    %v2423 = vand.u32 %v2410, 2147483648
    %v2424 = vsel %vm2422, %v2423, %v2421
    %v2425 = vlaneseq
    %v2426 = vshrl.u32 %v2425, 7
    %v2427 = vsub.s32 2, %v2426
    %v2428 = vrot.slane %v156, %v2427
    %v2429 = vmul.f32 %v2428, %v2397
    %v2430 = vmul.f32 %v2428, %v2398
    %v2431 = vadd.f32 %v2417, 1e-06
    %v2432 = vadd.f32 %v2424, 1e-06
    %v2433 = vrcp.pop %v2431
    %v2434 = vrcp.pop %v2432
    %v2435 = vmul.f32 %v2429, %v2433
    %v2436 = vmul.f32 %v2430, %v2434
    %v2437 = vlaneseq
    %v2438 = vshrl.u32 %v2437, 7
    %v2439 = vsub.s32 2, %v2438
    %v2440 = vrot.slane %v157, %v2439
    %v2441 = vadd.f32 %v2435, %v2440
    %v2442 = vadd.f32 %v2436, %v2440
    %v2443 = vld [vmem:[#allocation11] sm:$0xff]
    %v2444 = vld [vmem:[#allocation11 + $0x8] sm:$0xff]
    %v2445 = vld [vmem:[#allocation11 + $0x10] sm:$0xff]
    %v2446 = vld [vmem:[#allocation11 + $0x18] sm:$0xff]
    %v2447 = vld [vmem:[%s15] sm:$0x1]
    %v2449 = vlaneseq
    %v2450 = vshrl.u32 %v2449, 7
    %v2451 = vsub.s32 0, %v2450
    %v2452 = vrot.slane %v2447, %v2451
    %v2455 = vsel %vm158, %v2441, 0
    %v2458 = vsel %vm158, %v2442, 0
    %2460 = vmatprep.subr.mxu0 0.0
    %2461 = vmatpush1.msra.mxu0 0.0
    %2462 = vmatprep.subr.mxu0 0.0
    %2463 = vmatpush1.msra.mxu0 0.0
    %2464 = vmatprep.subr.mxu0 0.0
    %2465 = vmatpush1.msra.mxu0 0.0
    %2466 = vmatprep.subr.mxu0 0.0
    %2467 = vmatpush1.msra.mxu0 0.0
    %2468 = vmatprep.subr.mxu0 0.0
    %2469 = vmatpush1.msra.mxu0 0.0
    %2470 = vmatprep.subr.mxu0 0.0
    %2471 = vmatpush1.msra.mxu0 0.0
    %2472 = vmatprep.subr.mxu0 0.0
    %2473 = vmatpush1.msra.mxu0 0.0
    %2474 = vmatprep.subr.mxu0 0.0
    %2475 = vmatpush1.msra.mxu0 0.0
    %2476 = vmatprep.subr.mxu0 0.0
    %2477 = vmatpush1.msra.mxu0 0.0
    %2478 = vmatprep.subr.mxu0 0.0
    %2479 = vmatpush1.msra.mxu0 0.0
    %2480 = vmatprep.subr.mxu0 0.0
    %2481 = vmatpush1.msra.mxu0 0.0
    %2482 = vmatprep.subr.mxu0 0.0
    %2483 = vmatpush1.msra.mxu0 0.0
    %2484 = vmatprep.subr.mxu0 0.0
    %2485 = vmatpush1.msra.mxu0 %v2446
    %2486 = vmatprep.subr.mxu0 0.0
    %2487 = vmatpush1.msra.mxu0 %v2445
    %2488 = vmatprep.subr.mxu0 0.0
    %2489 = vmatpush1.msra.mxu0 %v2444
    %2490 = vmatprep.subr.mxu0 0.0
    %2491 = vmatpush1.msra.mxu0 %v2443
    %2492 = vmatprep.subr.mxu0 0.0
    %2493 = vmatpush2.msra.mxu0 0.0
    %2494 = vmatprep.subr.mxu0 0.0
    %2495 = vmatpush2.msra.mxu0 0.0
    %2496 = vmatprep.subr.mxu0 0.0
    %2497 = vmatpush2.msra.mxu0 0.0
    %2498 = vmatprep.subr.mxu0 0.0
    %2499 = vmatpush2.msra.mxu0 0.0
    %2500 = vmatprep.subr.mxu0 0.0
    %2501 = vmatpush2.msra.mxu0 0.0
    %2502 = vmatprep.subr.mxu0 0.0
    %2503 = vmatpush2.msra.mxu0 0.0
    %2504 = vmatprep.subr.mxu0 0.0
    %2505 = vmatpush2.msra.mxu0 0.0
    %2506 = vmatprep.subr.mxu0 0.0
    %2507 = vmatpush2.msra.mxu0 0.0
    %2508 = vmatprep.subr.mxu0 0.0
    %2509 = vmatpush2.msra.mxu0 0.0
    %2510 = vmatprep.subr.mxu0 0.0
    %2511 = vmatpush2.msra.mxu0 0.0
    %2512 = vmatprep.subr.mxu0 0.0
    %2513 = vmatpush2.msra.mxu0 0.0
    %2514 = vmatprep.subr.mxu0 0.0
    %2515 = vmatpush2.msra.mxu0 0.0
    %2516 = vmatprep.subr.mxu0 0.0
    %2517 = vmatpush2.msra.mxu0 0.0
    %2518 = vmatprep.subr.mxu0 0.0
    %2519 = vmatpush2.msra.mxu0 0.0
    %2520 = vmatprep.subr.mxu0 0.0
    %2521 = vmatpush2.msra.mxu0 0.0
    %2522 = vmatprep.subr.mxu0 0.0
    %2523 = vmatpush2.msra.mxu0 0.0
    %2524 = vmatprep.mubr.f32.mxu0 0.0
    %2525 = vmatmul.mubr.f32.gmra.mxu0 %v2455
    %v2526 = vpop.f32.mrf.mxu0
    %v2527 = vadd.f32 %v2452, %v2526
    %v2528 = vpop.f32.mrf.mxu0
    %2529 = vmatprep.mubr.f32.mxu0 0.0
    %2530 = vmatmul.mubr.f32.gmra.mxu0 %v2458
    %v2531 = vpop.f32.mrf.mxu0
    %v2532 = vadd.f32 %v2452, %v2531
    %v2533 = vpop.f32.mrf.mxu0
    %2534 = vdwg.mxu0
    %v2535 = vmax.f32 %v2527, 0.0
    %v2536 = vmax.f32 %v2532, 0.0
    %v2537 = vld [vmem:[%s16] sm:$0xff]
    %v2538 = vld [vmem:[%s16 + $0x8] sm:$0xff]
    %v2539 = vld [vmem:[%s16 + $0x10] sm:$0xff]
    %v2540 = vld [vmem:[%s16 + $0x18] sm:$0xff]
    %v2541 = vld [vmem:[%s16 + $0x20] sm:$0xff]
    %v2542 = vld [vmem:[%s16 + $0x28] sm:$0xff]
    %v2543 = vld [vmem:[%s16 + $0x30] sm:$0xff]
    %v2544 = vld [vmem:[%s16 + $0x38] sm:$0xff]
    %vm2545 = vcmask 523264
    %v2547 = vsel %vm2545, %v2535, 0
    %v2550 = vsel %vm2545, %v2536, 0
    %2552 = vmatprep.subr.mxu0 0.0
    %2553 = vmatpush1.msra.mxu0 0.0
    %2554 = vmatprep.subr.mxu0 0.0
    %2555 = vmatpush1.msra.mxu0 0.0
    %2556 = vmatprep.subr.mxu0 0.0
    %2557 = vmatpush1.msra.mxu0 0.0
    %2558 = vmatprep.subr.mxu0 0.0
    %2559 = vmatpush1.msra.mxu0 0.0
    %2560 = vmatprep.subr.mxu0 0.0
    %2561 = vmatpush1.msra.mxu0 0.0
    %2562 = vmatprep.subr.mxu0 0.0
    %2563 = vmatpush1.msra.mxu0 0.0
    %2564 = vmatprep.subr.mxu0 0.0
    %2565 = vmatpush1.msra.mxu0 0.0
    %2566 = vmatprep.subr.mxu0 0.0
    %2567 = vmatpush1.msra.mxu0 0.0
    %2568 = vmatprep.subr.mxu0 0.0
    %2569 = vmatpush1.msra.mxu0 %v2544
    %2570 = vmatprep.subr.mxu0 0.0
    %2571 = vmatpush1.msra.mxu0 %v2543
    %2572 = vmatprep.subr.mxu0 0.0
    %2573 = vmatpush1.msra.mxu0 %v2542
    %2574 = vmatprep.subr.mxu0 0.0
    %2575 = vmatpush1.msra.mxu0 %v2541
    %2576 = vmatprep.subr.mxu0 0.0
    %2577 = vmatpush1.msra.mxu0 %v2540
    %2578 = vmatprep.subr.mxu0 0.0
    %2579 = vmatpush1.msra.mxu0 %v2539
    %2580 = vmatprep.subr.mxu0 0.0
    %2581 = vmatpush1.msra.mxu0 %v2538
    %2582 = vmatprep.subr.mxu0 0.0
    %2583 = vmatpush1.msra.mxu0 %v2537
    %2584 = vmatprep.subr.mxu0 0.0
    %2585 = vmatpush2.msra.mxu0 0.0
    %2586 = vmatprep.subr.mxu0 0.0
    %2587 = vmatpush2.msra.mxu0 0.0
    %2588 = vmatprep.subr.mxu0 0.0
    %2589 = vmatpush2.msra.mxu0 0.0
    %2590 = vmatprep.subr.mxu0 0.0
    %2591 = vmatpush2.msra.mxu0 0.0
    %2592 = vmatprep.subr.mxu0 0.0
    %2593 = vmatpush2.msra.mxu0 0.0
    %2594 = vmatprep.subr.mxu0 0.0
    %2595 = vmatpush2.msra.mxu0 0.0
    %2596 = vmatprep.subr.mxu0 0.0
    %2597 = vmatpush2.msra.mxu0 0.0
    %2598 = vmatprep.subr.mxu0 0.0
    %2599 = vmatpush2.msra.mxu0 0.0
    %2600 = vmatprep.subr.mxu0 0.0
    %2601 = vmatpush2.msra.mxu0 0.0
    %2602 = vmatprep.subr.mxu0 0.0
    %2603 = vmatpush2.msra.mxu0 0.0
    %2604 = vmatprep.subr.mxu0 0.0
    %2605 = vmatpush2.msra.mxu0 0.0
    %2606 = vmatprep.subr.mxu0 0.0
    %2607 = vmatpush2.msra.mxu0 0.0
    %2608 = vmatprep.subr.mxu0 0.0
    %2609 = vmatpush2.msra.mxu0 0.0
    %2610 = vmatprep.subr.mxu0 0.0
    %2611 = vmatpush2.msra.mxu0 0.0
    %2612 = vmatprep.subr.mxu0 0.0
    %2613 = vmatpush2.msra.mxu0 0.0
    %2614 = vmatprep.subr.mxu0 0.0
    %2615 = vmatpush2.msra.mxu0 0.0
    %2616 = vmatprep.mubr.f32.mxu0 0.0
    %2617 = vmatmul.mubr.f32.gmra.mxu0 %v2547
    %v2618 = vpop.f32.mrf.mxu0
    %v2619 = vadd.f32 0.0, %v2618
    %v2620 = vpop.f32.mrf.mxu0
    %2621 = vmatprep.mubr.f32.mxu0 0.0
    %2622 = vmatmul.mubr.f32.gmra.mxu0 %v2550
    %v2623 = vpop.f32.mrf.mxu0
    %v2624 = vadd.f32 0.0, %v2623
    %v2625 = vpop.f32.mrf.mxu0
    %2626 = vdwg.mxu0
    %v2627 = vadd.f32 %v2387, %v2619
    %v2628 = vadd.f32 %v2388, %v2624
    %v2629 = vld [vmem:[%s17] sm:$0x1]
    %v2631 = vlaneseq
    %v2632 = vshrl.u32 %v2631, 7
    %v2633 = vsub.s32 0, %v2632
    %v2634 = vrot.slane %v2629, %v2633
    %v2636 = vadd.f32 %v2627, %v2634
    %v2637 = vadd.f32 %v2628, %v2634
    %s2638 = scalar_lea.vmem %s18, 4
    %v2639 = vld [vmem:[%s2638] sm:$0x7]
    %s2640 = scalar_lea.vmem %s19, 4
    %v2641 = vld [vmem:[%s2640] sm:$0x7]
    %v2642 = vsel %vm158, %v2636, 0.0
    %2643 = vadd.xlane.f32.xlu0 %v2642
    %v2644 = vpop.xlane.xlu0 %2643
    %v2645 = vsel %vm158, %v2637, 0.0
    %2646 = vadd.xlane.f32.xlu0 %v2645
    %v2647 = vpop.xlane.xlu0 %2646
    %v2648 = vmul.f32 %v2644, %v165
    %v2649 = vmul.f32 %v2647, %v165
    %v2650 = vsub.f32 %v2636, %v2648
    %v2651 = vsub.f32 %v2637, %v2649
    %v2652 = vmul.f32 %v2650, %v2650
    %v2653 = vmul.f32 %v2651, %v2651
    %v2654 = vsel %vm158, %v2652, 0.0
    %2655 = vadd.xlane.f32.xlu0 %v2654
    %v2656 = vpop.xlane.xlu0 %2655
    %v2657 = vsel %vm158, %v2653, 0.0
    %2658 = vadd.xlane.f32.xlu0 %v2657
    %v2659 = vpop.xlane.xlu0 %2658
    %v2660 = vmul.f32 %v2656, %v165
    %v2661 = vmul.f32 %v2659, %v165
    %v2662 = vmul.f32 %v2660, 1.032258
    %v2663 = vmul.f32 %v2661, 1.032258
    %v2664 = vrsqrt.pop %v2662
    %v2665 = vmul.f32 %v2662, %v2664
    %vm2666 = vcmp.eq.f32.partialorder %v2662, inf
    %v2667 = vsel %vm2666, %v2662, %v2665
    %vm2668 = vcmp.eq.f32.partialorder %v2662, 0.0
    %v2669 = vand.u32 %v2662, 2147483648
    %v2670 = vsel %vm2668, %v2669, %v2667
    %v2671 = vrsqrt.pop %v2663
    %v2672 = vmul.f32 %v2663, %v2671
    %vm2673 = vcmp.eq.f32.partialorder %v2663, inf
    %v2674 = vsel %vm2673, %v2663, %v2672
    %vm2675 = vcmp.eq.f32.partialorder %v2663, 0.0
    %v2676 = vand.u32 %v2663, 2147483648
    %v2677 = vsel %vm2675, %v2676, %v2674
    %v2678 = vlaneseq
    %v2679 = vshrl.u32 %v2678, 7
    %v2680 = vsub.s32 0, %v2679
    %v2681 = vrot.slane %v2639, %v2680
    %v2682 = vmul.f32 %v2681, %v2650
    %v2683 = vmul.f32 %v2681, %v2651
    %v2684 = vadd.f32 %v2670, 1e-06
    %v2685 = vadd.f32 %v2677, 1e-06
    %v2686 = vrcp.pop %v2684
    %v2687 = vrcp.pop %v2685
    %v2688 = vmul.f32 %v2682, %v2686
    %v2689 = vmul.f32 %v2683, %v2687
    %v2690 = vlaneseq
    %v2691 = vshrl.u32 %v2690, 7
    %v2692 = vsub.s32 0, %v2691
    %v2693 = vrot.slane %v2641, %v2692
    %v2694 = vadd.f32 %v2688, %v2693
    %v2695 = vadd.f32 %v2689, %v2693
    %s2696 = scalar_lea.vmem %s4, 32
    %v2697 = vld [vmem:[%s2696] sm:$0xff]
    %v2698 = vld [vmem:[%s2696 + $0x8] sm:$0xff]
    %v2699 = vld [vmem:[%s2696 + $0x10] sm:$0xff]
    %v2700 = vld [vmem:[%s2696 + $0x18] sm:$0xff]
    %s2701 = scalar_lea.vmem %s5, 1
    %v2702 = vld [vmem:[%s2701] sm:$0x1]
    %v2704 = vlaneseq
    %v2705 = vshrl.u32 %v2704, 7
    %v2706 = vsub.s32 0, %v2705
    %v2707 = vrot.slane %v2702, %v2706
    %v2710 = vsel %vm158, %v2694, 0
    %v2713 = vsel %vm158, %v2695, 0
    %2715 = vmatprep.subr.mxu0 0.0
    %2716 = vmatpush1.msra.mxu0 0.0
    %2717 = vmatprep.subr.mxu0 0.0
    %2718 = vmatpush1.msra.mxu0 0.0
    %2719 = vmatprep.subr.mxu0 0.0
    %2720 = vmatpush1.msra.mxu0 0.0
    %2721 = vmatprep.subr.mxu0 0.0
    %2722 = vmatpush1.msra.mxu0 0.0
    %2723 = vmatprep.subr.mxu0 0.0
    %2724 = vmatpush1.msra.mxu0 0.0
    %2725 = vmatprep.subr.mxu0 0.0
    %2726 = vmatpush1.msra.mxu0 0.0
    %2727 = vmatprep.subr.mxu0 0.0
    %2728 = vmatpush1.msra.mxu0 0.0
    %2729 = vmatprep.subr.mxu0 0.0
    %2730 = vmatpush1.msra.mxu0 0.0
    %2731 = vmatprep.subr.mxu0 0.0
    %2732 = vmatpush1.msra.mxu0 0.0
    %2733 = vmatprep.subr.mxu0 0.0
    %2734 = vmatpush1.msra.mxu0 0.0
    %2735 = vmatprep.subr.mxu0 0.0
    %2736 = vmatpush1.msra.mxu0 0.0
    %2737 = vmatprep.subr.mxu0 0.0
    %2738 = vmatpush1.msra.mxu0 0.0
    %2739 = vmatprep.subr.mxu0 0.0
    %2740 = vmatpush1.msra.mxu0 %v2700
    %2741 = vmatprep.subr.mxu0 0.0
    %2742 = vmatpush1.msra.mxu0 %v2699
    %2743 = vmatprep.subr.mxu0 0.0
    %2744 = vmatpush1.msra.mxu0 %v2698
    %2745 = vmatprep.subr.mxu0 0.0
    %2746 = vmatpush1.msra.mxu0 %v2697
    %2747 = vmatprep.subr.mxu0 0.0
    %2748 = vmatpush2.msra.mxu0 0.0
    %2749 = vmatprep.subr.mxu0 0.0
    %2750 = vmatpush2.msra.mxu0 0.0
    %2751 = vmatprep.subr.mxu0 0.0
    %2752 = vmatpush2.msra.mxu0 0.0
    %2753 = vmatprep.subr.mxu0 0.0
    %2754 = vmatpush2.msra.mxu0 0.0
    %2755 = vmatprep.subr.mxu0 0.0
    %2756 = vmatpush2.msra.mxu0 0.0
    %2757 = vmatprep.subr.mxu0 0.0
    %2758 = vmatpush2.msra.mxu0 0.0
    %2759 = vmatprep.subr.mxu0 0.0
    %2760 = vmatpush2.msra.mxu0 0.0
    %2761 = vmatprep.subr.mxu0 0.0
    %2762 = vmatpush2.msra.mxu0 0.0
    %2763 = vmatprep.subr.mxu0 0.0
    %2764 = vmatpush2.msra.mxu0 0.0
    %2765 = vmatprep.subr.mxu0 0.0
    %2766 = vmatpush2.msra.mxu0 0.0
    %2767 = vmatprep.subr.mxu0 0.0
    %2768 = vmatpush2.msra.mxu0 0.0
    %2769 = vmatprep.subr.mxu0 0.0
    %2770 = vmatpush2.msra.mxu0 0.0
    %2771 = vmatprep.subr.mxu0 0.0
    %2772 = vmatpush2.msra.mxu0 0.0
    %2773 = vmatprep.subr.mxu0 0.0
    %2774 = vmatpush2.msra.mxu0 0.0
    %2775 = vmatprep.subr.mxu0 0.0
    %2776 = vmatpush2.msra.mxu0 0.0
    %2777 = vmatprep.subr.mxu0 0.0
    %2778 = vmatpush2.msra.mxu0 0.0
    %2779 = vmatprep.mubr.f32.mxu0 0.0
    %2780 = vmatmul.mubr.f32.gmra.mxu0 %v2710
    %v2781 = vpop.f32.mrf.mxu0
    %v2782 = vadd.f32 %v2707, %v2781
    %v2783 = vpop.f32.mrf.mxu0
    %2784 = vmatprep.mubr.f32.mxu0 0.0
    %2785 = vmatmul.mubr.f32.gmra.mxu0 %v2713
    %v2786 = vpop.f32.mrf.mxu0
    %v2787 = vadd.f32 %v2707, %v2786
    %v2788 = vpop.f32.mrf.mxu0
    %2789 = vdwg.mxu0
    %s2790 = scalar_lea.vmem %s6, 32
    %v2791 = vld [vmem:[%s2790] sm:$0xff]
    %v2792 = vld [vmem:[%s2790 + $0x8] sm:$0xff]
    %v2793 = vld [vmem:[%s2790 + $0x10] sm:$0xff]
    %v2794 = vld [vmem:[%s2790 + $0x18] sm:$0xff]
    %s2795 = scalar_lea.vmem %s7, 1
    %v2796 = vld [vmem:[%s2795] sm:$0x1]
    %2799 = vrot.lane.b32.xlu0 %v2782, 96
    %v2800 = vpop.permute.xlu0 %2799
    %2801 = vrot.lane.b32.xlu0 %v2787, 96
    %v2802 = vpop.permute.xlu0 %2801
    %v2803 = vsel %vm317, %v2782, 0
    %v2805 = vsel %vm317, %v2787, 0
    %v2807 = vsel %vm317, %v2800, 0
    %v2809 = vsel %vm317, %v2802, 0
    %2811 = vmatprep.subr.mxu0 0.0
    %2812 = vmatpush1.xpose.msra.mxu0 0.0
    %2813 = vmatprep.subr.mxu0 0.0
    %2814 = vmatpush1.xpose.msra.mxu0 0.0
    %2815 = vmatprep.subr.mxu0 0.0
    %2816 = vmatpush1.xpose.msra.mxu0 0.0
    %2817 = vmatprep.subr.mxu0 0.0
    %2818 = vmatpush1.xpose.msra.mxu0 0.0
    %2819 = vmatprep.subr.mxu0 0.0
    %2820 = vmatpush1.xpose.msra.mxu0 0.0
    %2821 = vmatprep.subr.mxu0 0.0
    %2822 = vmatpush1.xpose.msra.mxu0 0.0
    %2823 = vmatprep.subr.mxu0 0.0
    %2824 = vmatpush1.xpose.msra.mxu0 0.0
    %2825 = vmatprep.subr.mxu0 0.0
    %2826 = vmatpush1.xpose.msra.mxu0 0.0
    %2827 = vmatprep.subr.mxu0 0.0
    %2828 = vmatpush1.xpose.msra.mxu0 0.0
    %2829 = vmatprep.subr.mxu0 0.0
    %2830 = vmatpush1.xpose.msra.mxu0 0.0
    %2831 = vmatprep.subr.mxu0 0.0
    %2832 = vmatpush1.xpose.msra.mxu0 0.0
    %2833 = vmatprep.subr.mxu0 0.0
    %2834 = vmatpush1.xpose.msra.mxu0 0.0
    %2835 = vmatprep.subr.mxu0 0.0
    %2836 = vmatpush1.xpose.msra.mxu0 0.0
    %2837 = vmatprep.subr.mxu0 0.0
    %2838 = vmatpush1.xpose.msra.mxu0 0.0
    %2839 = vmatprep.subr.mxu0 0.0
    %2840 = vmatpush1.xpose.msra.mxu0 %v2809
    %2841 = vmatprep.subr.mxu0 0.0
    %2842 = vmatpush1.xpose.msra.mxu0 %v2807
    %2843 = vmatprep.subr.mxu0 0.0
    %2844 = vmatpush2.xpose.msra.mxu0 0.0
    %2845 = vmatprep.subr.mxu0 0.0
    %2846 = vmatpush2.xpose.msra.mxu0 0.0
    %2847 = vmatprep.subr.mxu0 0.0
    %2848 = vmatpush2.xpose.msra.mxu0 0.0
    %2849 = vmatprep.subr.mxu0 0.0
    %2850 = vmatpush2.xpose.msra.mxu0 0.0
    %2851 = vmatprep.subr.mxu0 0.0
    %2852 = vmatpush2.xpose.msra.mxu0 0.0
    %2853 = vmatprep.subr.mxu0 0.0
    %2854 = vmatpush2.xpose.msra.mxu0 0.0
    %2855 = vmatprep.subr.mxu0 0.0
    %2856 = vmatpush2.xpose.msra.mxu0 0.0
    %2857 = vmatprep.subr.mxu0 0.0
    %2858 = vmatpush2.xpose.msra.mxu0 0.0
    %2859 = vmatprep.subr.mxu0 0.0
    %2860 = vmatpush2.xpose.msra.mxu0 0.0
    %2861 = vmatprep.subr.mxu0 0.0
    %2862 = vmatpush2.xpose.msra.mxu0 0.0
    %2863 = vmatprep.subr.mxu0 0.0
    %2864 = vmatpush2.xpose.msra.mxu0 0.0
    %2865 = vmatprep.subr.mxu0 0.0
    %2866 = vmatpush2.xpose.msra.mxu0 0.0
    %2867 = vmatprep.subr.mxu0 0.0
    %2868 = vmatpush2.xpose.msra.mxu0 0.0
    %2869 = vmatprep.subr.mxu0 0.0
    %2870 = vmatpush2.xpose.msra.mxu0 0.0
    %2871 = vmatprep.subr.mxu0 0.0
    %2872 = vmatpush2.xpose.msra.mxu0 0.0
    %2873 = vmatprep.subr.mxu0 0.0
    %2874 = vmatpush2.xpose.msra.mxu0 0.0
    %2875 = vmatprep.mubr.f32.mxu0 0.0
    %2876 = vmatmul.mubr.f32.gmra.mxu0 %v2803
    %v2877 = vpop.f32.mrf.mxu0
    %v2878 = vadd.f32 %v152, %v2877
    %v2879 = vpop.f32.mrf.mxu0
    %2880 = vmatprep.mubr.f32.mxu0 0.0
    %2881 = vmatmul.mubr.f32.gmra.mxu0 %v2805
    %v2882 = vpop.f32.mrf.mxu0
    %v2883 = vadd.f32 %v153, %v2882
    %v2884 = vpop.f32.mrf.mxu0
    %2885 = vdwg.mxu0
    %v2886 = vsel %vm401, %v2878, -inf
    %2887 = vmax.xlane.f32.xlu0 %v2886
    %v2888 = vpop.xlane.xlu0 %2887
    %v2889 = vsel %vm401, %v2883, -inf
    %2890 = vmax.xlane.f32.xlu0 %v2889
    %v2891 = vpop.xlane.xlu0 %2890
    %v2892 = vsub.f32 %v2878, %v2888
    %v2893 = vsub.f32 %v2883, %v2891
    %v2894 = vmul.f32 %v2892, 1.442695
    %v2895 = vpow.pop %v2894
    %v2896 = vmul.f32 %v2893, 1.442695
    %v2897 = vpow.pop %v2896
    %v2898 = vsel %vm401, %v2895, 0.0
    %2899 = vadd.xlane.f32.xlu0 %v2898
    %v2900 = vpop.xlane.xlu0 %2899
    %v2901 = vsel %vm401, %v2897, 0.0
    %2902 = vadd.xlane.f32.xlu0 %v2901
    %v2903 = vpop.xlane.xlu0 %2902
    %v2904 = vrcp.pop %v2900
    %v2905 = vrcp.pop %v2903
    %v2906 = vmul.f32 %v2895, %v2904
    %v2907 = vmul.f32 %v2897, %v2905
    %2908 = vrot.lane.b32.xlu0 %v2782, 64
    %v2909 = vpop.permute.xlu0 %2908
    %2910 = vrot.lane.b32.xlu0 %v2787, 64
    %v2911 = vpop.permute.xlu0 %2910
    %v2915 = vsel %vm401, %v2906, 0
    %v2918 = vsel %vm401, %v2907, 0
    %2920 = vmatprep.subr.mxu0 0.0
    %2921 = vmatpush1.msra.mxu0 0.0
    %2922 = vmatprep.subr.mxu0 0.0
    %2923 = vmatpush1.msra.mxu0 0.0
    %2924 = vmatprep.subr.mxu0 0.0
    %2925 = vmatpush1.msra.mxu0 0.0
    %2926 = vmatprep.subr.mxu0 0.0
    %2927 = vmatpush1.msra.mxu0 0.0
    %2928 = vmatprep.subr.mxu0 0.0
    %2929 = vmatpush1.msra.mxu0 0.0
    %2930 = vmatprep.subr.mxu0 0.0
    %2931 = vmatpush1.msra.mxu0 0.0
    %2932 = vmatprep.subr.mxu0 0.0
    %2933 = vmatpush1.msra.mxu0 0.0
    %2934 = vmatprep.subr.mxu0 0.0
    %2935 = vmatpush1.msra.mxu0 0.0
    %2936 = vmatprep.subr.mxu0 0.0
    %2937 = vmatpush1.msra.mxu0 0.0
    %2938 = vmatprep.subr.mxu0 0.0
    %2939 = vmatpush1.msra.mxu0 0.0
    %2940 = vmatprep.subr.mxu0 0.0
    %2941 = vmatpush1.msra.mxu0 0.0
    %2942 = vmatprep.subr.mxu0 0.0
    %2943 = vmatpush1.msra.mxu0 0.0
    %2944 = vmatprep.subr.mxu0 0.0
    %2945 = vmatpush1.msra.mxu0 0.0
    %2946 = vmatprep.subr.mxu0 0.0
    %2947 = vmatpush1.msra.mxu0 0.0
    %2948 = vmatprep.subr.mxu0 0.0
    %2949 = vmatpush1.msra.mxu0 %v2911
    %2950 = vmatprep.subr.mxu0 0.0
    %2951 = vmatpush1.msra.mxu0 %v2909
    %2952 = vmatprep.subr.mxu0 0.0
    %2953 = vmatpush2.msra.mxu0 0.0
    %2954 = vmatprep.subr.mxu0 0.0
    %2955 = vmatpush2.msra.mxu0 0.0
    %2956 = vmatprep.subr.mxu0 0.0
    %2957 = vmatpush2.msra.mxu0 0.0
    %2958 = vmatprep.subr.mxu0 0.0
    %2959 = vmatpush2.msra.mxu0 0.0
    %2960 = vmatprep.subr.mxu0 0.0
    %2961 = vmatpush2.msra.mxu0 0.0
    %2962 = vmatprep.subr.mxu0 0.0
    %2963 = vmatpush2.msra.mxu0 0.0
    %2964 = vmatprep.subr.mxu0 0.0
    %2965 = vmatpush2.msra.mxu0 0.0
    %2966 = vmatprep.subr.mxu0 0.0
    %2967 = vmatpush2.msra.mxu0 0.0
    %2968 = vmatprep.subr.mxu0 0.0
    %2969 = vmatpush2.msra.mxu0 0.0
    %2970 = vmatprep.subr.mxu0 0.0
    %2971 = vmatpush2.msra.mxu0 0.0
    %2972 = vmatprep.subr.mxu0 0.0
    %2973 = vmatpush2.msra.mxu0 0.0
    %2974 = vmatprep.subr.mxu0 0.0
    %2975 = vmatpush2.msra.mxu0 0.0
    %2976 = vmatprep.subr.mxu0 0.0
    %2977 = vmatpush2.msra.mxu0 0.0
    %2978 = vmatprep.subr.mxu0 0.0
    %2979 = vmatpush2.msra.mxu0 0.0
    %2980 = vmatprep.subr.mxu0 0.0
    %2981 = vmatpush2.msra.mxu0 0.0
    %2982 = vmatprep.subr.mxu0 0.0
    %2983 = vmatpush2.msra.mxu0 0.0
    %2984 = vmatprep.mubr.f32.mxu0 0.0
    %2985 = vmatmul.mubr.f32.gmra.mxu0 %v2915
    %v2986 = vpop.f32.mrf.mxu0
    %v2987 = vadd.f32 0.0, %v2986
    %v2988 = vpop.f32.mrf.mxu0
    %2989 = vmatprep.mubr.f32.mxu0 0.0
    %2990 = vmatmul.mubr.f32.gmra.mxu0 %v2918
    %v2991 = vpop.f32.mrf.mxu0
    %v2992 = vadd.f32 0.0, %v2991
    %v2993 = vpop.f32.mrf.mxu0
    %2994 = vdwg.mxu0
    %2995 = vrot.lane.b32.xlu0 %v2782, 120
    %v2996 = vpop.permute.xlu0 %2995
    %2997 = vrot.lane.b32.xlu0 %v2787, 120
    %v2998 = vpop.permute.xlu0 %2997
    %2999 = vrot.lane.b32.xlu0 %v2782, 88
    %v3000 = vpop.permute.xlu0 %2999
    %3001 = vrot.lane.b32.xlu0 %v2787, 88
    %v3002 = vpop.permute.xlu0 %3001
    %v3003 = vsel %vm317, %v2996, 0
    %v3005 = vsel %vm317, %v2998, 0
    %v3007 = vsel %vm317, %v3000, 0
    %v3009 = vsel %vm317, %v3002, 0
    %3011 = vmatprep.subr.mxu0 0.0
    %3012 = vmatpush1.xpose.msra.mxu0 0.0
    %3013 = vmatprep.subr.mxu0 0.0
    %3014 = vmatpush1.xpose.msra.mxu0 0.0
    %3015 = vmatprep.subr.mxu0 0.0
    %3016 = vmatpush1.xpose.msra.mxu0 0.0
    %3017 = vmatprep.subr.mxu0 0.0
    %3018 = vmatpush1.xpose.msra.mxu0 0.0
    %3019 = vmatprep.subr.mxu0 0.0
    %3020 = vmatpush1.xpose.msra.mxu0 0.0
    %3021 = vmatprep.subr.mxu0 0.0
    %3022 = vmatpush1.xpose.msra.mxu0 0.0
    %3023 = vmatprep.subr.mxu0 0.0
    %3024 = vmatpush1.xpose.msra.mxu0 0.0
    %3025 = vmatprep.subr.mxu0 0.0
    %3026 = vmatpush1.xpose.msra.mxu0 0.0
    %3027 = vmatprep.subr.mxu0 0.0
    %3028 = vmatpush1.xpose.msra.mxu0 0.0
    %3029 = vmatprep.subr.mxu0 0.0
    %3030 = vmatpush1.xpose.msra.mxu0 0.0
    %3031 = vmatprep.subr.mxu0 0.0
    %3032 = vmatpush1.xpose.msra.mxu0 0.0
    %3033 = vmatprep.subr.mxu0 0.0
    %3034 = vmatpush1.xpose.msra.mxu0 0.0
    %3035 = vmatprep.subr.mxu0 0.0
    %3036 = vmatpush1.xpose.msra.mxu0 0.0
    %3037 = vmatprep.subr.mxu0 0.0
    %3038 = vmatpush1.xpose.msra.mxu0 0.0
    %3039 = vmatprep.subr.mxu0 0.0
    %3040 = vmatpush1.xpose.msra.mxu0 %v3009
    %3041 = vmatprep.subr.mxu0 0.0
    %3042 = vmatpush1.xpose.msra.mxu0 %v3007
    %3043 = vmatprep.subr.mxu0 0.0
    %3044 = vmatpush2.xpose.msra.mxu0 0.0
    %3045 = vmatprep.subr.mxu0 0.0
    %3046 = vmatpush2.xpose.msra.mxu0 0.0
    %3047 = vmatprep.subr.mxu0 0.0
    %3048 = vmatpush2.xpose.msra.mxu0 0.0
    %3049 = vmatprep.subr.mxu0 0.0
    %3050 = vmatpush2.xpose.msra.mxu0 0.0
    %3051 = vmatprep.subr.mxu0 0.0
    %3052 = vmatpush2.xpose.msra.mxu0 0.0
    %3053 = vmatprep.subr.mxu0 0.0
    %3054 = vmatpush2.xpose.msra.mxu0 0.0
    %3055 = vmatprep.subr.mxu0 0.0
    %3056 = vmatpush2.xpose.msra.mxu0 0.0
    %3057 = vmatprep.subr.mxu0 0.0
    %3058 = vmatpush2.xpose.msra.mxu0 0.0
    %3059 = vmatprep.subr.mxu0 0.0
    %3060 = vmatpush2.xpose.msra.mxu0 0.0
    %3061 = vmatprep.subr.mxu0 0.0
    %3062 = vmatpush2.xpose.msra.mxu0 0.0
    %3063 = vmatprep.subr.mxu0 0.0
    %3064 = vmatpush2.xpose.msra.mxu0 0.0
    %3065 = vmatprep.subr.mxu0 0.0
    %3066 = vmatpush2.xpose.msra.mxu0 0.0
    %3067 = vmatprep.subr.mxu0 0.0
    %3068 = vmatpush2.xpose.msra.mxu0 0.0
    %3069 = vmatprep.subr.mxu0 0.0
    %3070 = vmatpush2.xpose.msra.mxu0 0.0
    %3071 = vmatprep.subr.mxu0 0.0
    %3072 = vmatpush2.xpose.msra.mxu0 0.0
    %3073 = vmatprep.subr.mxu0 0.0
    %3074 = vmatpush2.xpose.msra.mxu0 0.0
    %3075 = vmatprep.mubr.f32.mxu0 0.0
    %3076 = vmatmul.mubr.f32.gmra.mxu0 %v3003
    %v3077 = vpop.f32.mrf.mxu0
    %v3078 = vadd.f32 %v152, %v3077
    %v3079 = vpop.f32.mrf.mxu0
    %3080 = vmatprep.mubr.f32.mxu0 0.0
    %3081 = vmatmul.mubr.f32.gmra.mxu0 %v3005
    %v3082 = vpop.f32.mrf.mxu0
    %v3083 = vadd.f32 %v153, %v3082
    %v3084 = vpop.f32.mrf.mxu0
    %3085 = vdwg.mxu0
    %v3086 = vsel %vm401, %v3078, -inf
    %3087 = vmax.xlane.f32.xlu0 %v3086
    %v3088 = vpop.xlane.xlu0 %3087
    %v3089 = vsel %vm401, %v3083, -inf
    %3090 = vmax.xlane.f32.xlu0 %v3089
    %v3091 = vpop.xlane.xlu0 %3090
    %v3092 = vsub.f32 %v3078, %v3088
    %v3093 = vsub.f32 %v3083, %v3091
    %v3094 = vmul.f32 %v3092, 1.442695
    %v3095 = vpow.pop %v3094
    %v3096 = vmul.f32 %v3093, 1.442695
    %v3097 = vpow.pop %v3096
    %v3098 = vsel %vm401, %v3095, 0.0
    %3099 = vadd.xlane.f32.xlu0 %v3098
    %v3100 = vpop.xlane.xlu0 %3099
    %v3101 = vsel %vm401, %v3097, 0.0
    %3102 = vadd.xlane.f32.xlu0 %v3101
    %v3103 = vpop.xlane.xlu0 %3102
    %v3104 = vrcp.pop %v3100
    %v3105 = vrcp.pop %v3103
    %v3106 = vmul.f32 %v3095, %v3104
    %v3107 = vmul.f32 %v3097, %v3105
    %3108 = vrot.lane.b32.xlu0 %v2782, 56
    %v3109 = vpop.permute.xlu0 %3108
    %3110 = vrot.lane.b32.xlu0 %v2787, 56
    %v3111 = vpop.permute.xlu0 %3110
    %v3115 = vsel %vm401, %v3106, 0
    %v3118 = vsel %vm401, %v3107, 0
    %3120 = vmatprep.subr.mxu0 0.0
    %3121 = vmatpush1.msra.mxu0 0.0
    %3122 = vmatprep.subr.mxu0 0.0
    %3123 = vmatpush1.msra.mxu0 0.0
    %3124 = vmatprep.subr.mxu0 0.0
    %3125 = vmatpush1.msra.mxu0 0.0
    %3126 = vmatprep.subr.mxu0 0.0
    %3127 = vmatpush1.msra.mxu0 0.0
    %3128 = vmatprep.subr.mxu0 0.0
    %3129 = vmatpush1.msra.mxu0 0.0
    %3130 = vmatprep.subr.mxu0 0.0
    %3131 = vmatpush1.msra.mxu0 0.0
    %3132 = vmatprep.subr.mxu0 0.0
    %3133 = vmatpush1.msra.mxu0 0.0
    %3134 = vmatprep.subr.mxu0 0.0
    %3135 = vmatpush1.msra.mxu0 0.0
    %3136 = vmatprep.subr.mxu0 0.0
    %3137 = vmatpush1.msra.mxu0 0.0
    %3138 = vmatprep.subr.mxu0 0.0
    %3139 = vmatpush1.msra.mxu0 0.0
    %3140 = vmatprep.subr.mxu0 0.0
    %3141 = vmatpush1.msra.mxu0 0.0
    %3142 = vmatprep.subr.mxu0 0.0
    %3143 = vmatpush1.msra.mxu0 0.0
    %3144 = vmatprep.subr.mxu0 0.0
    %3145 = vmatpush1.msra.mxu0 0.0
    %3146 = vmatprep.subr.mxu0 0.0
    %3147 = vmatpush1.msra.mxu0 0.0
    %3148 = vmatprep.subr.mxu0 0.0
    %3149 = vmatpush1.msra.mxu0 %v3111
    %3150 = vmatprep.subr.mxu0 0.0
    %3151 = vmatpush1.msra.mxu0 %v3109
    %3152 = vmatprep.subr.mxu0 0.0
    %3153 = vmatpush2.msra.mxu0 0.0
    %3154 = vmatprep.subr.mxu0 0.0
    %3155 = vmatpush2.msra.mxu0 0.0
    %3156 = vmatprep.subr.mxu0 0.0
    %3157 = vmatpush2.msra.mxu0 0.0
    %3158 = vmatprep.subr.mxu0 0.0
    %3159 = vmatpush2.msra.mxu0 0.0
    %3160 = vmatprep.subr.mxu0 0.0
    %3161 = vmatpush2.msra.mxu0 0.0
    %3162 = vmatprep.subr.mxu0 0.0
    %3163 = vmatpush2.msra.mxu0 0.0
    %3164 = vmatprep.subr.mxu0 0.0
    %3165 = vmatpush2.msra.mxu0 0.0
    %3166 = vmatprep.subr.mxu0 0.0
    %3167 = vmatpush2.msra.mxu0 0.0
    %3168 = vmatprep.subr.mxu0 0.0
    %3169 = vmatpush2.msra.mxu0 0.0
    %3170 = vmatprep.subr.mxu0 0.0
    %3171 = vmatpush2.msra.mxu0 0.0
    %3172 = vmatprep.subr.mxu0 0.0
    %3173 = vmatpush2.msra.mxu0 0.0
    %3174 = vmatprep.subr.mxu0 0.0
    %3175 = vmatpush2.msra.mxu0 0.0
    %3176 = vmatprep.subr.mxu0 0.0
    %3177 = vmatpush2.msra.mxu0 0.0
    %3178 = vmatprep.subr.mxu0 0.0
    %3179 = vmatpush2.msra.mxu0 0.0
    %3180 = vmatprep.subr.mxu0 0.0
    %3181 = vmatpush2.msra.mxu0 0.0
    %3182 = vmatprep.subr.mxu0 0.0
    %3183 = vmatpush2.msra.mxu0 0.0
    %3184 = vmatprep.mubr.f32.mxu0 0.0
    %3185 = vmatmul.mubr.f32.gmra.mxu0 %v3115
    %v3186 = vpop.f32.mrf.mxu0
    %v3187 = vadd.f32 0.0, %v3186
    %v3188 = vpop.f32.mrf.mxu0
    %3189 = vmatprep.mubr.f32.mxu0 0.0
    %3190 = vmatmul.mubr.f32.gmra.mxu0 %v3118
    %v3191 = vpop.f32.mrf.mxu0
    %v3192 = vadd.f32 0.0, %v3191
    %v3193 = vpop.f32.mrf.mxu0
    %3194 = vdwg.mxu0
    %3195 = vrot.lane.b32.xlu0 %v2782, 112
    %v3196 = vpop.permute.xlu0 %3195
    %3197 = vrot.lane.b32.xlu0 %v2787, 112
    %v3198 = vpop.permute.xlu0 %3197
    %3199 = vrot.lane.b32.xlu0 %v2782, 80
    %v3200 = vpop.permute.xlu0 %3199
    %3201 = vrot.lane.b32.xlu0 %v2787, 80
    %v3202 = vpop.permute.xlu0 %3201
    %v3203 = vsel %vm317, %v3196, 0
    %v3205 = vsel %vm317, %v3198, 0
    %v3207 = vsel %vm317, %v3200, 0
    %v3209 = vsel %vm317, %v3202, 0
    %3211 = vmatprep.subr.mxu0 0.0
    %3212 = vmatpush1.xpose.msra.mxu0 0.0
    %3213 = vmatprep.subr.mxu0 0.0
    %3214 = vmatpush1.xpose.msra.mxu0 0.0
    %3215 = vmatprep.subr.mxu0 0.0
    %3216 = vmatpush1.xpose.msra.mxu0 0.0
    %3217 = vmatprep.subr.mxu0 0.0
    %3218 = vmatpush1.xpose.msra.mxu0 0.0
    %3219 = vmatprep.subr.mxu0 0.0
    %3220 = vmatpush1.xpose.msra.mxu0 0.0
    %3221 = vmatprep.subr.mxu0 0.0
    %3222 = vmatpush1.xpose.msra.mxu0 0.0
    %3223 = vmatprep.subr.mxu0 0.0
    %3224 = vmatpush1.xpose.msra.mxu0 0.0
    %3225 = vmatprep.subr.mxu0 0.0
    %3226 = vmatpush1.xpose.msra.mxu0 0.0
    %3227 = vmatprep.subr.mxu0 0.0
    %3228 = vmatpush1.xpose.msra.mxu0 0.0
    %3229 = vmatprep.subr.mxu0 0.0
    %3230 = vmatpush1.xpose.msra.mxu0 0.0
    %3231 = vmatprep.subr.mxu0 0.0
    %3232 = vmatpush1.xpose.msra.mxu0 0.0
    %3233 = vmatprep.subr.mxu0 0.0
    %3234 = vmatpush1.xpose.msra.mxu0 0.0
    %3235 = vmatprep.subr.mxu0 0.0
    %3236 = vmatpush1.xpose.msra.mxu0 0.0
    %3237 = vmatprep.subr.mxu0 0.0
    %3238 = vmatpush1.xpose.msra.mxu0 0.0
    %3239 = vmatprep.subr.mxu0 0.0
    %3240 = vmatpush1.xpose.msra.mxu0 %v3209
    %3241 = vmatprep.subr.mxu0 0.0
    %3242 = vmatpush1.xpose.msra.mxu0 %v3207
    %3243 = vmatprep.subr.mxu0 0.0
    %3244 = vmatpush2.xpose.msra.mxu0 0.0
    %3245 = vmatprep.subr.mxu0 0.0
    %3246 = vmatpush2.xpose.msra.mxu0 0.0
    %3247 = vmatprep.subr.mxu0 0.0
    %3248 = vmatpush2.xpose.msra.mxu0 0.0
    %3249 = vmatprep.subr.mxu0 0.0
    %3250 = vmatpush2.xpose.msra.mxu0 0.0
    %3251 = vmatprep.subr.mxu0 0.0
    %3252 = vmatpush2.xpose.msra.mxu0 0.0
    %3253 = vmatprep.subr.mxu0 0.0
    %3254 = vmatpush2.xpose.msra.mxu0 0.0
    %3255 = vmatprep.subr.mxu0 0.0
    %3256 = vmatpush2.xpose.msra.mxu0 0.0
    %3257 = vmatprep.subr.mxu0 0.0
    %3258 = vmatpush2.xpose.msra.mxu0 0.0
    %3259 = vmatprep.subr.mxu0 0.0
    %3260 = vmatpush2.xpose.msra.mxu0 0.0
    %3261 = vmatprep.subr.mxu0 0.0
    %3262 = vmatpush2.xpose.msra.mxu0 0.0
    %3263 = vmatprep.subr.mxu0 0.0
    %3264 = vmatpush2.xpose.msra.mxu0 0.0
    %3265 = vmatprep.subr.mxu0 0.0
    %3266 = vmatpush2.xpose.msra.mxu0 0.0
    %3267 = vmatprep.subr.mxu0 0.0
    %3268 = vmatpush2.xpose.msra.mxu0 0.0
    %3269 = vmatprep.subr.mxu0 0.0
    %3270 = vmatpush2.xpose.msra.mxu0 0.0
    %3271 = vmatprep.subr.mxu0 0.0
    %3272 = vmatpush2.xpose.msra.mxu0 0.0
    %3273 = vmatprep.subr.mxu0 0.0
    %3274 = vmatpush2.xpose.msra.mxu0 0.0
    %3275 = vmatprep.mubr.f32.mxu0 0.0
    %3276 = vmatmul.mubr.f32.gmra.mxu0 %v3203
    %v3277 = vpop.f32.mrf.mxu0
    %v3278 = vadd.f32 %v152, %v3277
    %v3279 = vpop.f32.mrf.mxu0
    %3280 = vmatprep.mubr.f32.mxu0 0.0
    %3281 = vmatmul.mubr.f32.gmra.mxu0 %v3205
    %v3282 = vpop.f32.mrf.mxu0
    %v3283 = vadd.f32 %v153, %v3282
    %v3284 = vpop.f32.mrf.mxu0
    %3285 = vdwg.mxu0
    %v3286 = vsel %vm401, %v3278, -inf
    %3287 = vmax.xlane.f32.xlu0 %v3286
    %v3288 = vpop.xlane.xlu0 %3287
    %v3289 = vsel %vm401, %v3283, -inf
    %3290 = vmax.xlane.f32.xlu0 %v3289
    %v3291 = vpop.xlane.xlu0 %3290
    %v3292 = vsub.f32 %v3278, %v3288
    %v3293 = vsub.f32 %v3283, %v3291
    %v3294 = vmul.f32 %v3292, 1.442695
    %v3295 = vpow.pop %v3294
    %v3296 = vmul.f32 %v3293, 1.442695
    %v3297 = vpow.pop %v3296
    %v3298 = vsel %vm401, %v3295, 0.0
    %3299 = vadd.xlane.f32.xlu0 %v3298
    %v3300 = vpop.xlane.xlu0 %3299
    %v3301 = vsel %vm401, %v3297, 0.0
    %3302 = vadd.xlane.f32.xlu0 %v3301
    %v3303 = vpop.xlane.xlu0 %3302
    %v3304 = vrcp.pop %v3300
    %v3305 = vrcp.pop %v3303
    %v3306 = vmul.f32 %v3295, %v3304
    %v3307 = vmul.f32 %v3297, %v3305
    %3308 = vrot.lane.b32.xlu0 %v2782, 48
    %v3309 = vpop.permute.xlu0 %3308
    %3310 = vrot.lane.b32.xlu0 %v2787, 48
    %v3311 = vpop.permute.xlu0 %3310
    %v3315 = vsel %vm401, %v3306, 0
    %v3318 = vsel %vm401, %v3307, 0
    %3320 = vmatprep.subr.mxu0 0.0
    %3321 = vmatpush1.msra.mxu0 0.0
    %3322 = vmatprep.subr.mxu0 0.0
    %3323 = vmatpush1.msra.mxu0 0.0
    %3324 = vmatprep.subr.mxu0 0.0
    %3325 = vmatpush1.msra.mxu0 0.0
    %3326 = vmatprep.subr.mxu0 0.0
    %3327 = vmatpush1.msra.mxu0 0.0
    %3328 = vmatprep.subr.mxu0 0.0
    %3329 = vmatpush1.msra.mxu0 0.0
    %3330 = vmatprep.subr.mxu0 0.0
    %3331 = vmatpush1.msra.mxu0 0.0
    %3332 = vmatprep.subr.mxu0 0.0
    %3333 = vmatpush1.msra.mxu0 0.0
    %3334 = vmatprep.subr.mxu0 0.0
    %3335 = vmatpush1.msra.mxu0 0.0
    %3336 = vmatprep.subr.mxu0 0.0
    %3337 = vmatpush1.msra.mxu0 0.0
    %3338 = vmatprep.subr.mxu0 0.0
    %3339 = vmatpush1.msra.mxu0 0.0
    %3340 = vmatprep.subr.mxu0 0.0
    %3341 = vmatpush1.msra.mxu0 0.0
    %3342 = vmatprep.subr.mxu0 0.0
    %3343 = vmatpush1.msra.mxu0 0.0
    %3344 = vmatprep.subr.mxu0 0.0
    %3345 = vmatpush1.msra.mxu0 0.0
    %3346 = vmatprep.subr.mxu0 0.0
    %3347 = vmatpush1.msra.mxu0 0.0
    %3348 = vmatprep.subr.mxu0 0.0
    %3349 = vmatpush1.msra.mxu0 %v3311
    %3350 = vmatprep.subr.mxu0 0.0
    %3351 = vmatpush1.msra.mxu0 %v3309
    %3352 = vmatprep.subr.mxu0 0.0
    %3353 = vmatpush2.msra.mxu0 0.0
    %3354 = vmatprep.subr.mxu0 0.0
    %3355 = vmatpush2.msra.mxu0 0.0
    %3356 = vmatprep.subr.mxu0 0.0
    %3357 = vmatpush2.msra.mxu0 0.0
    %3358 = vmatprep.subr.mxu0 0.0
    %3359 = vmatpush2.msra.mxu0 0.0
    %3360 = vmatprep.subr.mxu0 0.0
    %3361 = vmatpush2.msra.mxu0 0.0
    %3362 = vmatprep.subr.mxu0 0.0
    %3363 = vmatpush2.msra.mxu0 0.0
    %3364 = vmatprep.subr.mxu0 0.0
    %3365 = vmatpush2.msra.mxu0 0.0
    %3366 = vmatprep.subr.mxu0 0.0
    %3367 = vmatpush2.msra.mxu0 0.0
    %3368 = vmatprep.subr.mxu0 0.0
    %3369 = vmatpush2.msra.mxu0 0.0
    %3370 = vmatprep.subr.mxu0 0.0
    %3371 = vmatpush2.msra.mxu0 0.0
    %3372 = vmatprep.subr.mxu0 0.0
    %3373 = vmatpush2.msra.mxu0 0.0
    %3374 = vmatprep.subr.mxu0 0.0
    %3375 = vmatpush2.msra.mxu0 0.0
    %3376 = vmatprep.subr.mxu0 0.0
    %3377 = vmatpush2.msra.mxu0 0.0
    %3378 = vmatprep.subr.mxu0 0.0
    %3379 = vmatpush2.msra.mxu0 0.0
    %3380 = vmatprep.subr.mxu0 0.0
    %3381 = vmatpush2.msra.mxu0 0.0
    %3382 = vmatprep.subr.mxu0 0.0
    %3383 = vmatpush2.msra.mxu0 0.0
    %3384 = vmatprep.mubr.f32.mxu0 0.0
    %3385 = vmatmul.mubr.f32.gmra.mxu0 %v3315
    %v3386 = vpop.f32.mrf.mxu0
    %v3387 = vadd.f32 0.0, %v3386
    %v3388 = vpop.f32.mrf.mxu0
    %3389 = vmatprep.mubr.f32.mxu0 0.0
    %3390 = vmatmul.mubr.f32.gmra.mxu0 %v3318
    %v3391 = vpop.f32.mrf.mxu0
    %v3392 = vadd.f32 0.0, %v3391
    %v3393 = vpop.f32.mrf.mxu0
    %3394 = vdwg.mxu0
    %3395 = vrot.lane.b32.xlu0 %v2782, 104
    %v3396 = vpop.permute.xlu0 %3395
    %3397 = vrot.lane.b32.xlu0 %v2787, 104
    %v3398 = vpop.permute.xlu0 %3397
    %3399 = vrot.lane.b32.xlu0 %v2782, 72
    %v3400 = vpop.permute.xlu0 %3399
    %3401 = vrot.lane.b32.xlu0 %v2787, 72
    %v3402 = vpop.permute.xlu0 %3401
    %v3403 = vsel %vm317, %v3396, 0
    %v3405 = vsel %vm317, %v3398, 0
    %v3407 = vsel %vm317, %v3400, 0
    %v3409 = vsel %vm317, %v3402, 0
    %3411 = vmatprep.subr.mxu0 0.0
    %3412 = vmatpush1.xpose.msra.mxu0 0.0
    %3413 = vmatprep.subr.mxu0 0.0
    %3414 = vmatpush1.xpose.msra.mxu0 0.0
    %3415 = vmatprep.subr.mxu0 0.0
    %3416 = vmatpush1.xpose.msra.mxu0 0.0
    %3417 = vmatprep.subr.mxu0 0.0
    %3418 = vmatpush1.xpose.msra.mxu0 0.0
    %3419 = vmatprep.subr.mxu0 0.0
    %3420 = vmatpush1.xpose.msra.mxu0 0.0
    %3421 = vmatprep.subr.mxu0 0.0
    %3422 = vmatpush1.xpose.msra.mxu0 0.0
    %3423 = vmatprep.subr.mxu0 0.0
    %3424 = vmatpush1.xpose.msra.mxu0 0.0
    %3425 = vmatprep.subr.mxu0 0.0
    %3426 = vmatpush1.xpose.msra.mxu0 0.0
    %3427 = vmatprep.subr.mxu0 0.0
    %3428 = vmatpush1.xpose.msra.mxu0 0.0
    %3429 = vmatprep.subr.mxu0 0.0
    %3430 = vmatpush1.xpose.msra.mxu0 0.0
    %3431 = vmatprep.subr.mxu0 0.0
    %3432 = vmatpush1.xpose.msra.mxu0 0.0
    %3433 = vmatprep.subr.mxu0 0.0
    %3434 = vmatpush1.xpose.msra.mxu0 0.0
    %3435 = vmatprep.subr.mxu0 0.0
    %3436 = vmatpush1.xpose.msra.mxu0 0.0
    %3437 = vmatprep.subr.mxu0 0.0
    %3438 = vmatpush1.xpose.msra.mxu0 0.0
    %3439 = vmatprep.subr.mxu0 0.0
    %3440 = vmatpush1.xpose.msra.mxu0 %v3409
    %3441 = vmatprep.subr.mxu0 0.0
    %3442 = vmatpush1.xpose.msra.mxu0 %v3407
    %3443 = vmatprep.subr.mxu0 0.0
    %3444 = vmatpush2.xpose.msra.mxu0 0.0
    %3445 = vmatprep.subr.mxu0 0.0
    %3446 = vmatpush2.xpose.msra.mxu0 0.0
    %3447 = vmatprep.subr.mxu0 0.0
    %3448 = vmatpush2.xpose.msra.mxu0 0.0
    %3449 = vmatprep.subr.mxu0 0.0
    %3450 = vmatpush2.xpose.msra.mxu0 0.0
    %3451 = vmatprep.subr.mxu0 0.0
    %3452 = vmatpush2.xpose.msra.mxu0 0.0
    %3453 = vmatprep.subr.mxu0 0.0
    %3454 = vmatpush2.xpose.msra.mxu0 0.0
    %3455 = vmatprep.subr.mxu0 0.0
    %3456 = vmatpush2.xpose.msra.mxu0 0.0
    %3457 = vmatprep.subr.mxu0 0.0
    %3458 = vmatpush2.xpose.msra.mxu0 0.0
    %3459 = vmatprep.subr.mxu0 0.0
    %3460 = vmatpush2.xpose.msra.mxu0 0.0
    %3461 = vmatprep.subr.mxu0 0.0
    %3462 = vmatpush2.xpose.msra.mxu0 0.0
    %3463 = vmatprep.subr.mxu0 0.0
    %3464 = vmatpush2.xpose.msra.mxu0 0.0
    %3465 = vmatprep.subr.mxu0 0.0
    %3466 = vmatpush2.xpose.msra.mxu0 0.0
    %3467 = vmatprep.subr.mxu0 0.0
    %3468 = vmatpush2.xpose.msra.mxu0 0.0
    %3469 = vmatprep.subr.mxu0 0.0
    %3470 = vmatpush2.xpose.msra.mxu0 0.0
    %3471 = vmatprep.subr.mxu0 0.0
    %3472 = vmatpush2.xpose.msra.mxu0 0.0
    %3473 = vmatprep.subr.mxu0 0.0
    %3474 = vmatpush2.xpose.msra.mxu0 0.0
    %3475 = vmatprep.mubr.f32.mxu0 0.0
    %3476 = vmatmul.mubr.f32.gmra.mxu0 %v3403
    %v3477 = vpop.f32.mrf.mxu0
    %v3478 = vadd.f32 %v152, %v3477
    %v3479 = vpop.f32.mrf.mxu0
    %3480 = vmatprep.mubr.f32.mxu0 0.0
    %3481 = vmatmul.mubr.f32.gmra.mxu0 %v3405
    %v3482 = vpop.f32.mrf.mxu0
    %v3483 = vadd.f32 %v153, %v3482
    %v3484 = vpop.f32.mrf.mxu0
    %3485 = vdwg.mxu0
    %v3486 = vsel %vm401, %v3478, -inf
    %3487 = vmax.xlane.f32.xlu0 %v3486
    %v3488 = vpop.xlane.xlu0 %3487
    %v3489 = vsel %vm401, %v3483, -inf
    %3490 = vmax.xlane.f32.xlu0 %v3489
    %v3491 = vpop.xlane.xlu0 %3490
    %v3492 = vsub.f32 %v3478, %v3488
    %v3493 = vsub.f32 %v3483, %v3491
    %v3494 = vmul.f32 %v3492, 1.442695
    %v3495 = vpow.pop %v3494
    %v3496 = vmul.f32 %v3493, 1.442695
    %v3497 = vpow.pop %v3496
    %v3498 = vsel %vm401, %v3495, 0.0
    %3499 = vadd.xlane.f32.xlu0 %v3498
    %v3500 = vpop.xlane.xlu0 %3499
    %v3501 = vsel %vm401, %v3497, 0.0
    %3502 = vadd.xlane.f32.xlu0 %v3501
    %v3503 = vpop.xlane.xlu0 %3502
    %v3504 = vrcp.pop %v3500
    %v3505 = vrcp.pop %v3503
    %v3506 = vmul.f32 %v3495, %v3504
    %v3507 = vmul.f32 %v3497, %v3505
    %3508 = vrot.lane.b32.xlu0 %v2782, 40
    %v3509 = vpop.permute.xlu0 %3508
    %3510 = vrot.lane.b32.xlu0 %v2787, 40
    %v3511 = vpop.permute.xlu0 %3510
    %v3515 = vsel %vm401, %v3506, 0
    %v3518 = vsel %vm401, %v3507, 0
    %3520 = vmatprep.subr.mxu0 0.0
    %3521 = vmatpush1.msra.mxu0 0.0
    %3522 = vmatprep.subr.mxu0 0.0
    %3523 = vmatpush1.msra.mxu0 0.0
    %3524 = vmatprep.subr.mxu0 0.0
    %3525 = vmatpush1.msra.mxu0 0.0
    %3526 = vmatprep.subr.mxu0 0.0
    %3527 = vmatpush1.msra.mxu0 0.0
    %3528 = vmatprep.subr.mxu0 0.0
    %3529 = vmatpush1.msra.mxu0 0.0
    %3530 = vmatprep.subr.mxu0 0.0
    %3531 = vmatpush1.msra.mxu0 0.0
    %3532 = vmatprep.subr.mxu0 0.0
    %3533 = vmatpush1.msra.mxu0 0.0
    %3534 = vmatprep.subr.mxu0 0.0
    %3535 = vmatpush1.msra.mxu0 0.0
    %3536 = vmatprep.subr.mxu0 0.0
    %3537 = vmatpush1.msra.mxu0 0.0
    %3538 = vmatprep.subr.mxu0 0.0
    %3539 = vmatpush1.msra.mxu0 0.0
    %3540 = vmatprep.subr.mxu0 0.0
    %3541 = vmatpush1.msra.mxu0 0.0
    %3542 = vmatprep.subr.mxu0 0.0
    %3543 = vmatpush1.msra.mxu0 0.0
    %3544 = vmatprep.subr.mxu0 0.0
    %3545 = vmatpush1.msra.mxu0 0.0
    %3546 = vmatprep.subr.mxu0 0.0
    %3547 = vmatpush1.msra.mxu0 0.0
    %3548 = vmatprep.subr.mxu0 0.0
    %3549 = vmatpush1.msra.mxu0 %v3511
    %3550 = vmatprep.subr.mxu0 0.0
    %3551 = vmatpush1.msra.mxu0 %v3509
    %3552 = vmatprep.subr.mxu0 0.0
    %3553 = vmatpush2.msra.mxu0 0.0
    %3554 = vmatprep.subr.mxu0 0.0
    %3555 = vmatpush2.msra.mxu0 0.0
    %3556 = vmatprep.subr.mxu0 0.0
    %3557 = vmatpush2.msra.mxu0 0.0
    %3558 = vmatprep.subr.mxu0 0.0
    %3559 = vmatpush2.msra.mxu0 0.0
    %3560 = vmatprep.subr.mxu0 0.0
    %3561 = vmatpush2.msra.mxu0 0.0
    %3562 = vmatprep.subr.mxu0 0.0
    %3563 = vmatpush2.msra.mxu0 0.0
    %3564 = vmatprep.subr.mxu0 0.0
    %3565 = vmatpush2.msra.mxu0 0.0
    %3566 = vmatprep.subr.mxu0 0.0
    %3567 = vmatpush2.msra.mxu0 0.0
    %3568 = vmatprep.subr.mxu0 0.0
    %3569 = vmatpush2.msra.mxu0 0.0
    %3570 = vmatprep.subr.mxu0 0.0
    %3571 = vmatpush2.msra.mxu0 0.0
    %3572 = vmatprep.subr.mxu0 0.0
    %3573 = vmatpush2.msra.mxu0 0.0
    %3574 = vmatprep.subr.mxu0 0.0
    %3575 = vmatpush2.msra.mxu0 0.0
    %3576 = vmatprep.subr.mxu0 0.0
    %3577 = vmatpush2.msra.mxu0 0.0
    %3578 = vmatprep.subr.mxu0 0.0
    %3579 = vmatpush2.msra.mxu0 0.0
    %3580 = vmatprep.subr.mxu0 0.0
    %3581 = vmatpush2.msra.mxu0 0.0
    %3582 = vmatprep.subr.mxu0 0.0
    %3583 = vmatpush2.msra.mxu0 0.0
    %3584 = vmatprep.mubr.f32.mxu0 0.0
    %3585 = vmatmul.mubr.f32.gmra.mxu0 %v3515
    %v3586 = vpop.f32.mrf.mxu0
    %v3587 = vadd.f32 0.0, %v3586
    %v3588 = vpop.f32.mrf.mxu0
    %3589 = vmatprep.mubr.f32.mxu0 0.0
    %3590 = vmatmul.mubr.f32.gmra.mxu0 %v3518
    %v3591 = vpop.f32.mrf.mxu0
    %v3592 = vadd.f32 0.0, %v3591
    %v3593 = vpop.f32.mrf.mxu0
    %3594 = vdwg.mxu0
    %3597 = vrot.lane.b32.xlu0 %v3187, 8
    %v3598 = vpop.permute.xlu0 %3597
    %3599 = vrot.lane.b32.xlu0 %v3192, 8
    %v3600 = vpop.permute.xlu0 %3599
    %3605 = vrot.lane.b32.xlu0 %v3387, 16
    %v3606 = vpop.permute.xlu0 %3605
    %3607 = vrot.lane.b32.xlu0 %v3392, 16
    %v3608 = vpop.permute.xlu0 %3607
    %3613 = vrot.lane.b32.xlu0 %v3587, 24
    %v3614 = vpop.permute.xlu0 %3613
    %3615 = vrot.lane.b32.xlu0 %v3592, 24
    %v3616 = vpop.permute.xlu0 %3615
    %v3619 = vsel %vm317, %v2987, %v3598
    %v3620 = vsel %vm317, %v2992, %v3600
    %v3621 = vsel %vm401, %v3619, %v3606
    %v3622 = vsel %vm401, %v3620, %v3608
    %v3623 = vsel %vm1139, %v3621, %v3614
    %v3624 = vsel %vm1139, %v3622, %v3616
    %v3626 = vlaneseq
    %v3627 = vshrl.u32 %v3626, 7
    %v3628 = vsub.s32 0, %v3627
    %v3629 = vrot.slane %v2796, %v3628
    %v3632 = vsel %vm158, %v3623, 0
    %v3635 = vsel %vm158, %v3624, 0
    %3637 = vmatprep.subr.mxu0 0.0
    %3638 = vmatpush1.msra.mxu0 0.0
    %3639 = vmatprep.subr.mxu0 0.0
    %3640 = vmatpush1.msra.mxu0 0.0
    %3641 = vmatprep.subr.mxu0 0.0
    %3642 = vmatpush1.msra.mxu0 0.0
    %3643 = vmatprep.subr.mxu0 0.0
    %3644 = vmatpush1.msra.mxu0 0.0
    %3645 = vmatprep.subr.mxu0 0.0
    %3646 = vmatpush1.msra.mxu0 0.0
    %3647 = vmatprep.subr.mxu0 0.0
    %3648 = vmatpush1.msra.mxu0 0.0
    %3649 = vmatprep.subr.mxu0 0.0
    %3650 = vmatpush1.msra.mxu0 0.0
    %3651 = vmatprep.subr.mxu0 0.0
    %3652 = vmatpush1.msra.mxu0 0.0
    %3653 = vmatprep.subr.mxu0 0.0
    %3654 = vmatpush1.msra.mxu0 0.0
    %3655 = vmatprep.subr.mxu0 0.0
    %3656 = vmatpush1.msra.mxu0 0.0
    %3657 = vmatprep.subr.mxu0 0.0
    %3658 = vmatpush1.msra.mxu0 0.0
    %3659 = vmatprep.subr.mxu0 0.0
    %3660 = vmatpush1.msra.mxu0 0.0
    %3661 = vmatprep.subr.mxu0 0.0
    %3662 = vmatpush1.msra.mxu0 %v2794
    %3663 = vmatprep.subr.mxu0 0.0
    %3664 = vmatpush1.msra.mxu0 %v2793
    %3665 = vmatprep.subr.mxu0 0.0
    %3666 = vmatpush1.msra.mxu0 %v2792
    %3667 = vmatprep.subr.mxu0 0.0
    %3668 = vmatpush1.msra.mxu0 %v2791
    %3669 = vmatprep.subr.mxu0 0.0
    %3670 = vmatpush2.msra.mxu0 0.0
    %3671 = vmatprep.subr.mxu0 0.0
    %3672 = vmatpush2.msra.mxu0 0.0
    %3673 = vmatprep.subr.mxu0 0.0
    %3674 = vmatpush2.msra.mxu0 0.0
    %3675 = vmatprep.subr.mxu0 0.0
    %3676 = vmatpush2.msra.mxu0 0.0
    %3677 = vmatprep.subr.mxu0 0.0
    %3678 = vmatpush2.msra.mxu0 0.0
    %3679 = vmatprep.subr.mxu0 0.0
    %3680 = vmatpush2.msra.mxu0 0.0
    %3681 = vmatprep.subr.mxu0 0.0
    %3682 = vmatpush2.msra.mxu0 0.0
    %3683 = vmatprep.subr.mxu0 0.0
    %3684 = vmatpush2.msra.mxu0 0.0
    %3685 = vmatprep.subr.mxu0 0.0
    %3686 = vmatpush2.msra.mxu0 0.0
    %3687 = vmatprep.subr.mxu0 0.0
    %3688 = vmatpush2.msra.mxu0 0.0
    %3689 = vmatprep.subr.mxu0 0.0
    %3690 = vmatpush2.msra.mxu0 0.0
    %3691 = vmatprep.subr.mxu0 0.0
    %3692 = vmatpush2.msra.mxu0 0.0
    %3693 = vmatprep.subr.mxu0 0.0
    %3694 = vmatpush2.msra.mxu0 0.0
    %3695 = vmatprep.subr.mxu0 0.0
    %3696 = vmatpush2.msra.mxu0 0.0
    %3697 = vmatprep.subr.mxu0 0.0
    %3698 = vmatpush2.msra.mxu0 0.0
    %3699 = vmatprep.subr.mxu0 0.0
    %3700 = vmatpush2.msra.mxu0 0.0
    %3701 = vmatprep.mubr.f32.mxu0 0.0
    %3702 = vmatmul.mubr.f32.gmra.mxu0 %v3632
    %v3703 = vpop.f32.mrf.mxu0
    %v3704 = vadd.f32 %v3629, %v3703
    %v3705 = vpop.f32.mrf.mxu0
    %3706 = vmatprep.mubr.f32.mxu0 0.0
    %3707 = vmatmul.mubr.f32.gmra.mxu0 %v3635
    %v3708 = vpop.f32.mrf.mxu0
    %v3709 = vadd.f32 %v3629, %v3708
    %v3710 = vpop.f32.mrf.mxu0
    %3711 = vdwg.mxu0
    %v3712 = vadd.f32 %v2636, %v3704
    %v3713 = vadd.f32 %v2637, %v3709
    %v3714 = vsel %vm158, %v3712, 0.0
    %3715 = vadd.xlane.f32.xlu0 %v3714
    %v3716 = vpop.xlane.xlu0 %3715
    %v3717 = vsel %vm158, %v3713, 0.0
    %3718 = vadd.xlane.f32.xlu0 %v3717
    %v3719 = vpop.xlane.xlu0 %3718
    %v3720 = vmul.f32 %v3716, %v165
    %v3721 = vmul.f32 %v3719, %v165
    %v3722 = vsub.f32 %v3712, %v3720
    %v3723 = vsub.f32 %v3713, %v3721
    %v3724 = vmul.f32 %v3722, %v3722
    %v3725 = vmul.f32 %v3723, %v3723
    %v3726 = vsel %vm158, %v3724, 0.0
    %3727 = vadd.xlane.f32.xlu0 %v3726
    %v3728 = vpop.xlane.xlu0 %3727
    %v3729 = vsel %vm158, %v3725, 0.0
    %3730 = vadd.xlane.f32.xlu0 %v3729
    %v3731 = vpop.xlane.xlu0 %3730
    %v3732 = vmul.f32 %v3728, %v165
    %v3733 = vmul.f32 %v3731, %v165
    %v3734 = vmul.f32 %v3732, 1.032258
    %v3735 = vmul.f32 %v3733, 1.032258
    %v3736 = vrsqrt.pop %v3734
    %v3737 = vmul.f32 %v3734, %v3736
    %vm3738 = vcmp.eq.f32.partialorder %v3734, inf
    %v3739 = vsel %vm3738, %v3734, %v3737
    %vm3740 = vcmp.eq.f32.partialorder %v3734, 0.0
    %v3741 = vand.u32 %v3734, 2147483648
    %v3742 = vsel %vm3740, %v3741, %v3739
    %v3743 = vrsqrt.pop %v3735
    %v3744 = vmul.f32 %v3735, %v3743
    %vm3745 = vcmp.eq.f32.partialorder %v3735, inf
    %v3746 = vsel %vm3745, %v3735, %v3744
    %vm3747 = vcmp.eq.f32.partialorder %v3735, 0.0
    %v3748 = vand.u32 %v3735, 2147483648
    %v3749 = vsel %vm3747, %v3748, %v3746
    %v3750 = vlaneseq
    %v3751 = vshrl.u32 %v3750, 7
    %v3752 = vsub.s32 1, %v3751
    %v3753 = vrot.slane %v2639, %v3752
    %v3754 = vmul.f32 %v3753, %v3722
    %v3755 = vmul.f32 %v3753, %v3723
    %v3756 = vadd.f32 %v3742, 1e-06
    %v3757 = vadd.f32 %v3749, 1e-06
    %v3758 = vrcp.pop %v3756
    %v3759 = vrcp.pop %v3757
    %v3760 = vmul.f32 %v3754, %v3758
    %v3761 = vmul.f32 %v3755, %v3759
    %v3762 = vlaneseq
    %v3763 = vshrl.u32 %v3762, 7
    %v3764 = vsub.s32 1, %v3763
    %v3765 = vrot.slane %v2641, %v3764
    %v3766 = vadd.f32 %v3760, %v3765
    %v3767 = vadd.f32 %v3761, %v3765
    %s3768 = scalar_lea.vmem %s8, 32
    %v3769 = vld [vmem:[%s3768] sm:$0xff]
    %v3770 = vld [vmem:[%s3768 + $0x8] sm:$0xff]
    %v3771 = vld [vmem:[%s3768 + $0x10] sm:$0xff]
    %v3772 = vld [vmem:[%s3768 + $0x18] sm:$0xff]
    %s3773 = scalar_lea.vmem %s9, 1
    %v3774 = vld [vmem:[%s3773] sm:$0x1]
    %v3776 = vlaneseq
    %v3777 = vshrl.u32 %v3776, 7
    %v3778 = vsub.s32 0, %v3777
    %v3779 = vrot.slane %v3774, %v3778
    %v3782 = vsel %vm158, %v3766, 0
    %v3785 = vsel %vm158, %v3767, 0
    %3787 = vmatprep.subr.mxu0 0.0
    %3788 = vmatpush1.msra.mxu0 0.0
    %3789 = vmatprep.subr.mxu0 0.0
    %3790 = vmatpush1.msra.mxu0 0.0
    %3791 = vmatprep.subr.mxu0 0.0
    %3792 = vmatpush1.msra.mxu0 0.0
    %3793 = vmatprep.subr.mxu0 0.0
    %3794 = vmatpush1.msra.mxu0 0.0
    %3795 = vmatprep.subr.mxu0 0.0
    %3796 = vmatpush1.msra.mxu0 0.0
    %3797 = vmatprep.subr.mxu0 0.0
    %3798 = vmatpush1.msra.mxu0 0.0
    %3799 = vmatprep.subr.mxu0 0.0
    %3800 = vmatpush1.msra.mxu0 0.0
    %3801 = vmatprep.subr.mxu0 0.0
    %3802 = vmatpush1.msra.mxu0 0.0
    %3803 = vmatprep.subr.mxu0 0.0
    %3804 = vmatpush1.msra.mxu0 0.0
    %3805 = vmatprep.subr.mxu0 0.0
    %3806 = vmatpush1.msra.mxu0 0.0
    %3807 = vmatprep.subr.mxu0 0.0
    %3808 = vmatpush1.msra.mxu0 0.0
    %3809 = vmatprep.subr.mxu0 0.0
    %3810 = vmatpush1.msra.mxu0 0.0
    %3811 = vmatprep.subr.mxu0 0.0
    %3812 = vmatpush1.msra.mxu0 %v3772
    %3813 = vmatprep.subr.mxu0 0.0
    %3814 = vmatpush1.msra.mxu0 %v3771
    %3815 = vmatprep.subr.mxu0 0.0
    %3816 = vmatpush1.msra.mxu0 %v3770
    %3817 = vmatprep.subr.mxu0 0.0
    %3818 = vmatpush1.msra.mxu0 %v3769
    %3819 = vmatprep.subr.mxu0 0.0
    %3820 = vmatpush2.msra.mxu0 0.0
    %3821 = vmatprep.subr.mxu0 0.0
    %3822 = vmatpush2.msra.mxu0 0.0
    %3823 = vmatprep.subr.mxu0 0.0
    %3824 = vmatpush2.msra.mxu0 0.0
    %3825 = vmatprep.subr.mxu0 0.0
    %3826 = vmatpush2.msra.mxu0 0.0
    %3827 = vmatprep.subr.mxu0 0.0
    %3828 = vmatpush2.msra.mxu0 0.0
    %3829 = vmatprep.subr.mxu0 0.0
    %3830 = vmatpush2.msra.mxu0 0.0
    %3831 = vmatprep.subr.mxu0 0.0
    %3832 = vmatpush2.msra.mxu0 0.0
    %3833 = vmatprep.subr.mxu0 0.0
    %3834 = vmatpush2.msra.mxu0 0.0
    %3835 = vmatprep.subr.mxu0 0.0
    %3836 = vmatpush2.msra.mxu0 0.0
    %3837 = vmatprep.subr.mxu0 0.0
    %3838 = vmatpush2.msra.mxu0 0.0
    %3839 = vmatprep.subr.mxu0 0.0
    %3840 = vmatpush2.msra.mxu0 0.0
    %3841 = vmatprep.subr.mxu0 0.0
    %3842 = vmatpush2.msra.mxu0 0.0
    %3843 = vmatprep.subr.mxu0 0.0
    %3844 = vmatpush2.msra.mxu0 0.0
    %3845 = vmatprep.subr.mxu0 0.0
    %3846 = vmatpush2.msra.mxu0 0.0
    %3847 = vmatprep.subr.mxu0 0.0
    %3848 = vmatpush2.msra.mxu0 0.0
    %3849 = vmatprep.subr.mxu0 0.0
    %3850 = vmatpush2.msra.mxu0 0.0
    %3851 = vmatprep.mubr.f32.mxu0 0.0
    %3852 = vmatmul.mubr.f32.gmra.mxu0 %v3782
    %v3853 = vpop.f32.mrf.mxu0
    %v3854 = vadd.f32 %v3779, %v3853
    %v3855 = vpop.f32.mrf.mxu0
    %3856 = vmatprep.mubr.f32.mxu0 0.0
    %3857 = vmatmul.mubr.f32.gmra.mxu0 %v3785
    %v3858 = vpop.f32.mrf.mxu0
    %v3859 = vadd.f32 %v3779, %v3858
    %v3860 = vpop.f32.mrf.mxu0
    %3861 = vdwg.mxu0
    %s3862 = scalar_lea.vmem [#allocation8], 32
    %v3863 = vld [vmem:[%s3862] sm:$0xff]
    %v3864 = vld [vmem:[%s3862 + $0x8] sm:$0xff]
    %v3865 = vld [vmem:[%s3862 + $0x10] sm:$0xff]
    %v3866 = vld [vmem:[%s3862 + $0x18] sm:$0xff]
    %s3867 = scalar_lea.vmem %s11, 1
    %v3868 = vld [vmem:[%s3867] sm:$0x1]
    %v3870 = vlaneseq
    %v3871 = vshrl.u32 %v3870, 7
    %v3872 = vsub.s32 0, %v3871
    %v3873 = vrot.slane %v3868, %v3872
    %3875 = vmatprep.subr.mxu0 0.0
    %3876 = vmatpush1.msra.mxu0 0.0
    %3877 = vmatprep.subr.mxu0 0.0
    %3878 = vmatpush1.msra.mxu0 0.0
    %3879 = vmatprep.subr.mxu0 0.0
    %3880 = vmatpush1.msra.mxu0 0.0
    %3881 = vmatprep.subr.mxu0 0.0
    %3882 = vmatpush1.msra.mxu0 0.0
    %3883 = vmatprep.subr.mxu0 0.0
    %3884 = vmatpush1.msra.mxu0 0.0
    %3885 = vmatprep.subr.mxu0 0.0
    %3886 = vmatpush1.msra.mxu0 0.0
    %3887 = vmatprep.subr.mxu0 0.0
    %3888 = vmatpush1.msra.mxu0 0.0
    %3889 = vmatprep.subr.mxu0 0.0
    %3890 = vmatpush1.msra.mxu0 0.0
    %3891 = vmatprep.subr.mxu0 0.0
    %3892 = vmatpush1.msra.mxu0 0.0
    %3893 = vmatprep.subr.mxu0 0.0
    %3894 = vmatpush1.msra.mxu0 0.0
    %3895 = vmatprep.subr.mxu0 0.0
    %3896 = vmatpush1.msra.mxu0 0.0
    %3897 = vmatprep.subr.mxu0 0.0
    %3898 = vmatpush1.msra.mxu0 0.0
    %3899 = vmatprep.subr.mxu0 0.0
    %3900 = vmatpush1.msra.mxu0 %v3866
    %3901 = vmatprep.subr.mxu0 0.0
    %3902 = vmatpush1.msra.mxu0 %v3865
    %3903 = vmatprep.subr.mxu0 0.0
    %3904 = vmatpush1.msra.mxu0 %v3864
    %3905 = vmatprep.subr.mxu0 0.0
    %3906 = vmatpush1.msra.mxu0 %v3863
    %3907 = vmatprep.subr.mxu0 0.0
    %3908 = vmatpush2.msra.mxu0 0.0
    %3909 = vmatprep.subr.mxu0 0.0
    %3910 = vmatpush2.msra.mxu0 0.0
    %3911 = vmatprep.subr.mxu0 0.0
    %3912 = vmatpush2.msra.mxu0 0.0
    %3913 = vmatprep.subr.mxu0 0.0
    %3914 = vmatpush2.msra.mxu0 0.0
    %3915 = vmatprep.subr.mxu0 0.0
    %3916 = vmatpush2.msra.mxu0 0.0
    %3917 = vmatprep.subr.mxu0 0.0
    %3918 = vmatpush2.msra.mxu0 0.0
    %3919 = vmatprep.subr.mxu0 0.0
    %3920 = vmatpush2.msra.mxu0 0.0
    %3921 = vmatprep.subr.mxu0 0.0
    %3922 = vmatpush2.msra.mxu0 0.0
    %3923 = vmatprep.subr.mxu0 0.0
    %3924 = vmatpush2.msra.mxu0 0.0
    %3925 = vmatprep.subr.mxu0 0.0
    %3926 = vmatpush2.msra.mxu0 0.0
    %3927 = vmatprep.subr.mxu0 0.0
    %3928 = vmatpush2.msra.mxu0 0.0
    %3929 = vmatprep.subr.mxu0 0.0
    %3930 = vmatpush2.msra.mxu0 0.0
    %3931 = vmatprep.subr.mxu0 0.0
    %3932 = vmatpush2.msra.mxu0 0.0
    %3933 = vmatprep.subr.mxu0 0.0
    %3934 = vmatpush2.msra.mxu0 0.0
    %3935 = vmatprep.subr.mxu0 0.0
    %3936 = vmatpush2.msra.mxu0 0.0
    %3937 = vmatprep.subr.mxu0 0.0
    %3938 = vmatpush2.msra.mxu0 0.0
    %3939 = vmatprep.mubr.f32.mxu0 0.0
    %3940 = vmatmul.mubr.f32.gmra.mxu0 %v1389
    %v3941 = vpop.f32.mrf.mxu0
    %v3942 = vadd.f32 %v3873, %v3941
    %v3943 = vpop.f32.mrf.mxu0
    %3944 = vmatprep.mubr.f32.mxu0 0.0
    %3945 = vmatmul.mubr.f32.gmra.mxu0 %v1392
    %v3946 = vpop.f32.mrf.mxu0
    %v3947 = vadd.f32 %v3873, %v3946
    %v3948 = vpop.f32.mrf.mxu0
    %3949 = vdwg.mxu0
    %s3950 = scalar_lea.vmem [#allocation10], 32
    %v3951 = vld [vmem:[%s3950] sm:$0xff]
    %v3952 = vld [vmem:[%s3950 + $0x8] sm:$0xff]
    %v3953 = vld [vmem:[%s3950 + $0x10] sm:$0xff]
    %v3954 = vld [vmem:[%s3950 + $0x18] sm:$0xff]
    %s3955 = scalar_lea.vmem %s13, 1
    %v3956 = vld [vmem:[%s3955] sm:$0x1]
    %v3958 = vsel %vm317, %v3854, 0
    %v3961 = vsel %vm317, %v3859, 0
    %v3964 = vsel %vm317, %v3942, 0
    %v3967 = vsel %vm317, %v3947, 0
    %3969 = vmatprep.subr.mxu0 0.0
    %3970 = vmatpush1.xpose.msra.mxu0 0.0
    %3971 = vmatprep.subr.mxu0 0.0
    %3972 = vmatpush1.xpose.msra.mxu0 0.0
    %3973 = vmatprep.subr.mxu0 0.0
    %3974 = vmatpush1.xpose.msra.mxu0 0.0
    %3975 = vmatprep.subr.mxu0 0.0
    %3976 = vmatpush1.xpose.msra.mxu0 0.0
    %3977 = vmatprep.subr.mxu0 0.0
    %3978 = vmatpush1.xpose.msra.mxu0 0.0
    %3979 = vmatprep.subr.mxu0 0.0
    %3980 = vmatpush1.xpose.msra.mxu0 0.0
    %3981 = vmatprep.subr.mxu0 0.0
    %3982 = vmatpush1.xpose.msra.mxu0 0.0
    %3983 = vmatprep.subr.mxu0 0.0
    %3984 = vmatpush1.xpose.msra.mxu0 0.0
    %3985 = vmatprep.subr.mxu0 0.0
    %3986 = vmatpush1.xpose.msra.mxu0 0.0
    %3987 = vmatprep.subr.mxu0 0.0
    %3988 = vmatpush1.xpose.msra.mxu0 0.0
    %3989 = vmatprep.subr.mxu0 0.0
    %3990 = vmatpush1.xpose.msra.mxu0 0.0
    %3991 = vmatprep.subr.mxu0 0.0
    %3992 = vmatpush1.xpose.msra.mxu0 0.0
    %3993 = vmatprep.subr.mxu0 0.0
    %3994 = vmatpush1.xpose.msra.mxu0 0.0
    %3995 = vmatprep.subr.mxu0 0.0
    %3996 = vmatpush1.xpose.msra.mxu0 0.0
    %3997 = vmatprep.subr.mxu0 0.0
    %3998 = vmatpush1.xpose.msra.mxu0 %v3967
    %3999 = vmatprep.subr.mxu0 0.0
    %4000 = vmatpush1.xpose.msra.mxu0 %v3964
    %4001 = vmatprep.subr.mxu0 0.0
    %4002 = vmatpush2.xpose.msra.mxu0 0.0
    %4003 = vmatprep.subr.mxu0 0.0
    %4004 = vmatpush2.xpose.msra.mxu0 0.0
    %4005 = vmatprep.subr.mxu0 0.0
    %4006 = vmatpush2.xpose.msra.mxu0 0.0
    %4007 = vmatprep.subr.mxu0 0.0
    %4008 = vmatpush2.xpose.msra.mxu0 0.0
    %4009 = vmatprep.subr.mxu0 0.0
    %4010 = vmatpush2.xpose.msra.mxu0 0.0
    %4011 = vmatprep.subr.mxu0 0.0
    %4012 = vmatpush2.xpose.msra.mxu0 0.0
    %4013 = vmatprep.subr.mxu0 0.0
    %4014 = vmatpush2.xpose.msra.mxu0 0.0
    %4015 = vmatprep.subr.mxu0 0.0
    %4016 = vmatpush2.xpose.msra.mxu0 0.0
    %4017 = vmatprep.subr.mxu0 0.0
    %4018 = vmatpush2.xpose.msra.mxu0 0.0
    %4019 = vmatprep.subr.mxu0 0.0
    %4020 = vmatpush2.xpose.msra.mxu0 0.0
    %4021 = vmatprep.subr.mxu0 0.0
    %4022 = vmatpush2.xpose.msra.mxu0 0.0
    %4023 = vmatprep.subr.mxu0 0.0
    %4024 = vmatpush2.xpose.msra.mxu0 0.0
    %4025 = vmatprep.subr.mxu0 0.0
    %4026 = vmatpush2.xpose.msra.mxu0 0.0
    %4027 = vmatprep.subr.mxu0 0.0
    %4028 = vmatpush2.xpose.msra.mxu0 0.0
    %4029 = vmatprep.subr.mxu0 0.0
    %4030 = vmatpush2.xpose.msra.mxu0 0.0
    %4031 = vmatprep.subr.mxu0 0.0
    %4032 = vmatpush2.xpose.msra.mxu0 0.0
    %4033 = vmatprep.mubr.f32.mxu0 0.0
    %4034 = vmatmul.mubr.f32.gmra.mxu0 %v3958
    %v4035 = vpop.f32.mrf.mxu0
    %v4036 = vadd.f32 %v154, %v4035
    %v4037 = vpop.f32.mrf.mxu0
    %4038 = vmatprep.mubr.f32.mxu0 0.0
    %4039 = vmatmul.mubr.f32.gmra.mxu0 %v3961
    %v4040 = vpop.f32.mrf.mxu0
    %v4041 = vadd.f32 %v155, %v4040
    %v4042 = vpop.f32.mrf.mxu0
    %4043 = vdwg.mxu0
    %v4044 = vsel %vm401, %v4036, -inf
    %4045 = vmax.xlane.f32.xlu0 %v4044
    %v4046 = vpop.xlane.xlu0 %4045
    %v4047 = vsel %vm401, %v4041, -inf
    %4048 = vmax.xlane.f32.xlu0 %v4047
    %v4049 = vpop.xlane.xlu0 %4048
    %v4050 = vsub.f32 %v4036, %v4046
    %v4051 = vsub.f32 %v4041, %v4049
    %v4052 = vmul.f32 %v4050, 1.442695
    %v4053 = vpow.pop %v4052
    %v4054 = vmul.f32 %v4051, 1.442695
    %v4055 = vpow.pop %v4054
    %v4056 = vsel %vm401, %v4053, 0.0
    %4057 = vadd.xlane.f32.xlu0 %v4056
    %v4058 = vpop.xlane.xlu0 %4057
    %v4059 = vsel %vm401, %v4055, 0.0
    %4060 = vadd.xlane.f32.xlu0 %v4059
    %v4061 = vpop.xlane.xlu0 %4060
    %v4062 = vrcp.pop %v4058
    %v4063 = vrcp.pop %v4061
    %v4064 = vmul.f32 %v4053, %v4062
    %v4065 = vmul.f32 %v4055, %v4063
    %4066 = vrot.lane.b32.xlu0 %v3942, 96
    %v4067 = vpop.permute.xlu0 %4066
    %4068 = vrot.lane.b32.xlu0 %v3947, 96
    %v4069 = vpop.permute.xlu0 %4068
    %v4073 = vsel %vm401, %v4064, 0
    %v4076 = vsel %vm401, %v4065, 0
    %4078 = vmatprep.subr.mxu0 0.0
    %4079 = vmatpush1.msra.mxu0 0.0
    %4080 = vmatprep.subr.mxu0 0.0
    %4081 = vmatpush1.msra.mxu0 0.0
    %4082 = vmatprep.subr.mxu0 0.0
    %4083 = vmatpush1.msra.mxu0 0.0
    %4084 = vmatprep.subr.mxu0 0.0
    %4085 = vmatpush1.msra.mxu0 0.0
    %4086 = vmatprep.subr.mxu0 0.0
    %4087 = vmatpush1.msra.mxu0 0.0
    %4088 = vmatprep.subr.mxu0 0.0
    %4089 = vmatpush1.msra.mxu0 0.0
    %4090 = vmatprep.subr.mxu0 0.0
    %4091 = vmatpush1.msra.mxu0 0.0
    %4092 = vmatprep.subr.mxu0 0.0
    %4093 = vmatpush1.msra.mxu0 0.0
    %4094 = vmatprep.subr.mxu0 0.0
    %4095 = vmatpush1.msra.mxu0 0.0
    %4096 = vmatprep.subr.mxu0 0.0
    %4097 = vmatpush1.msra.mxu0 0.0
    %4098 = vmatprep.subr.mxu0 0.0
    %4099 = vmatpush1.msra.mxu0 0.0
    %4100 = vmatprep.subr.mxu0 0.0
    %4101 = vmatpush1.msra.mxu0 0.0
    %4102 = vmatprep.subr.mxu0 0.0
    %4103 = vmatpush1.msra.mxu0 0.0
    %4104 = vmatprep.subr.mxu0 0.0
    %4105 = vmatpush1.msra.mxu0 0.0
    %4106 = vmatprep.subr.mxu0 0.0
    %4107 = vmatpush1.msra.mxu0 %v4069
    %4108 = vmatprep.subr.mxu0 0.0
    %4109 = vmatpush1.msra.mxu0 %v4067
    %4110 = vmatprep.subr.mxu0 0.0
    %4111 = vmatpush2.msra.mxu0 0.0
    %4112 = vmatprep.subr.mxu0 0.0
    %4113 = vmatpush2.msra.mxu0 0.0
    %4114 = vmatprep.subr.mxu0 0.0
    %4115 = vmatpush2.msra.mxu0 0.0
    %4116 = vmatprep.subr.mxu0 0.0
    %4117 = vmatpush2.msra.mxu0 0.0
    %4118 = vmatprep.subr.mxu0 0.0
    %4119 = vmatpush2.msra.mxu0 0.0
    %4120 = vmatprep.subr.mxu0 0.0
    %4121 = vmatpush2.msra.mxu0 0.0
    %4122 = vmatprep.subr.mxu0 0.0
    %4123 = vmatpush2.msra.mxu0 0.0
    %4124 = vmatprep.subr.mxu0 0.0
    %4125 = vmatpush2.msra.mxu0 0.0
    %4126 = vmatprep.subr.mxu0 0.0
    %4127 = vmatpush2.msra.mxu0 0.0
    %4128 = vmatprep.subr.mxu0 0.0
    %4129 = vmatpush2.msra.mxu0 0.0
    %4130 = vmatprep.subr.mxu0 0.0
    %4131 = vmatpush2.msra.mxu0 0.0
    %4132 = vmatprep.subr.mxu0 0.0
    %4133 = vmatpush2.msra.mxu0 0.0
    %4134 = vmatprep.subr.mxu0 0.0
    %4135 = vmatpush2.msra.mxu0 0.0
    %4136 = vmatprep.subr.mxu0 0.0
    %4137 = vmatpush2.msra.mxu0 0.0
    %4138 = vmatprep.subr.mxu0 0.0
    %4139 = vmatpush2.msra.mxu0 0.0
    %4140 = vmatprep.subr.mxu0 0.0
    %4141 = vmatpush2.msra.mxu0 0.0
    %4142 = vmatprep.mubr.f32.mxu0 0.0
    %4143 = vmatmul.mubr.f32.gmra.mxu0 %v4073
    %v4144 = vpop.f32.mrf.mxu0
    %v4145 = vadd.f32 0.0, %v4144
    %v4146 = vpop.f32.mrf.mxu0
    %4147 = vmatprep.mubr.f32.mxu0 0.0
    %4148 = vmatmul.mubr.f32.gmra.mxu0 %v4076
    %v4149 = vpop.f32.mrf.mxu0
    %v4150 = vadd.f32 0.0, %v4149
    %v4151 = vpop.f32.mrf.mxu0
    %4152 = vdwg.mxu0
    %4153 = vrot.lane.b32.xlu0 %v3854, 120
    %v4154 = vpop.permute.xlu0 %4153
    %4155 = vrot.lane.b32.xlu0 %v3859, 120
    %v4156 = vpop.permute.xlu0 %4155
    %4157 = vrot.lane.b32.xlu0 %v3942, 120
    %v4158 = vpop.permute.xlu0 %4157
    %4159 = vrot.lane.b32.xlu0 %v3947, 120
    %v4160 = vpop.permute.xlu0 %4159
    %v4161 = vsel %vm317, %v4154, 0
    %v4163 = vsel %vm317, %v4156, 0
    %v4165 = vsel %vm317, %v4158, 0
    %v4167 = vsel %vm317, %v4160, 0
    %4169 = vmatprep.subr.mxu0 0.0
    %4170 = vmatpush1.xpose.msra.mxu0 0.0
    %4171 = vmatprep.subr.mxu0 0.0
    %4172 = vmatpush1.xpose.msra.mxu0 0.0
    %4173 = vmatprep.subr.mxu0 0.0
    %4174 = vmatpush1.xpose.msra.mxu0 0.0
    %4175 = vmatprep.subr.mxu0 0.0
    %4176 = vmatpush1.xpose.msra.mxu0 0.0
    %4177 = vmatprep.subr.mxu0 0.0
    %4178 = vmatpush1.xpose.msra.mxu0 0.0
    %4179 = vmatprep.subr.mxu0 0.0
    %4180 = vmatpush1.xpose.msra.mxu0 0.0
    %4181 = vmatprep.subr.mxu0 0.0
    %4182 = vmatpush1.xpose.msra.mxu0 0.0
    %4183 = vmatprep.subr.mxu0 0.0
    %4184 = vmatpush1.xpose.msra.mxu0 0.0
    %4185 = vmatprep.subr.mxu0 0.0
    %4186 = vmatpush1.xpose.msra.mxu0 0.0
    %4187 = vmatprep.subr.mxu0 0.0
    %4188 = vmatpush1.xpose.msra.mxu0 0.0
    %4189 = vmatprep.subr.mxu0 0.0
    %4190 = vmatpush1.xpose.msra.mxu0 0.0
    %4191 = vmatprep.subr.mxu0 0.0
    %4192 = vmatpush1.xpose.msra.mxu0 0.0
    %4193 = vmatprep.subr.mxu0 0.0
    %4194 = vmatpush1.xpose.msra.mxu0 0.0
    %4195 = vmatprep.subr.mxu0 0.0
    %4196 = vmatpush1.xpose.msra.mxu0 0.0
    %4197 = vmatprep.subr.mxu0 0.0
    %4198 = vmatpush1.xpose.msra.mxu0 %v4167
    %4199 = vmatprep.subr.mxu0 0.0
    %4200 = vmatpush1.xpose.msra.mxu0 %v4165
    %4201 = vmatprep.subr.mxu0 0.0
    %4202 = vmatpush2.xpose.msra.mxu0 0.0
    %4203 = vmatprep.subr.mxu0 0.0
    %4204 = vmatpush2.xpose.msra.mxu0 0.0
    %4205 = vmatprep.subr.mxu0 0.0
    %4206 = vmatpush2.xpose.msra.mxu0 0.0
    %4207 = vmatprep.subr.mxu0 0.0
    %4208 = vmatpush2.xpose.msra.mxu0 0.0
    %4209 = vmatprep.subr.mxu0 0.0
    %4210 = vmatpush2.xpose.msra.mxu0 0.0
    %4211 = vmatprep.subr.mxu0 0.0
    %4212 = vmatpush2.xpose.msra.mxu0 0.0
    %4213 = vmatprep.subr.mxu0 0.0
    %4214 = vmatpush2.xpose.msra.mxu0 0.0
    %4215 = vmatprep.subr.mxu0 0.0
    %4216 = vmatpush2.xpose.msra.mxu0 0.0
    %4217 = vmatprep.subr.mxu0 0.0
    %4218 = vmatpush2.xpose.msra.mxu0 0.0
    %4219 = vmatprep.subr.mxu0 0.0
    %4220 = vmatpush2.xpose.msra.mxu0 0.0
    %4221 = vmatprep.subr.mxu0 0.0
    %4222 = vmatpush2.xpose.msra.mxu0 0.0
    %4223 = vmatprep.subr.mxu0 0.0
    %4224 = vmatpush2.xpose.msra.mxu0 0.0
    %4225 = vmatprep.subr.mxu0 0.0
    %4226 = vmatpush2.xpose.msra.mxu0 0.0
    %4227 = vmatprep.subr.mxu0 0.0
    %4228 = vmatpush2.xpose.msra.mxu0 0.0
    %4229 = vmatprep.subr.mxu0 0.0
    %4230 = vmatpush2.xpose.msra.mxu0 0.0
    %4231 = vmatprep.subr.mxu0 0.0
    %4232 = vmatpush2.xpose.msra.mxu0 0.0
    %4233 = vmatprep.mubr.f32.mxu0 0.0
    %4234 = vmatmul.mubr.f32.gmra.mxu0 %v4161
    %v4235 = vpop.f32.mrf.mxu0
    %v4236 = vadd.f32 %v154, %v4235
    %v4237 = vpop.f32.mrf.mxu0
    %4238 = vmatprep.mubr.f32.mxu0 0.0
    %4239 = vmatmul.mubr.f32.gmra.mxu0 %v4163
    %v4240 = vpop.f32.mrf.mxu0
    %v4241 = vadd.f32 %v155, %v4240
    %v4242 = vpop.f32.mrf.mxu0
    %4243 = vdwg.mxu0
    %v4244 = vsel %vm401, %v4236, -inf
    %4245 = vmax.xlane.f32.xlu0 %v4244
    %v4246 = vpop.xlane.xlu0 %4245
    %v4247 = vsel %vm401, %v4241, -inf
    %4248 = vmax.xlane.f32.xlu0 %v4247
    %v4249 = vpop.xlane.xlu0 %4248
    %v4250 = vsub.f32 %v4236, %v4246
    %v4251 = vsub.f32 %v4241, %v4249
    %v4252 = vmul.f32 %v4250, 1.442695
    %v4253 = vpow.pop %v4252
    %v4254 = vmul.f32 %v4251, 1.442695
    %v4255 = vpow.pop %v4254
    %v4256 = vsel %vm401, %v4253, 0.0
    %4257 = vadd.xlane.f32.xlu0 %v4256
    %v4258 = vpop.xlane.xlu0 %4257
    %v4259 = vsel %vm401, %v4255, 0.0
    %4260 = vadd.xlane.f32.xlu0 %v4259
    %v4261 = vpop.xlane.xlu0 %4260
    %v4262 = vrcp.pop %v4258
    %v4263 = vrcp.pop %v4261
    %v4264 = vmul.f32 %v4253, %v4262
    %v4265 = vmul.f32 %v4255, %v4263
    %4266 = vrot.lane.b32.xlu0 %v3942, 88
    %v4267 = vpop.permute.xlu0 %4266
    %4268 = vrot.lane.b32.xlu0 %v3947, 88
    %v4269 = vpop.permute.xlu0 %4268
    %v4273 = vsel %vm401, %v4264, 0
    %v4276 = vsel %vm401, %v4265, 0
    %4278 = vmatprep.subr.mxu0 0.0
    %4279 = vmatpush1.msra.mxu0 0.0
    %4280 = vmatprep.subr.mxu0 0.0
    %4281 = vmatpush1.msra.mxu0 0.0
    %4282 = vmatprep.subr.mxu0 0.0
    %4283 = vmatpush1.msra.mxu0 0.0
    %4284 = vmatprep.subr.mxu0 0.0
    %4285 = vmatpush1.msra.mxu0 0.0
    %4286 = vmatprep.subr.mxu0 0.0
    %4287 = vmatpush1.msra.mxu0 0.0
    %4288 = vmatprep.subr.mxu0 0.0
    %4289 = vmatpush1.msra.mxu0 0.0
    %4290 = vmatprep.subr.mxu0 0.0
    %4291 = vmatpush1.msra.mxu0 0.0
    %4292 = vmatprep.subr.mxu0 0.0
    %4293 = vmatpush1.msra.mxu0 0.0
    %4294 = vmatprep.subr.mxu0 0.0
    %4295 = vmatpush1.msra.mxu0 0.0
    %4296 = vmatprep.subr.mxu0 0.0
    %4297 = vmatpush1.msra.mxu0 0.0
    %4298 = vmatprep.subr.mxu0 0.0
    %4299 = vmatpush1.msra.mxu0 0.0
    %4300 = vmatprep.subr.mxu0 0.0
    %4301 = vmatpush1.msra.mxu0 0.0
    %4302 = vmatprep.subr.mxu0 0.0
    %4303 = vmatpush1.msra.mxu0 0.0
    %4304 = vmatprep.subr.mxu0 0.0
    %4305 = vmatpush1.msra.mxu0 0.0
    %4306 = vmatprep.subr.mxu0 0.0
    %4307 = vmatpush1.msra.mxu0 %v4269
    %4308 = vmatprep.subr.mxu0 0.0
    %4309 = vmatpush1.msra.mxu0 %v4267
    %4310 = vmatprep.subr.mxu0 0.0
    %4311 = vmatpush2.msra.mxu0 0.0
    %4312 = vmatprep.subr.mxu0 0.0
    %4313 = vmatpush2.msra.mxu0 0.0
    %4314 = vmatprep.subr.mxu0 0.0
    %4315 = vmatpush2.msra.mxu0 0.0
    %4316 = vmatprep.subr.mxu0 0.0
    %4317 = vmatpush2.msra.mxu0 0.0
    %4318 = vmatprep.subr.mxu0 0.0
    %4319 = vmatpush2.msra.mxu0 0.0
    %4320 = vmatprep.subr.mxu0 0.0
    %4321 = vmatpush2.msra.mxu0 0.0
    %4322 = vmatprep.subr.mxu0 0.0
    %4323 = vmatpush2.msra.mxu0 0.0
    %4324 = vmatprep.subr.mxu0 0.0
    %4325 = vmatpush2.msra.mxu0 0.0
    %4326 = vmatprep.subr.mxu0 0.0
    %4327 = vmatpush2.msra.mxu0 0.0
    %4328 = vmatprep.subr.mxu0 0.0
    %4329 = vmatpush2.msra.mxu0 0.0
    %4330 = vmatprep.subr.mxu0 0.0
    %4331 = vmatpush2.msra.mxu0 0.0
    %4332 = vmatprep.subr.mxu0 0.0
    %4333 = vmatpush2.msra.mxu0 0.0
    %4334 = vmatprep.subr.mxu0 0.0
    %4335 = vmatpush2.msra.mxu0 0.0
    %4336 = vmatprep.subr.mxu0 0.0
    %4337 = vmatpush2.msra.mxu0 0.0
    %4338 = vmatprep.subr.mxu0 0.0
    %4339 = vmatpush2.msra.mxu0 0.0
    %4340 = vmatprep.subr.mxu0 0.0
    %4341 = vmatpush2.msra.mxu0 0.0
    %4342 = vmatprep.mubr.f32.mxu0 0.0
    %4343 = vmatmul.mubr.f32.gmra.mxu0 %v4273
    %v4344 = vpop.f32.mrf.mxu0
    %v4345 = vadd.f32 0.0, %v4344
    %v4346 = vpop.f32.mrf.mxu0
    %4347 = vmatprep.mubr.f32.mxu0 0.0
    %4348 = vmatmul.mubr.f32.gmra.mxu0 %v4276
    %v4349 = vpop.f32.mrf.mxu0
    %v4350 = vadd.f32 0.0, %v4349
    %v4351 = vpop.f32.mrf.mxu0
    %4352 = vdwg.mxu0
    %4353 = vrot.lane.b32.xlu0 %v3854, 112
    %v4354 = vpop.permute.xlu0 %4353
    %4355 = vrot.lane.b32.xlu0 %v3859, 112
    %v4356 = vpop.permute.xlu0 %4355
    %4357 = vrot.lane.b32.xlu0 %v3942, 112
    %v4358 = vpop.permute.xlu0 %4357
    %4359 = vrot.lane.b32.xlu0 %v3947, 112
    %v4360 = vpop.permute.xlu0 %4359
    %v4361 = vsel %vm317, %v4354, 0
    %v4363 = vsel %vm317, %v4356, 0
    %v4365 = vsel %vm317, %v4358, 0
    %v4367 = vsel %vm317, %v4360, 0
    %4369 = vmatprep.subr.mxu0 0.0
    %4370 = vmatpush1.xpose.msra.mxu0 0.0
    %4371 = vmatprep.subr.mxu0 0.0
    %4372 = vmatpush1.xpose.msra.mxu0 0.0
    %4373 = vmatprep.subr.mxu0 0.0
    %4374 = vmatpush1.xpose.msra.mxu0 0.0
    %4375 = vmatprep.subr.mxu0 0.0
    %4376 = vmatpush1.xpose.msra.mxu0 0.0
    %4377 = vmatprep.subr.mxu0 0.0
    %4378 = vmatpush1.xpose.msra.mxu0 0.0
    %4379 = vmatprep.subr.mxu0 0.0
    %4380 = vmatpush1.xpose.msra.mxu0 0.0
    %4381 = vmatprep.subr.mxu0 0.0
    %4382 = vmatpush1.xpose.msra.mxu0 0.0
    %4383 = vmatprep.subr.mxu0 0.0
    %4384 = vmatpush1.xpose.msra.mxu0 0.0
    %4385 = vmatprep.subr.mxu0 0.0
    %4386 = vmatpush1.xpose.msra.mxu0 0.0
    %4387 = vmatprep.subr.mxu0 0.0
    %4388 = vmatpush1.xpose.msra.mxu0 0.0
    %4389 = vmatprep.subr.mxu0 0.0
    %4390 = vmatpush1.xpose.msra.mxu0 0.0
    %4391 = vmatprep.subr.mxu0 0.0
    %4392 = vmatpush1.xpose.msra.mxu0 0.0
    %4393 = vmatprep.subr.mxu0 0.0
    %4394 = vmatpush1.xpose.msra.mxu0 0.0
    %4395 = vmatprep.subr.mxu0 0.0
    %4396 = vmatpush1.xpose.msra.mxu0 0.0
    %4397 = vmatprep.subr.mxu0 0.0
    %4398 = vmatpush1.xpose.msra.mxu0 %v4367
    %4399 = vmatprep.subr.mxu0 0.0
    %4400 = vmatpush1.xpose.msra.mxu0 %v4365
    %4401 = vmatprep.subr.mxu0 0.0
    %4402 = vmatpush2.xpose.msra.mxu0 0.0
    %4403 = vmatprep.subr.mxu0 0.0
    %4404 = vmatpush2.xpose.msra.mxu0 0.0
    %4405 = vmatprep.subr.mxu0 0.0
    %4406 = vmatpush2.xpose.msra.mxu0 0.0
    %4407 = vmatprep.subr.mxu0 0.0
    %4408 = vmatpush2.xpose.msra.mxu0 0.0
    %4409 = vmatprep.subr.mxu0 0.0
    %4410 = vmatpush2.xpose.msra.mxu0 0.0
    %4411 = vmatprep.subr.mxu0 0.0
    %4412 = vmatpush2.xpose.msra.mxu0 0.0
    %4413 = vmatprep.subr.mxu0 0.0
    %4414 = vmatpush2.xpose.msra.mxu0 0.0
    %4415 = vmatprep.subr.mxu0 0.0
    %4416 = vmatpush2.xpose.msra.mxu0 0.0
    %4417 = vmatprep.subr.mxu0 0.0
    %4418 = vmatpush2.xpose.msra.mxu0 0.0
    %4419 = vmatprep.subr.mxu0 0.0
    %4420 = vmatpush2.xpose.msra.mxu0 0.0
    %4421 = vmatprep.subr.mxu0 0.0
    %4422 = vmatpush2.xpose.msra.mxu0 0.0
    %4423 = vmatprep.subr.mxu0 0.0
    %4424 = vmatpush2.xpose.msra.mxu0 0.0
    %4425 = vmatprep.subr.mxu0 0.0
    %4426 = vmatpush2.xpose.msra.mxu0 0.0
    %4427 = vmatprep.subr.mxu0 0.0
    %4428 = vmatpush2.xpose.msra.mxu0 0.0
    %4429 = vmatprep.subr.mxu0 0.0
    %4430 = vmatpush2.xpose.msra.mxu0 0.0
    %4431 = vmatprep.subr.mxu0 0.0
    %4432 = vmatpush2.xpose.msra.mxu0 0.0
    %4433 = vmatprep.mubr.f32.mxu0 0.0
    %4434 = vmatmul.mubr.f32.gmra.mxu0 %v4361
    %v4435 = vpop.f32.mrf.mxu0
    %v4436 = vadd.f32 %v154, %v4435
    %v4437 = vpop.f32.mrf.mxu0
    %4438 = vmatprep.mubr.f32.mxu0 0.0
    %4439 = vmatmul.mubr.f32.gmra.mxu0 %v4363
    %v4440 = vpop.f32.mrf.mxu0
    %v4441 = vadd.f32 %v155, %v4440
    %v4442 = vpop.f32.mrf.mxu0
    %4443 = vdwg.mxu0
    %v4444 = vsel %vm401, %v4436, -inf
    %4445 = vmax.xlane.f32.xlu0 %v4444
    %v4446 = vpop.xlane.xlu0 %4445
    %v4447 = vsel %vm401, %v4441, -inf
    %4448 = vmax.xlane.f32.xlu0 %v4447
    %v4449 = vpop.xlane.xlu0 %4448
    %v4450 = vsub.f32 %v4436, %v4446
    %v4451 = vsub.f32 %v4441, %v4449
    %v4452 = vmul.f32 %v4450, 1.442695
    %v4453 = vpow.pop %v4452
    %v4454 = vmul.f32 %v4451, 1.442695
    %v4455 = vpow.pop %v4454
    %v4456 = vsel %vm401, %v4453, 0.0
    %4457 = vadd.xlane.f32.xlu0 %v4456
    %v4458 = vpop.xlane.xlu0 %4457
    %v4459 = vsel %vm401, %v4455, 0.0
    %4460 = vadd.xlane.f32.xlu0 %v4459
    %v4461 = vpop.xlane.xlu0 %4460
    %v4462 = vrcp.pop %v4458
    %v4463 = vrcp.pop %v4461
    %v4464 = vmul.f32 %v4453, %v4462
    %v4465 = vmul.f32 %v4455, %v4463
    %4466 = vrot.lane.b32.xlu0 %v3942, 80
    %v4467 = vpop.permute.xlu0 %4466
    %4468 = vrot.lane.b32.xlu0 %v3947, 80
    %v4469 = vpop.permute.xlu0 %4468
    %v4473 = vsel %vm401, %v4464, 0
    %v4476 = vsel %vm401, %v4465, 0
    %4478 = vmatprep.subr.mxu0 0.0
    %4479 = vmatpush1.msra.mxu0 0.0
    %4480 = vmatprep.subr.mxu0 0.0
    %4481 = vmatpush1.msra.mxu0 0.0
    %4482 = vmatprep.subr.mxu0 0.0
    %4483 = vmatpush1.msra.mxu0 0.0
    %4484 = vmatprep.subr.mxu0 0.0
    %4485 = vmatpush1.msra.mxu0 0.0
    %4486 = vmatprep.subr.mxu0 0.0
    %4487 = vmatpush1.msra.mxu0 0.0
    %4488 = vmatprep.subr.mxu0 0.0
    %4489 = vmatpush1.msra.mxu0 0.0
    %4490 = vmatprep.subr.mxu0 0.0
    %4491 = vmatpush1.msra.mxu0 0.0
    %4492 = vmatprep.subr.mxu0 0.0
    %4493 = vmatpush1.msra.mxu0 0.0
    %4494 = vmatprep.subr.mxu0 0.0
    %4495 = vmatpush1.msra.mxu0 0.0
    %4496 = vmatprep.subr.mxu0 0.0
    %4497 = vmatpush1.msra.mxu0 0.0
    %4498 = vmatprep.subr.mxu0 0.0
    %4499 = vmatpush1.msra.mxu0 0.0
    %4500 = vmatprep.subr.mxu0 0.0
    %4501 = vmatpush1.msra.mxu0 0.0
    %4502 = vmatprep.subr.mxu0 0.0
    %4503 = vmatpush1.msra.mxu0 0.0
    %4504 = vmatprep.subr.mxu0 0.0
    %4505 = vmatpush1.msra.mxu0 0.0
    %4506 = vmatprep.subr.mxu0 0.0
    %4507 = vmatpush1.msra.mxu0 %v4469
    %4508 = vmatprep.subr.mxu0 0.0
    %4509 = vmatpush1.msra.mxu0 %v4467
    %4510 = vmatprep.subr.mxu0 0.0
    %4511 = vmatpush2.msra.mxu0 0.0
    %4512 = vmatprep.subr.mxu0 0.0
    %4513 = vmatpush2.msra.mxu0 0.0
    %4514 = vmatprep.subr.mxu0 0.0
    %4515 = vmatpush2.msra.mxu0 0.0
    %4516 = vmatprep.subr.mxu0 0.0
    %4517 = vmatpush2.msra.mxu0 0.0
    %4518 = vmatprep.subr.mxu0 0.0
    %4519 = vmatpush2.msra.mxu0 0.0
    %4520 = vmatprep.subr.mxu0 0.0
    %4521 = vmatpush2.msra.mxu0 0.0
    %4522 = vmatprep.subr.mxu0 0.0
    %4523 = vmatpush2.msra.mxu0 0.0
    %4524 = vmatprep.subr.mxu0 0.0
    %4525 = vmatpush2.msra.mxu0 0.0
    %4526 = vmatprep.subr.mxu0 0.0
    %4527 = vmatpush2.msra.mxu0 0.0
    %4528 = vmatprep.subr.mxu0 0.0
    %4529 = vmatpush2.msra.mxu0 0.0
    %4530 = vmatprep.subr.mxu0 0.0
    %4531 = vmatpush2.msra.mxu0 0.0
    %4532 = vmatprep.subr.mxu0 0.0
    %4533 = vmatpush2.msra.mxu0 0.0
    %4534 = vmatprep.subr.mxu0 0.0
    %4535 = vmatpush2.msra.mxu0 0.0
    %4536 = vmatprep.subr.mxu0 0.0
    %4537 = vmatpush2.msra.mxu0 0.0
    %4538 = vmatprep.subr.mxu0 0.0
    %4539 = vmatpush2.msra.mxu0 0.0
    %4540 = vmatprep.subr.mxu0 0.0
    %4541 = vmatpush2.msra.mxu0 0.0
    %4542 = vmatprep.mubr.f32.mxu0 0.0
    %4543 = vmatmul.mubr.f32.gmra.mxu0 %v4473
    %v4544 = vpop.f32.mrf.mxu0
    %v4545 = vadd.f32 0.0, %v4544
    %v4546 = vpop.f32.mrf.mxu0
    %4547 = vmatprep.mubr.f32.mxu0 0.0
    %4548 = vmatmul.mubr.f32.gmra.mxu0 %v4476
    %v4549 = vpop.f32.mrf.mxu0
    %v4550 = vadd.f32 0.0, %v4549
    %v4551 = vpop.f32.mrf.mxu0
    %4552 = vdwg.mxu0
    %4553 = vrot.lane.b32.xlu0 %v3854, 104
    %v4554 = vpop.permute.xlu0 %4553
    %4555 = vrot.lane.b32.xlu0 %v3859, 104
    %v4556 = vpop.permute.xlu0 %4555
    %4557 = vrot.lane.b32.xlu0 %v3942, 104
    %v4558 = vpop.permute.xlu0 %4557
    %4559 = vrot.lane.b32.xlu0 %v3947, 104
    %v4560 = vpop.permute.xlu0 %4559
    %v4561 = vsel %vm317, %v4554, 0
    %v4563 = vsel %vm317, %v4556, 0
    %v4565 = vsel %vm317, %v4558, 0
    %v4567 = vsel %vm317, %v4560, 0
    %4569 = vmatprep.subr.mxu0 0.0
    %4570 = vmatpush1.xpose.msra.mxu0 0.0
    %4571 = vmatprep.subr.mxu0 0.0
    %4572 = vmatpush1.xpose.msra.mxu0 0.0
    %4573 = vmatprep.subr.mxu0 0.0
    %4574 = vmatpush1.xpose.msra.mxu0 0.0
    %4575 = vmatprep.subr.mxu0 0.0
    %4576 = vmatpush1.xpose.msra.mxu0 0.0
    %4577 = vmatprep.subr.mxu0 0.0
    %4578 = vmatpush1.xpose.msra.mxu0 0.0
    %4579 = vmatprep.subr.mxu0 0.0
    %4580 = vmatpush1.xpose.msra.mxu0 0.0
    %4581 = vmatprep.subr.mxu0 0.0
    %4582 = vmatpush1.xpose.msra.mxu0 0.0
    %4583 = vmatprep.subr.mxu0 0.0
    %4584 = vmatpush1.xpose.msra.mxu0 0.0
    %4585 = vmatprep.subr.mxu0 0.0
    %4586 = vmatpush1.xpose.msra.mxu0 0.0
    %4587 = vmatprep.subr.mxu0 0.0
    %4588 = vmatpush1.xpose.msra.mxu0 0.0
    %4589 = vmatprep.subr.mxu0 0.0
    %4590 = vmatpush1.xpose.msra.mxu0 0.0
    %4591 = vmatprep.subr.mxu0 0.0
    %4592 = vmatpush1.xpose.msra.mxu0 0.0
    %4593 = vmatprep.subr.mxu0 0.0
    %4594 = vmatpush1.xpose.msra.mxu0 0.0
    %4595 = vmatprep.subr.mxu0 0.0
    %4596 = vmatpush1.xpose.msra.mxu0 0.0
    %4597 = vmatprep.subr.mxu0 0.0
    %4598 = vmatpush1.xpose.msra.mxu0 %v4567
    %4599 = vmatprep.subr.mxu0 0.0
    %4600 = vmatpush1.xpose.msra.mxu0 %v4565
    %4601 = vmatprep.subr.mxu0 0.0
    %4602 = vmatpush2.xpose.msra.mxu0 0.0
    %4603 = vmatprep.subr.mxu0 0.0
    %4604 = vmatpush2.xpose.msra.mxu0 0.0
    %4605 = vmatprep.subr.mxu0 0.0
    %4606 = vmatpush2.xpose.msra.mxu0 0.0
    %4607 = vmatprep.subr.mxu0 0.0
    %4608 = vmatpush2.xpose.msra.mxu0 0.0
    %4609 = vmatprep.subr.mxu0 0.0
    %4610 = vmatpush2.xpose.msra.mxu0 0.0
    %4611 = vmatprep.subr.mxu0 0.0
    %4612 = vmatpush2.xpose.msra.mxu0 0.0
    %4613 = vmatprep.subr.mxu0 0.0
    %4614 = vmatpush2.xpose.msra.mxu0 0.0
    %4615 = vmatprep.subr.mxu0 0.0
    %4616 = vmatpush2.xpose.msra.mxu0 0.0
    %4617 = vmatprep.subr.mxu0 0.0
    %4618 = vmatpush2.xpose.msra.mxu0 0.0
    %4619 = vmatprep.subr.mxu0 0.0
    %4620 = vmatpush2.xpose.msra.mxu0 0.0
    %4621 = vmatprep.subr.mxu0 0.0
    %4622 = vmatpush2.xpose.msra.mxu0 0.0
    %4623 = vmatprep.subr.mxu0 0.0
    %4624 = vmatpush2.xpose.msra.mxu0 0.0
    %4625 = vmatprep.subr.mxu0 0.0
    %4626 = vmatpush2.xpose.msra.mxu0 0.0
    %4627 = vmatprep.subr.mxu0 0.0
    %4628 = vmatpush2.xpose.msra.mxu0 0.0
    %4629 = vmatprep.subr.mxu0 0.0
    %4630 = vmatpush2.xpose.msra.mxu0 0.0
    %4631 = vmatprep.subr.mxu0 0.0
    %4632 = vmatpush2.xpose.msra.mxu0 0.0
    %4633 = vmatprep.mubr.f32.mxu0 0.0
    %4634 = vmatmul.mubr.f32.gmra.mxu0 %v4561
    %v4635 = vpop.f32.mrf.mxu0
    %v4636 = vadd.f32 %v154, %v4635
    %v4637 = vpop.f32.mrf.mxu0
    %4638 = vmatprep.mubr.f32.mxu0 0.0
    %4639 = vmatmul.mubr.f32.gmra.mxu0 %v4563
    %v4640 = vpop.f32.mrf.mxu0
    %v4641 = vadd.f32 %v155, %v4640
    %v4642 = vpop.f32.mrf.mxu0
    %4643 = vdwg.mxu0
    %v4644 = vsel %vm401, %v4636, -inf
    %4645 = vmax.xlane.f32.xlu0 %v4644
    %v4646 = vpop.xlane.xlu0 %4645
    %v4647 = vsel %vm401, %v4641, -inf
    %4648 = vmax.xlane.f32.xlu0 %v4647
    %v4649 = vpop.xlane.xlu0 %4648
    %v4650 = vsub.f32 %v4636, %v4646
    %v4651 = vsub.f32 %v4641, %v4649
    %v4652 = vmul.f32 %v4650, 1.442695
    %v4653 = vpow.pop %v4652
    %v4654 = vmul.f32 %v4651, 1.442695
    %v4655 = vpow.pop %v4654
    %v4656 = vsel %vm401, %v4653, 0.0
    %4657 = vadd.xlane.f32.xlu0 %v4656
    %v4658 = vpop.xlane.xlu0 %4657
    %v4659 = vsel %vm401, %v4655, 0.0
    %4660 = vadd.xlane.f32.xlu0 %v4659
    %v4661 = vpop.xlane.xlu0 %4660
    %v4662 = vrcp.pop %v4658
    %v4663 = vrcp.pop %v4661
    %v4664 = vmul.f32 %v4653, %v4662
    %v4665 = vmul.f32 %v4655, %v4663
    %4666 = vrot.lane.b32.xlu0 %v3942, 72
    %v4667 = vpop.permute.xlu0 %4666
    %4668 = vrot.lane.b32.xlu0 %v3947, 72
    %v4669 = vpop.permute.xlu0 %4668
    %v4673 = vsel %vm401, %v4664, 0
    %v4676 = vsel %vm401, %v4665, 0
    %4678 = vmatprep.subr.mxu0 0.0
    %4679 = vmatpush1.msra.mxu0 0.0
    %4680 = vmatprep.subr.mxu0 0.0
    %4681 = vmatpush1.msra.mxu0 0.0
    %4682 = vmatprep.subr.mxu0 0.0
    %4683 = vmatpush1.msra.mxu0 0.0
    %4684 = vmatprep.subr.mxu0 0.0
    %4685 = vmatpush1.msra.mxu0 0.0
    %4686 = vmatprep.subr.mxu0 0.0
    %4687 = vmatpush1.msra.mxu0 0.0
    %4688 = vmatprep.subr.mxu0 0.0
    %4689 = vmatpush1.msra.mxu0 0.0
    %4690 = vmatprep.subr.mxu0 0.0
    %4691 = vmatpush1.msra.mxu0 0.0
    %4692 = vmatprep.subr.mxu0 0.0
    %4693 = vmatpush1.msra.mxu0 0.0
    %4694 = vmatprep.subr.mxu0 0.0
    %4695 = vmatpush1.msra.mxu0 0.0
    %4696 = vmatprep.subr.mxu0 0.0
    %4697 = vmatpush1.msra.mxu0 0.0
    %4698 = vmatprep.subr.mxu0 0.0
    %4699 = vmatpush1.msra.mxu0 0.0
    %4700 = vmatprep.subr.mxu0 0.0
    %4701 = vmatpush1.msra.mxu0 0.0
    %4702 = vmatprep.subr.mxu0 0.0
    %4703 = vmatpush1.msra.mxu0 0.0
    %4704 = vmatprep.subr.mxu0 0.0
    %4705 = vmatpush1.msra.mxu0 0.0
    %4706 = vmatprep.subr.mxu0 0.0
    %4707 = vmatpush1.msra.mxu0 %v4669
    %4708 = vmatprep.subr.mxu0 0.0
    %4709 = vmatpush1.msra.mxu0 %v4667
    %4710 = vmatprep.subr.mxu0 0.0
    %4711 = vmatpush2.msra.mxu0 0.0
    %4712 = vmatprep.subr.mxu0 0.0
    %4713 = vmatpush2.msra.mxu0 0.0
    %4714 = vmatprep.subr.mxu0 0.0
    %4715 = vmatpush2.msra.mxu0 0.0
    %4716 = vmatprep.subr.mxu0 0.0
    %4717 = vmatpush2.msra.mxu0 0.0
    %4718 = vmatprep.subr.mxu0 0.0
    %4719 = vmatpush2.msra.mxu0 0.0
    %4720 = vmatprep.subr.mxu0 0.0
    %4721 = vmatpush2.msra.mxu0 0.0
    %4722 = vmatprep.subr.mxu0 0.0
    %4723 = vmatpush2.msra.mxu0 0.0
    %4724 = vmatprep.subr.mxu0 0.0
    %4725 = vmatpush2.msra.mxu0 0.0
    %4726 = vmatprep.subr.mxu0 0.0
    %4727 = vmatpush2.msra.mxu0 0.0
    %4728 = vmatprep.subr.mxu0 0.0
    %4729 = vmatpush2.msra.mxu0 0.0
    %4730 = vmatprep.subr.mxu0 0.0
    %4731 = vmatpush2.msra.mxu0 0.0
    %4732 = vmatprep.subr.mxu0 0.0
    %4733 = vmatpush2.msra.mxu0 0.0
    %4734 = vmatprep.subr.mxu0 0.0
    %4735 = vmatpush2.msra.mxu0 0.0
    %4736 = vmatprep.subr.mxu0 0.0
    %4737 = vmatpush2.msra.mxu0 0.0
    %4738 = vmatprep.subr.mxu0 0.0
    %4739 = vmatpush2.msra.mxu0 0.0
    %4740 = vmatprep.subr.mxu0 0.0
    %4741 = vmatpush2.msra.mxu0 0.0
    %4742 = vmatprep.mubr.f32.mxu0 0.0
    %4743 = vmatmul.mubr.f32.gmra.mxu0 %v4673
    %v4744 = vpop.f32.mrf.mxu0
    %v4745 = vadd.f32 0.0, %v4744
    %v4746 = vpop.f32.mrf.mxu0
    %4747 = vmatprep.mubr.f32.mxu0 0.0
    %4748 = vmatmul.mubr.f32.gmra.mxu0 %v4676
    %v4749 = vpop.f32.mrf.mxu0
    %v4750 = vadd.f32 0.0, %v4749
    %v4751 = vpop.f32.mrf.mxu0
    %4752 = vdwg.mxu0
    %4755 = vrot.lane.b32.xlu0 %v4345, 8
    %v4756 = vpop.permute.xlu0 %4755
    %4757 = vrot.lane.b32.xlu0 %v4350, 8
    %v4758 = vpop.permute.xlu0 %4757
    %4763 = vrot.lane.b32.xlu0 %v4545, 16
    %v4764 = vpop.permute.xlu0 %4763
    %4765 = vrot.lane.b32.xlu0 %v4550, 16
    %v4766 = vpop.permute.xlu0 %4765
    %4771 = vrot.lane.b32.xlu0 %v4745, 24
    %v4772 = vpop.permute.xlu0 %4771
    %4773 = vrot.lane.b32.xlu0 %v4750, 24
    %v4774 = vpop.permute.xlu0 %4773
    %v4777 = vsel %vm317, %v4145, %v4756
    %v4778 = vsel %vm317, %v4150, %v4758
    %v4779 = vsel %vm401, %v4777, %v4764
    %v4780 = vsel %vm401, %v4778, %v4766
    %v4781 = vsel %vm1139, %v4779, %v4772
    %v4782 = vsel %vm1139, %v4780, %v4774
    %v4784 = vlaneseq
    %v4785 = vshrl.u32 %v4784, 7
    %v4786 = vsub.s32 0, %v4785
    %v4787 = vrot.slane %v3956, %v4786
    %v4790 = vsel %vm158, %v4781, 0
    %v4793 = vsel %vm158, %v4782, 0
    %4795 = vmatprep.subr.mxu0 0.0
    %4796 = vmatpush1.msra.mxu0 0.0
    %4797 = vmatprep.subr.mxu0 0.0
    %4798 = vmatpush1.msra.mxu0 0.0
    %4799 = vmatprep.subr.mxu0 0.0
    %4800 = vmatpush1.msra.mxu0 0.0
    %4801 = vmatprep.subr.mxu0 0.0
    %4802 = vmatpush1.msra.mxu0 0.0
    %4803 = vmatprep.subr.mxu0 0.0
    %4804 = vmatpush1.msra.mxu0 0.0
    %4805 = vmatprep.subr.mxu0 0.0
    %4806 = vmatpush1.msra.mxu0 0.0
    %4807 = vmatprep.subr.mxu0 0.0
    %4808 = vmatpush1.msra.mxu0 0.0
    %4809 = vmatprep.subr.mxu0 0.0
    %4810 = vmatpush1.msra.mxu0 0.0
    %4811 = vmatprep.subr.mxu0 0.0
    %4812 = vmatpush1.msra.mxu0 0.0
    %4813 = vmatprep.subr.mxu0 0.0
    %4814 = vmatpush1.msra.mxu0 0.0
    %4815 = vmatprep.subr.mxu0 0.0
    %4816 = vmatpush1.msra.mxu0 0.0
    %4817 = vmatprep.subr.mxu0 0.0
    %4818 = vmatpush1.msra.mxu0 0.0
    %4819 = vmatprep.subr.mxu0 0.0
    %4820 = vmatpush1.msra.mxu0 %v3954
    %4821 = vmatprep.subr.mxu0 0.0
    %4822 = vmatpush1.msra.mxu0 %v3953
    %4823 = vmatprep.subr.mxu0 0.0
    %4824 = vmatpush1.msra.mxu0 %v3952
    %4825 = vmatprep.subr.mxu0 0.0
    %4826 = vmatpush1.msra.mxu0 %v3951
    %4827 = vmatprep.subr.mxu0 0.0
    %4828 = vmatpush2.msra.mxu0 0.0
    %4829 = vmatprep.subr.mxu0 0.0
    %4830 = vmatpush2.msra.mxu0 0.0
    %4831 = vmatprep.subr.mxu0 0.0
    %4832 = vmatpush2.msra.mxu0 0.0
    %4833 = vmatprep.subr.mxu0 0.0
    %4834 = vmatpush2.msra.mxu0 0.0
    %4835 = vmatprep.subr.mxu0 0.0
    %4836 = vmatpush2.msra.mxu0 0.0
    %4837 = vmatprep.subr.mxu0 0.0
    %4838 = vmatpush2.msra.mxu0 0.0
    %4839 = vmatprep.subr.mxu0 0.0
    %4840 = vmatpush2.msra.mxu0 0.0
    %4841 = vmatprep.subr.mxu0 0.0
    %4842 = vmatpush2.msra.mxu0 0.0
    %4843 = vmatprep.subr.mxu0 0.0
    %4844 = vmatpush2.msra.mxu0 0.0
    %4845 = vmatprep.subr.mxu0 0.0
    %4846 = vmatpush2.msra.mxu0 0.0
    %4847 = vmatprep.subr.mxu0 0.0
    %4848 = vmatpush2.msra.mxu0 0.0
    %4849 = vmatprep.subr.mxu0 0.0
    %4850 = vmatpush2.msra.mxu0 0.0
    %4851 = vmatprep.subr.mxu0 0.0
    %4852 = vmatpush2.msra.mxu0 0.0
    %4853 = vmatprep.subr.mxu0 0.0
    %4854 = vmatpush2.msra.mxu0 0.0
    %4855 = vmatprep.subr.mxu0 0.0
    %4856 = vmatpush2.msra.mxu0 0.0
    %4857 = vmatprep.subr.mxu0 0.0
    %4858 = vmatpush2.msra.mxu0 0.0
    %4859 = vmatprep.mubr.f32.mxu0 0.0
    %4860 = vmatmul.mubr.f32.gmra.mxu0 %v4790
    %v4861 = vpop.f32.mrf.mxu0
    %v4862 = vadd.f32 %v4787, %v4861
    %v4863 = vpop.f32.mrf.mxu0
    %4864 = vmatprep.mubr.f32.mxu0 0.0
    %4865 = vmatmul.mubr.f32.gmra.mxu0 %v4793
    %v4866 = vpop.f32.mrf.mxu0
    %v4867 = vadd.f32 %v4787, %v4866
    %v4868 = vpop.f32.mrf.mxu0
    %4869 = vdwg.mxu0
    %v4870 = vadd.f32 %v3712, %v4862
    %v4871 = vadd.f32 %v3713, %v4867
    %v4872 = vsel %vm158, %v4870, 0.0
    %4873 = vadd.xlane.f32.xlu0 %v4872
    %v4874 = vpop.xlane.xlu0 %4873
    %v4875 = vsel %vm158, %v4871, 0.0
    %4876 = vadd.xlane.f32.xlu0 %v4875
    %v4877 = vpop.xlane.xlu0 %4876
    %v4878 = vmul.f32 %v4874, %v165
    %v4879 = vmul.f32 %v4877, %v165
    %v4880 = vsub.f32 %v4870, %v4878
    %v4881 = vsub.f32 %v4871, %v4879
    %v4882 = vmul.f32 %v4880, %v4880
    %v4883 = vmul.f32 %v4881, %v4881
    %v4884 = vsel %vm158, %v4882, 0.0
    %4885 = vadd.xlane.f32.xlu0 %v4884
    %v4886 = vpop.xlane.xlu0 %4885
    %v4887 = vsel %vm158, %v4883, 0.0
    %4888 = vadd.xlane.f32.xlu0 %v4887
    %v4889 = vpop.xlane.xlu0 %4888
    %v4890 = vmul.f32 %v4886, %v165
    %v4891 = vmul.f32 %v4889, %v165
    %v4892 = vmul.f32 %v4890, 1.032258
    %v4893 = vmul.f32 %v4891, 1.032258
    %v4894 = vrsqrt.pop %v4892
    %v4895 = vmul.f32 %v4892, %v4894
    %vm4896 = vcmp.eq.f32.partialorder %v4892, inf
    %v4897 = vsel %vm4896, %v4892, %v4895
    %vm4898 = vcmp.eq.f32.partialorder %v4892, 0.0
    %v4899 = vand.u32 %v4892, 2147483648
    %v4900 = vsel %vm4898, %v4899, %v4897
    %v4901 = vrsqrt.pop %v4893
    %v4902 = vmul.f32 %v4893, %v4901
    %vm4903 = vcmp.eq.f32.partialorder %v4893, inf
    %v4904 = vsel %vm4903, %v4893, %v4902
    %vm4905 = vcmp.eq.f32.partialorder %v4893, 0.0
    %v4906 = vand.u32 %v4893, 2147483648
    %v4907 = vsel %vm4905, %v4906, %v4904
    %v4908 = vlaneseq
    %v4909 = vshrl.u32 %v4908, 7
    %v4910 = vsub.s32 2, %v4909
    %v4911 = vrot.slane %v2639, %v4910
    %v4912 = vmul.f32 %v4911, %v4880
    %v4913 = vmul.f32 %v4911, %v4881
    %v4914 = vadd.f32 %v4900, 1e-06
    %v4915 = vadd.f32 %v4907, 1e-06
    %v4916 = vrcp.pop %v4914
    %v4917 = vrcp.pop %v4915
    %v4918 = vmul.f32 %v4912, %v4916
    %v4919 = vmul.f32 %v4913, %v4917
    %v4920 = vlaneseq
    %v4921 = vshrl.u32 %v4920, 7
    %v4922 = vsub.s32 2, %v4921
    %v4923 = vrot.slane %v2641, %v4922
    %v4924 = vadd.f32 %v4918, %v4923
    %v4925 = vadd.f32 %v4919, %v4923
    %s4926 = scalar_lea.vmem [#allocation11], 32
    %v4927 = vld [vmem:[%s4926] sm:$0xff]
    %v4928 = vld [vmem:[%s4926 + $0x8] sm:$0xff]
    %v4929 = vld [vmem:[%s4926 + $0x10] sm:$0xff]
    %v4930 = vld [vmem:[%s4926 + $0x18] sm:$0xff]
    %s4931 = scalar_lea.vmem %s15, 1
    %v4932 = vld [vmem:[%s4931] sm:$0x1]
    %v4934 = vlaneseq
    %v4935 = vshrl.u32 %v4934, 7
    %v4936 = vsub.s32 0, %v4935
    %v4937 = vrot.slane %v4932, %v4936
    %v4940 = vsel %vm158, %v4924, 0
    %v4943 = vsel %vm158, %v4925, 0
    %4945 = vmatprep.subr.mxu0 0.0
    %4946 = vmatpush1.msra.mxu0 0.0
    %4947 = vmatprep.subr.mxu0 0.0
    %4948 = vmatpush1.msra.mxu0 0.0
    %4949 = vmatprep.subr.mxu0 0.0
    %4950 = vmatpush1.msra.mxu0 0.0
    %4951 = vmatprep.subr.mxu0 0.0
    %4952 = vmatpush1.msra.mxu0 0.0
    %4953 = vmatprep.subr.mxu0 0.0
    %4954 = vmatpush1.msra.mxu0 0.0
    %4955 = vmatprep.subr.mxu0 0.0
    %4956 = vmatpush1.msra.mxu0 0.0
    %4957 = vmatprep.subr.mxu0 0.0
    %4958 = vmatpush1.msra.mxu0 0.0
    %4959 = vmatprep.subr.mxu0 0.0
    %4960 = vmatpush1.msra.mxu0 0.0
    %4961 = vmatprep.subr.mxu0 0.0
    %4962 = vmatpush1.msra.mxu0 0.0
    %4963 = vmatprep.subr.mxu0 0.0
    %4964 = vmatpush1.msra.mxu0 0.0
    %4965 = vmatprep.subr.mxu0 0.0
    %4966 = vmatpush1.msra.mxu0 0.0
    %4967 = vmatprep.subr.mxu0 0.0
    %4968 = vmatpush1.msra.mxu0 0.0
    %4969 = vmatprep.subr.mxu0 0.0
    %4970 = vmatpush1.msra.mxu0 %v4930
    %4971 = vmatprep.subr.mxu0 0.0
    %4972 = vmatpush1.msra.mxu0 %v4929
    %4973 = vmatprep.subr.mxu0 0.0
    %4974 = vmatpush1.msra.mxu0 %v4928
    %4975 = vmatprep.subr.mxu0 0.0
    %4976 = vmatpush1.msra.mxu0 %v4927
    %4977 = vmatprep.subr.mxu0 0.0
    %4978 = vmatpush2.msra.mxu0 0.0
    %4979 = vmatprep.subr.mxu0 0.0
    %4980 = vmatpush2.msra.mxu0 0.0
    %4981 = vmatprep.subr.mxu0 0.0
    %4982 = vmatpush2.msra.mxu0 0.0
    %4983 = vmatprep.subr.mxu0 0.0
    %4984 = vmatpush2.msra.mxu0 0.0
    %4985 = vmatprep.subr.mxu0 0.0
    %4986 = vmatpush2.msra.mxu0 0.0
    %4987 = vmatprep.subr.mxu0 0.0
    %4988 = vmatpush2.msra.mxu0 0.0
    %4989 = vmatprep.subr.mxu0 0.0
    %4990 = vmatpush2.msra.mxu0 0.0
    %4991 = vmatprep.subr.mxu0 0.0
    %4992 = vmatpush2.msra.mxu0 0.0
    %4993 = vmatprep.subr.mxu0 0.0
    %4994 = vmatpush2.msra.mxu0 0.0
    %4995 = vmatprep.subr.mxu0 0.0
    %4996 = vmatpush2.msra.mxu0 0.0
    %4997 = vmatprep.subr.mxu0 0.0
    %4998 = vmatpush2.msra.mxu0 0.0
    %4999 = vmatprep.subr.mxu0 0.0
    %5000 = vmatpush2.msra.mxu0 0.0
    %5001 = vmatprep.subr.mxu0 0.0
    %5002 = vmatpush2.msra.mxu0 0.0
    %5003 = vmatprep.subr.mxu0 0.0
    %5004 = vmatpush2.msra.mxu0 0.0
    %5005 = vmatprep.subr.mxu0 0.0
    %5006 = vmatpush2.msra.mxu0 0.0
    %5007 = vmatprep.subr.mxu0 0.0
    %5008 = vmatpush2.msra.mxu0 0.0
    %5009 = vmatprep.mubr.f32.mxu0 0.0
    %5010 = vmatmul.mubr.f32.gmra.mxu0 %v4940
    %v5011 = vpop.f32.mrf.mxu0
    %v5012 = vadd.f32 %v4937, %v5011
    %v5013 = vpop.f32.mrf.mxu0
    %5014 = vmatprep.mubr.f32.mxu0 0.0
    %5015 = vmatmul.mubr.f32.gmra.mxu0 %v4943
    %v5016 = vpop.f32.mrf.mxu0
    %v5017 = vadd.f32 %v4937, %v5016
    %v5018 = vpop.f32.mrf.mxu0
    %5019 = vdwg.mxu0
    %v5020 = vmax.f32 %v5012, 0.0
    %v5021 = vmax.f32 %v5017, 0.0
    %s5022 = scalar_lea.vmem %s16, 64
    %v5023 = vld [vmem:[%s5022] sm:$0xff]
    %v5024 = vld [vmem:[%s5022 + $0x8] sm:$0xff]
    %v5025 = vld [vmem:[%s5022 + $0x10] sm:$0xff]
    %v5026 = vld [vmem:[%s5022 + $0x18] sm:$0xff]
    %v5027 = vld [vmem:[%s5022 + $0x20] sm:$0xff]
    %v5028 = vld [vmem:[%s5022 + $0x28] sm:$0xff]
    %v5029 = vld [vmem:[%s5022 + $0x30] sm:$0xff]
    %v5030 = vld [vmem:[%s5022 + $0x38] sm:$0xff]
    %v5032 = vsel %vm2545, %v5020, 0
    %v5035 = vsel %vm2545, %v5021, 0
    %5037 = vmatprep.subr.mxu0 0.0
    %5038 = vmatpush1.msra.mxu0 0.0
    %5039 = vmatprep.subr.mxu0 0.0
    %5040 = vmatpush1.msra.mxu0 0.0
    %5041 = vmatprep.subr.mxu0 0.0
    %5042 = vmatpush1.msra.mxu0 0.0
    %5043 = vmatprep.subr.mxu0 0.0
    %5044 = vmatpush1.msra.mxu0 0.0
    %5045 = vmatprep.subr.mxu0 0.0
    %5046 = vmatpush1.msra.mxu0 0.0
    %5047 = vmatprep.subr.mxu0 0.0
    %5048 = vmatpush1.msra.mxu0 0.0
    %5049 = vmatprep.subr.mxu0 0.0
    %5050 = vmatpush1.msra.mxu0 0.0
    %5051 = vmatprep.subr.mxu0 0.0
    %5052 = vmatpush1.msra.mxu0 0.0
    %5053 = vmatprep.subr.mxu0 0.0
    %5054 = vmatpush1.msra.mxu0 %v5030
    %5055 = vmatprep.subr.mxu0 0.0
    %5056 = vmatpush1.msra.mxu0 %v5029
    %5057 = vmatprep.subr.mxu0 0.0
    %5058 = vmatpush1.msra.mxu0 %v5028
    %5059 = vmatprep.subr.mxu0 0.0
    %5060 = vmatpush1.msra.mxu0 %v5027
    %5061 = vmatprep.subr.mxu0 0.0
    %5062 = vmatpush1.msra.mxu0 %v5026
    %5063 = vmatprep.subr.mxu0 0.0
    %5064 = vmatpush1.msra.mxu0 %v5025
    %5065 = vmatprep.subr.mxu0 0.0
    %5066 = vmatpush1.msra.mxu0 %v5024
    %5067 = vmatprep.subr.mxu0 0.0
    %5068 = vmatpush1.msra.mxu0 %v5023
    %5069 = vmatprep.subr.mxu0 0.0
    %5070 = vmatpush2.msra.mxu0 0.0
    %5071 = vmatprep.subr.mxu0 0.0
    %5072 = vmatpush2.msra.mxu0 0.0
    %5073 = vmatprep.subr.mxu0 0.0
    %5074 = vmatpush2.msra.mxu0 0.0
    %5075 = vmatprep.subr.mxu0 0.0
    %5076 = vmatpush2.msra.mxu0 0.0
    %5077 = vmatprep.subr.mxu0 0.0
    %5078 = vmatpush2.msra.mxu0 0.0
    %5079 = vmatprep.subr.mxu0 0.0
    %5080 = vmatpush2.msra.mxu0 0.0
    %5081 = vmatprep.subr.mxu0 0.0
    %5082 = vmatpush2.msra.mxu0 0.0
    %5083 = vmatprep.subr.mxu0 0.0
    %5084 = vmatpush2.msra.mxu0 0.0
    %5085 = vmatprep.subr.mxu0 0.0
    %5086 = vmatpush2.msra.mxu0 0.0
    %5087 = vmatprep.subr.mxu0 0.0
    %5088 = vmatpush2.msra.mxu0 0.0
    %5089 = vmatprep.subr.mxu0 0.0
    %5090 = vmatpush2.msra.mxu0 0.0
    %5091 = vmatprep.subr.mxu0 0.0
    %5092 = vmatpush2.msra.mxu0 0.0
    %5093 = vmatprep.subr.mxu0 0.0
    %5094 = vmatpush2.msra.mxu0 0.0
    %5095 = vmatprep.subr.mxu0 0.0
    %5096 = vmatpush2.msra.mxu0 0.0
    %5097 = vmatprep.subr.mxu0 0.0
    %5098 = vmatpush2.msra.mxu0 0.0
    %5099 = vmatprep.subr.mxu0 0.0
    %5100 = vmatpush2.msra.mxu0 0.0
    %5101 = vmatprep.mubr.f32.mxu0 0.0
    %5102 = vmatmul.mubr.f32.gmra.mxu0 %v5032
    %v5103 = vpop.f32.mrf.mxu0
    %v5104 = vadd.f32 0.0, %v5103
    %v5105 = vpop.f32.mrf.mxu0
    %5106 = vmatprep.mubr.f32.mxu0 0.0
    %5107 = vmatmul.mubr.f32.gmra.mxu0 %v5035
    %v5108 = vpop.f32.mrf.mxu0
    %v5109 = vadd.f32 0.0, %v5108
    %v5110 = vpop.f32.mrf.mxu0
    %5111 = vdwg.mxu0
    %v5112 = vadd.f32 %v4870, %v5104
    %v5113 = vadd.f32 %v4871, %v5109
    %s5114 = scalar_lea.vmem %s17, 1
    %v5115 = vld [vmem:[%s5114] sm:$0x1]
    %v5117 = vlaneseq
    %v5118 = vshrl.u32 %v5117, 7
    %v5119 = vsub.s32 0, %v5118
    %v5120 = vrot.slane %v5115, %v5119
    %v5122 = vadd.f32 %v5112, %v5120
    %v5123 = vadd.f32 %v5113, %v5120
    %5124 = vst.msk [vmem:[#allocation13] sm:$0xff] %vm158, %v5122
    %5125 = vst.msk [vmem:[#allocation13 + $0x8] sm:$0xff] %vm158, %v5123
    // Predicated region
    $region106: #{tpu_custom_call.1} parent=1 // pred_check
      _
    $region107: #{tpu_custom_call.1} parent=1 // pred_check_branch
      %5127 = sbr.rel (0) target = $region109
    $region108: #{tpu_custom_call.1} parent=1 // pred_region
      %s5129 = ssub.s32 256, 256
      %5130 = vsyncadd [#allocation4], %s5129
      %s5131 = sshll.u32 [#allocation13], 4
      %s5132 = int_to_ptr.vmem [resolvable:$true] %s5131
      %5137 = dma.vmem_to_hbm [thread:$0]  %s5132, 256, %s20, [#allocation4], 128, 128, 8
    $region109: #{tpu_custom_call.1} parent=1 // pred_fallthru
      _
    // Predicated region
    $region110: #{tpu_custom_call.1} parent=1 // pred_check
      _
    $region111: #{tpu_custom_call.1} parent=1 // pred_check_branch
      %5139 = sbr.rel (0) target = $region113
    $region112: #{tpu_custom_call.1} parent=1 // pred_region
      %5140 = dma.done [#allocation4], 256
    $region113: #{tpu_custom_call.1} parent=1 // pred_fallthru
      _
    %5141 = vsyncpa [#allocation3], 1
    %5142 = vsyncpa [#allocation6], 1
    %5143 = vsyncpa [#allocation9], 1
    %5144 = vsyncpa [#allocation12], 1
    %5145 = vsyncpa [#allocation4], 1

</llo_original>
